<compile_context>
chip_gen: v7x
topology: tpu7x:2x2x1
jax: 0.10.0
libtpu: 0.0.40
codegen_flags: <defaults>
</compile_context>

<pallas_src>
import functools

import jax
import jax.numpy as jnp
from jax import lax
from jax.experimental import pallas as pl
from jax.experimental.pallas import tpu as pltpu


def _block3d_kernel(x_ref, wb1_ref, sh1_ref, wb2_ref, sh2_ref, o_ref,
                    xpad, ypad, *, D, H, W, Cin, Cout):
    """Fused (conv3x3x3+BN+ReLU) x2 for one batch element.

    x_ref:   (D, H, W*Cin)            unpadded input, W and Cin merged into lanes
    wb1_ref: (9, W*Cin, W*Cout)       stage-1 banded weights (BN scale folded in)
    sh1_ref: (1, W*Cout)              stage-1 shift, tiled over W
    wb2_ref: (9, W*Cout, W*Cout)      stage-2 banded weights
    sh2_ref: (1, W*Cout)              stage-2 shift
    o_ref:   (D*H, W*Cout)            lane-dense output
    xpad:    (D+2, H+2, W*Cin)  VMEM  padded stage-1 input (D/H halo; W halo is in wb)
    ypad:    (D+2, H+2, W*Cout) VMEM  padded stage-1 output / stage-2 input
    """
    WCi = W * Cin
    WCo = W * Cout

    def conv_bn_relu(pad_ref, wb_ref, shift, K):
        # 9 banded MXU matmuls over the (kd, kh) taps; vreg accumulator.
        def tap(t):
            kd, kh = t // 3, t % 3
            xs = pad_ref[kd:kd + D, kh:kh + H, :].reshape(D * H, K)  # minor dim untouched
            return jnp.dot(xs, wb_ref[t], preferred_element_type=jnp.float32)

        acc = tap(0)
        for t in range(1, 9):
            acc = acc + tap(t)
        return jnp.maximum(acc + shift, 0.0)                          # BN shift + ReLU (f32)

    # ---- stage 1: pad input inside VMEM (halo = zeros; must run every step, see header) ----
    xpad[...] = jnp.zeros_like(xpad)
    xpad[1:1 + D, 1:1 + H, :] = x_ref[...]
    y1 = conv_bn_relu(xpad, wb1_ref, sh1_ref[...], WCi)

    # ---- stage 2: intermediate stays in VMEM (no HBM round trip) ----
    ypad[...] = jnp.zeros_like(ypad)
    ypad[1:1 + D, 1:1 + H, :] = y1.reshape(D, H, WCo)
    y2 = conv_bn_relu(ypad, wb2_ref, sh2_ref[...], WCo)

    # Dropout: identity in eval mode.
    o_ref[...] = y2.astype(o_ref.dtype)                               # lane-dense store


def _fused_block3d(x_merged, wb1, sh1, wb2, sh2, *, D, H, W, Cin, Cout, out_dtype):
    """x_merged: (N, D, H, W*Cin). Returns (N, D*H, W*Cout)."""
    N = x_merged.shape[0]
    WCi, WCo = W * Cin, W * Cout
    kernel = functools.partial(_block3d_kernel, D=D, H=H, W=W, Cin=Cin, Cout=Cout)
    return pl.pallas_call(
        kernel,
        out_shape=jax.ShapeDtypeStruct((N, D * H, WCo), out_dtype),
        grid_spec=pltpu.PrefetchScalarGridSpec(
            num_scalar_prefetch=0,
            grid=(N,),
            in_specs=[
                pl.BlockSpec((None, D, H, WCi), lambda n: (n, 0, 0, 0)),
                pl.BlockSpec((9, WCi, WCo), lambda n: (0, 0, 0)),
                pl.BlockSpec((1, WCo), lambda n: (0, 0)),
                pl.BlockSpec((9, WCo, WCo), lambda n: (0, 0, 0)),
                pl.BlockSpec((1, WCo), lambda n: (0, 0)),
            ],
            out_specs=pl.BlockSpec((None, D * H, WCo), lambda n: (n, 0, 0)),
            scratch_shapes=[
                pltpu.VMEM((D + 2, H + 2, WCi), jnp.float32),   # padded input
                pltpu.VMEM((D + 2, H + 2, WCo), jnp.float32),   # padded intermediate
            ],
        ),
        compiler_params=pltpu.CompilerParams(dimension_semantics=("parallel",)),
    )(x_merged, wb1, sh1, wb2, sh2)


def _band_weights(w_dhwio, scale, W):
    """Fold the 3 W-taps + 'same' W-padding + BN scale into (9, W*Cin, W*Cout) bands.

    band[(kd,kh)][(w_in, ci), (w_out, co)] =
        sum_kw [w_in == w_out + kw - 1] * w[kd,kh,kw,ci,co] * scale[co]
    Out-of-range taps simply have no matching w_in -> zero rows == zero padding.
    """
    Cin, Cout = w_dhwio.shape[3], w_dhwio.shape[4]
    w_scaled = w_dhwio * scale.reshape(1, 1, 1, 1, Cout)
    w_in = jnp.arange(W)[:, None, None]
    kw = jnp.arange(3)[None, :, None]
    w_out = jnp.arange(W)[None, None, :]
    sel = (w_in == w_out + kw - 1).astype(w_dhwio.dtype)         # (W, 3, W)
    band = jnp.einsum("akb,dhkio->dhaibo", sel, w_scaled)        # (3,3,W,Cin,W,Cout)
    return band.reshape(9, W * Cin, W * Cout)


def make_block3d_params(key, in_channels, out_channels, eps=1e-5):
    """Deterministic synthetic parameters matching Block3D.__init__ shapes."""
    ks = jax.random.split(key, 12)

    def conv_params(kw_key, kb_key, cin, cout):
        w = jax.random.normal(kw_key, (cout, cin, 3, 3, 3), jnp.float32) * 0.1  # PyTorch OIDHW
        b = jax.random.normal(kb_key, (cout,), jnp.float32) * 0.1
        return w, b

    def bn_params(g_key, bt_key, m_key, v_key, c):
        gamma = 1.0 + 0.1 * jax.random.normal(g_key, (c,), jnp.float32)
        beta = 0.1 * jax.random.normal(bt_key, (c,), jnp.float32)
        mean = 0.1 * jax.random.normal(m_key, (c,), jnp.float32)
        var = jnp.abs(jax.random.normal(v_key, (c,), jnp.float32)) + 0.5
        return gamma, beta, mean, var

    w1, b1 = conv_params(ks[0], ks[1], in_channels, out_channels)
    g1, bt1, m1, v1 = bn_params(ks[2], ks[3], ks[4], ks[5], out_channels)
    w2, b2 = conv_params(ks[6], ks[7], out_channels, out_channels)
    g2, bt2, m2, v2 = bn_params(ks[8], ks[9], ks[10], ks[11], out_channels)

    def fold(w_oidhw, b, gamma, beta, mean, var):
        w_dhwio = jnp.transpose(w_oidhw, (2, 3, 4, 1, 0))        # (3,3,3,Cin,Cout)
        scale = gamma / jnp.sqrt(var + eps)
        shift = (b - mean) * scale + beta                        # BN(conv+bias) == conv*scale + shift
        return w_dhwio, scale, shift

    w1_dhwio, s1, sh1 = fold(w1, b1, g1, bt1, m1, v1)
    w2_dhwio, s2, sh2 = fold(w2, b2, g2, bt2, m2, v2)
    return {"w1_dhwio": w1_dhwio, "scale1": s1, "shift1": sh1,
            "w2_dhwio": w2_dhwio, "scale2": s2, "shift2": sh2}


@jax.jit
def block3d_forward(x_ncdhw, params):
    """Pallas implementation of Block3D.forward (inference mode). Input/output NCDHW."""
    N, Cin, D, H, W = x_ncdhw.shape
    Cout = params["shift1"].shape[0]
    # NCDHW -> NDHWC -> (N, D, H, W*Cin): contiguous reshape, keeps W*Cin on lanes.
    x = jnp.transpose(x_ncdhw, (0, 2, 3, 4, 1)).reshape(N, D, H, W * Cin)
    wb1 = _band_weights(params["w1_dhwio"], params["scale1"], W)
    wb2 = _band_weights(params["w2_dhwio"], params["scale2"], W)
    sh1 = jnp.tile(params["shift1"], W).reshape(1, W * Cout)
    sh2 = jnp.tile(params["shift2"], W).reshape(1, W * Cout)
    out = _fused_block3d(x, wb1, sh1, wb2, sh2, D=D, H=H, W=W, Cin=Cin, Cout=Cout,
                         out_dtype=x_ncdhw.dtype)
    out = out.reshape(N, D, H, W, Cout)
    return jnp.transpose(out, (0, 4, 1, 2, 3))                   # NDHWC -> NCDHW


def block3d_reference(x_ncdhw, params):
    """Pure-JAX reference (lax conv) for verification."""
    x = jnp.transpose(x_ncdhw, (0, 2, 3, 4, 1))
    dn = ("NDHWC", "DHWIO", "NDHWC")

    def stage(x, w_dhwio, scale, shift):
        y = lax.conv_general_dilated(x, w_dhwio, window_strides=(1, 1, 1),
                                     padding=((1, 1), (1, 1), (1, 1)),
                                     dimension_numbers=dn)
        y = y * scale.reshape(1, 1, 1, 1, -1) + shift.reshape(1, 1, 1, 1, -1)
        return jnp.maximum(y, 0.0)

    x = stage(x, params["w1_dhwio"], params["scale1"], params["shift1"])
    x = stage(x, params["w2_dhwio"], params["scale2"], params["shift2"])
    return jnp.transpose(x, (0, 4, 1, 2, 3))


if __name__ == "__main__":
    key = jax.random.PRNGKey(0)
    k_x, k_p = jax.random.split(key)

    N, Cin, Cout, D, H, W = 2, 4, 8, 8, 8, 8
    x = jax.random.normal(k_x, (N, Cin, D, H, W), jnp.float32)   # PyTorch NCDHW input
    params = make_block3d_params(k_p, Cin, Cout)

    out = jax.block_until_ready(block3d_forward(x, params))
    ref = jax.block_until_ready(block3d_reference(x, params))

    assert out.shape == (N, Cout, D, H, W), out.shape
    assert jnp.allclose(out, ref, atol=1e-4, rtol=1e-4), float(jnp.max(jnp.abs(out - ref)))

    print("KERNEL_OK")
</pallas_src>

<mosaic_0001>
module attributes {stable_mosaic.version = 11 : i64} {
  func.func @_block3d_kernel(%arg0: i32, %arg1: memref<1x8x8x32xf32, #tpu.memory_space<vmem>>, %arg2: memref<9x32x64xf32, #tpu.memory_space<vmem>>, %arg3: memref<1x64xf32, #tpu.memory_space<vmem>>, %arg4: memref<9x64x64xf32, #tpu.memory_space<vmem>>, %arg5: memref<1x64xf32, #tpu.memory_space<vmem>>, %arg6: memref<1x64x64xf32, #tpu.memory_space<vmem>>, %arg7: memref<10x10x32xf32, #tpu.memory_space<vmem>>, %arg8: memref<10x10x64xf32, #tpu.memory_space<vmem>>) attributes {dimension_semantics = [#tpu.dimension_semantics<parallel>], iteration_bounds = array<i64: 2>, scalar_prefetch = 0 : i64, scratch_operands = 2 : i64, tpu.core_type = #tpu.core_type<tc>, window_params = [{transform_indices = @transform_0, window_bounds = array<i64: 1, 8, 8, 32>}, {pipeline_mode = #tpu.pipeline_mode<synchronous>, transform_indices = @transform_1, window_bounds = array<i64: 9, 32, 64>}, {pipeline_mode = #tpu.pipeline_mode<synchronous>, transform_indices = @transform_2, window_bounds = array<i64: 1, 64>}, {pipeline_mode = #tpu.pipeline_mode<synchronous>, transform_indices = @transform_3, window_bounds = array<i64: 9, 64, 64>}, {pipeline_mode = #tpu.pipeline_mode<synchronous>, transform_indices = @transform_4, window_bounds = array<i64: 1, 64>}, {transform_indices = @transform_5, window_bounds = array<i64: 1, 64, 64>}]} {
    %cst = arith.constant 0.000000e+00 : f32
    %0 = vector.broadcast %cst : f32 to vector<10x10x32xf32>
    %c0 = arith.constant 0 : index
    %c0_0 = arith.constant 0 : index
    %c0_1 = arith.constant 0 : index
    %1 = vector.load %arg7[%c0, %c0_0, %c0_1] : memref<10x10x32xf32, #tpu.memory_space<vmem>>, vector<10x10x32xf32>
    tpu.vector_store %arg7[%c0, %c0_0, %c0_1], %0 {strides = array<i32>} : memref<10x10x32xf32, #tpu.memory_space<vmem>>, vector<10x10x32xf32>,
    %c0_2 = arith.constant 0 : index
    %c0_3 = arith.constant 0 : index
    %c0_4 = arith.constant 0 : index
    %c0_5 = arith.constant 0 : index
    %2 = vector.load %arg1[%c0_2, %c0_3, %c0_4, %c0_5] : memref<1x8x8x32xf32, #tpu.memory_space<vmem>>, vector<1x8x8x32xf32>
    %3 = vector.shape_cast %2 : vector<1x8x8x32xf32> to vector<8x8x32xf32>
    %c1 = arith.constant 1 : index
    %c1_6 = arith.constant 1 : index
    %c0_7 = arith.constant 0 : index
    %4 = vector.load %arg7[%c1, %c1_6, %c0_7] : memref<10x10x32xf32, #tpu.memory_space<vmem>>, vector<8x8x32xf32>
    tpu.vector_store %arg7[%c1, %c1_6, %c0_7], %3 {strides = array<i32>} : memref<10x10x32xf32, #tpu.memory_space<vmem>>, vector<8x8x32xf32>,
    %c0_8 = arith.constant 0 : index
    %c0_9 = arith.constant 0 : index
    %5 = vector.load %arg3[%c0_8, %c0_9] : memref<1x64xf32, #tpu.memory_space<vmem>>, vector<1x64xf32>
    %c0_10 = arith.constant 0 : index
    %c0_11 = arith.constant 0 : index
    %c0_12 = arith.constant 0 : index
    %6 = vector.load %arg7[%c0_10, %c0_11, %c0_12] : memref<10x10x32xf32, #tpu.memory_space<vmem>>, vector<8x8x32xf32>
    %7 = vector.shape_cast %6 : vector<8x8x32xf32> to vector<64x32xf32>
    %c0_13 = arith.constant 0 : index
    %c0_14 = arith.constant 0 : index
    %c0_15 = arith.constant 0 : index
    %8 = vector.load %arg2[%c0_13, %c0_14, %c0_15] : memref<9x32x64xf32, #tpu.memory_space<vmem>>, vector<1x32x64xf32>
    %9 = vector.shape_cast %8 : vector<1x32x64xf32> to vector<32x64xf32>
    %cst_16 = arith.constant dense<0.000000e+00> : vector<64x64xf32>
    %10 = tpu.matmul %7, %9, %cst_16 {dimension_numbers = #tpu.dot_dimension_numbers<[1], [0], [0], [1], [0, 0, 1, 1], [], []>} : vector<64x32xf32>, vector<32x64xf32>, vector<64x64xf32> -> vector<64x64xf32>
    %c0_17 = arith.constant 0 : index
    %c1_18 = arith.constant 1 : index
    %c0_19 = arith.constant 0 : index
    %11 = vector.load %arg7[%c0_17, %c1_18, %c0_19] : memref<10x10x32xf32, #tpu.memory_space<vmem>>, vector<8x8x32xf32>
    %12 = vector.shape_cast %11 : vector<8x8x32xf32> to vector<64x32xf32>
    %c1_20 = arith.constant 1 : index
    %c0_21 = arith.constant 0 : index
    %c0_22 = arith.constant 0 : index
    %13 = vector.load %arg2[%c1_20, %c0_21, %c0_22] : memref<9x32x64xf32, #tpu.memory_space<vmem>>, vector<1x32x64xf32>
    %14 = vector.shape_cast %13 : vector<1x32x64xf32> to vector<32x64xf32>
    %cst_23 = arith.constant dense<0.000000e+00> : vector<64x64xf32>
    %15 = tpu.matmul %12, %14, %cst_23 {dimension_numbers = #tpu.dot_dimension_numbers<[1], [0], [0], [1], [0, 0, 1, 1], [], []>} : vector<64x32xf32>, vector<32x64xf32>, vector<64x64xf32> -> vector<64x64xf32>
    %16 = arith.addf %10, %15 : vector<64x64xf32>
    %c0_24 = arith.constant 0 : index
    %c2 = arith.constant 2 : index
    %c0_25 = arith.constant 0 : index
    %17 = vector.load %arg7[%c0_24, %c2, %c0_25] : memref<10x10x32xf32, #tpu.memory_space<vmem>>, vector<8x8x32xf32>
    %18 = vector.shape_cast %17 : vector<8x8x32xf32> to vector<64x32xf32>
    %c2_26 = arith.constant 2 : index
    %c0_27 = arith.constant 0 : index
    %c0_28 = arith.constant 0 : index
    %19 = vector.load %arg2[%c2_26, %c0_27, %c0_28] : memref<9x32x64xf32, #tpu.memory_space<vmem>>, vector<1x32x64xf32>
    %20 = vector.shape_cast %19 : vector<1x32x64xf32> to vector<32x64xf32>
    %cst_29 = arith.constant dense<0.000000e+00> : vector<64x64xf32>
    %21 = tpu.matmul %18, %20, %cst_29 {dimension_numbers = #tpu.dot_dimension_numbers<[1], [0], [0], [1], [0, 0, 1, 1], [], []>} : vector<64x32xf32>, vector<32x64xf32>, vector<64x64xf32> -> vector<64x64xf32>
    %22 = arith.addf %16, %21 : vector<64x64xf32>
    %c1_30 = arith.constant 1 : index
    %c0_31 = arith.constant 0 : index
    %c0_32 = arith.constant 0 : index
    %23 = vector.load %arg7[%c1_30, %c0_31, %c0_32] : memref<10x10x32xf32, #tpu.memory_space<vmem>>, vector<8x8x32xf32>
    %24 = vector.shape_cast %23 : vector<8x8x32xf32> to vector<64x32xf32>
    %c3 = arith.constant 3 : index
    %c0_33 = arith.constant 0 : index
    %c0_34 = arith.constant 0 : index
    %25 = vector.load %arg2[%c3, %c0_33, %c0_34] : memref<9x32x64xf32, #tpu.memory_space<vmem>>, vector<1x32x64xf32>
    %26 = vector.shape_cast %25 : vector<1x32x64xf32> to vector<32x64xf32>
    %cst_35 = arith.constant dense<0.000000e+00> : vector<64x64xf32>
    %27 = tpu.matmul %24, %26, %cst_35 {dimension_numbers = #tpu.dot_dimension_numbers<[1], [0], [0], [1], [0, 0, 1, 1], [], []>} : vector<64x32xf32>, vector<32x64xf32>, vector<64x64xf32> -> vector<64x64xf32>
    %28 = arith.addf %22, %27 : vector<64x64xf32>
    %c1_36 = arith.constant 1 : index
    %c1_37 = arith.constant 1 : index
    %c0_38 = arith.constant 0 : index
    %29 = vector.load %arg7[%c1_36, %c1_37, %c0_38] : memref<10x10x32xf32, #tpu.memory_space<vmem>>, vector<8x8x32xf32>
    %30 = vector.shape_cast %29 : vector<8x8x32xf32> to vector<64x32xf32>
    %c4 = arith.constant 4 : index
    %c0_39 = arith.constant 0 : index
    %c0_40 = arith.constant 0 : index
    %31 = vector.load %arg2[%c4, %c0_39, %c0_40] : memref<9x32x64xf32, #tpu.memory_space<vmem>>, vector<1x32x64xf32>
    %32 = vector.shape_cast %31 : vector<1x32x64xf32> to vector<32x64xf32>
    %cst_41 = arith.constant dense<0.000000e+00> : vector<64x64xf32>
    %33 = tpu.matmul %30, %32, %cst_41 {dimension_numbers = #tpu.dot_dimension_numbers<[1], [0], [0], [1], [0, 0, 1, 1], [], []>} : vector<64x32xf32>, vector<32x64xf32>, vector<64x64xf32> -> vector<64x64xf32>
    %34 = arith.addf %28, %33 : vector<64x64xf32>
    %c1_42 = arith.constant 1 : index
    %c2_43 = arith.constant 2 : index
    %c0_44 = arith.constant 0 : index
    %35 = vector.load %arg7[%c1_42, %c2_43, %c0_44] : memref<10x10x32xf32, #tpu.memory_space<vmem>>, vector<8x8x32xf32>
    %36 = vector.shape_cast %35 : vector<8x8x32xf32> to vector<64x32xf32>
    %c5 = arith.constant 5 : index
    %c0_45 = arith.constant 0 : index
    %c0_46 = arith.constant 0 : index
    %37 = vector.load %arg2[%c5, %c0_45, %c0_46] : memref<9x32x64xf32, #tpu.memory_space<vmem>>, vector<1x32x64xf32>
    %38 = vector.shape_cast %37 : vector<1x32x64xf32> to vector<32x64xf32>
    %cst_47 = arith.constant dense<0.000000e+00> : vector<64x64xf32>
    %39 = tpu.matmul %36, %38, %cst_47 {dimension_numbers = #tpu.dot_dimension_numbers<[1], [0], [0], [1], [0, 0, 1, 1], [], []>} : vector<64x32xf32>, vector<32x64xf32>, vector<64x64xf32> -> vector<64x64xf32>
    %40 = arith.addf %34, %39 : vector<64x64xf32>
    %c2_48 = arith.constant 2 : index
    %c0_49 = arith.constant 0 : index
    %c0_50 = arith.constant 0 : index
    %41 = vector.load %arg7[%c2_48, %c0_49, %c0_50] : memref<10x10x32xf32, #tpu.memory_space<vmem>>, vector<8x8x32xf32>
    %42 = vector.shape_cast %41 : vector<8x8x32xf32> to vector<64x32xf32>
    %c6 = arith.constant 6 : index
    %c0_51 = arith.constant 0 : index
    %c0_52 = arith.constant 0 : index
    %43 = vector.load %arg2[%c6, %c0_51, %c0_52] : memref<9x32x64xf32, #tpu.memory_space<vmem>>, vector<1x32x64xf32>
    %44 = vector.shape_cast %43 : vector<1x32x64xf32> to vector<32x64xf32>
    %cst_53 = arith.constant dense<0.000000e+00> : vector<64x64xf32>
    %45 = tpu.matmul %42, %44, %cst_53 {dimension_numbers = #tpu.dot_dimension_numbers<[1], [0], [0], [1], [0, 0, 1, 1], [], []>} : vector<64x32xf32>, vector<32x64xf32>, vector<64x64xf32> -> vector<64x64xf32>
    %46 = arith.addf %40, %45 : vector<64x64xf32>
    %c2_54 = arith.constant 2 : index
    %c1_55 = arith.constant 1 : index
    %c0_56 = arith.constant 0 : index
    %47 = vector.load %arg7[%c2_54, %c1_55, %c0_56] : memref<10x10x32xf32, #tpu.memory_space<vmem>>, vector<8x8x32xf32>
    %48 = vector.shape_cast %47 : vector<8x8x32xf32> to vector<64x32xf32>
    %c7 = arith.constant 7 : index
    %c0_57 = arith.constant 0 : index
    %c0_58 = arith.constant 0 : index
    %49 = vector.load %arg2[%c7, %c0_57, %c0_58] : memref<9x32x64xf32, #tpu.memory_space<vmem>>, vector<1x32x64xf32>
    %50 = vector.shape_cast %49 : vector<1x32x64xf32> to vector<32x64xf32>
    %cst_59 = arith.constant dense<0.000000e+00> : vector<64x64xf32>
    %51 = tpu.matmul %48, %50, %cst_59 {dimension_numbers = #tpu.dot_dimension_numbers<[1], [0], [0], [1], [0, 0, 1, 1], [], []>} : vector<64x32xf32>, vector<32x64xf32>, vector<64x64xf32> -> vector<64x64xf32>
    %52 = arith.addf %46, %51 : vector<64x64xf32>
    %c2_60 = arith.constant 2 : index
    %c2_61 = arith.constant 2 : index
    %c0_62 = arith.constant 0 : index
    %53 = vector.load %arg7[%c2_60, %c2_61, %c0_62] : memref<10x10x32xf32, #tpu.memory_space<vmem>>, vector<8x8x32xf32>
    %54 = vector.shape_cast %53 : vector<8x8x32xf32> to vector<64x32xf32>
    %c8 = arith.constant 8 : index
    %c0_63 = arith.constant 0 : index
    %c0_64 = arith.constant 0 : index
    %55 = vector.load %arg2[%c8, %c0_63, %c0_64] : memref<9x32x64xf32, #tpu.memory_space<vmem>>, vector<1x32x64xf32>
    %56 = vector.shape_cast %55 : vector<1x32x64xf32> to vector<32x64xf32>
    %cst_65 = arith.constant dense<0.000000e+00> : vector<64x64xf32>
    %57 = tpu.matmul %54, %56, %cst_65 {dimension_numbers = #tpu.dot_dimension_numbers<[1], [0], [0], [1], [0, 0, 1, 1], [], []>} : vector<64x32xf32>, vector<32x64xf32>, vector<64x64xf32> -> vector<64x64xf32>
    %58 = arith.addf %52, %57 : vector<64x64xf32>
    %59 = vector.broadcast %5 : vector<1x64xf32> to vector<64x64xf32>
    %60 = arith.addf %58, %59 : vector<64x64xf32>
    %cst_66 = arith.constant 0.000000e+00 : f32
    %61 = vector.broadcast %cst_66 : f32 to vector<64x64xf32>
    %62 = arith.maximumf %60, %61 : vector<64x64xf32>
    %cst_67 = arith.constant 0.000000e+00 : f32
    %63 = vector.broadcast %cst_67 : f32 to vector<10x10x64xf32>
    %c0_68 = arith.constant 0 : index
    %c0_69 = arith.constant 0 : index
    %c0_70 = arith.constant 0 : index
    %64 = vector.load %arg8[%c0_68, %c0_69, %c0_70] : memref<10x10x64xf32, #tpu.memory_space<vmem>>, vector<10x10x64xf32>
    tpu.vector_store %arg8[%c0_68, %c0_69, %c0_70], %63 {strides = array<i32>} : memref<10x10x64xf32, #tpu.memory_space<vmem>>, vector<10x10x64xf32>,
    %65 = vector.shape_cast %62 : vector<64x64xf32> to vector<8x8x64xf32>
    %c1_71 = arith.constant 1 : index
    %c1_72 = arith.constant 1 : index
    %c0_73 = arith.constant 0 : index
    %66 = vector.load %arg8[%c1_71, %c1_72, %c0_73] : memref<10x10x64xf32, #tpu.memory_space<vmem>>, vector<8x8x64xf32>
    tpu.vector_store %arg8[%c1_71, %c1_72, %c0_73], %65 {strides = array<i32>} : memref<10x10x64xf32, #tpu.memory_space<vmem>>, vector<8x8x64xf32>,
    %c0_74 = arith.constant 0 : index
    %c0_75 = arith.constant 0 : index
    %67 = vector.load %arg5[%c0_74, %c0_75] : memref<1x64xf32, #tpu.memory_space<vmem>>, vector<1x64xf32>
    %c0_76 = arith.constant 0 : index
    %c0_77 = arith.constant 0 : index
    %c0_78 = arith.constant 0 : index
    %68 = vector.load %arg8[%c0_76, %c0_77, %c0_78] : memref<10x10x64xf32, #tpu.memory_space<vmem>>, vector<8x8x64xf32>
    %69 = vector.shape_cast %68 : vector<8x8x64xf32> to vector<64x64xf32>
    %c0_79 = arith.constant 0 : index
    %c0_80 = arith.constant 0 : index
    %c0_81 = arith.constant 0 : index
    %70 = vector.load %arg4[%c0_79, %c0_80, %c0_81] : memref<9x64x64xf32, #tpu.memory_space<vmem>>, vector<1x64x64xf32>
    %71 = vector.shape_cast %70 : vector<1x64x64xf32> to vector<64x64xf32>
    %cst_82 = arith.constant dense<0.000000e+00> : vector<64x64xf32>
    %72 = tpu.matmul %69, %71, %cst_82 {dimension_numbers = #tpu.dot_dimension_numbers<[1], [0], [0], [1], [0, 0, 1, 1], [], []>} : vector<64x64xf32>, vector<64x64xf32>, vector<64x64xf32> -> vector<64x64xf32>
    %c0_83 = arith.constant 0 : index
    %c1_84 = arith.constant 1 : index
    %c0_85 = arith.constant 0 : index
    %73 = vector.load %arg8[%c0_83, %c1_84, %c0_85] : memref<10x10x64xf32, #tpu.memory_space<vmem>>, vector<8x8x64xf32>
    %74 = vector.shape_cast %73 : vector<8x8x64xf32> to vector<64x64xf32>
    %c1_86 = arith.constant 1 : index
    %c0_87 = arith.constant 0 : index
    %c0_88 = arith.constant 0 : index
    %75 = vector.load %arg4[%c1_86, %c0_87, %c0_88] : memref<9x64x64xf32, #tpu.memory_space<vmem>>, vector<1x64x64xf32>
    %76 = vector.shape_cast %75 : vector<1x64x64xf32> to vector<64x64xf32>
    %cst_89 = arith.constant dense<0.000000e+00> : vector<64x64xf32>
    %77 = tpu.matmul %74, %76, %cst_89 {dimension_numbers = #tpu.dot_dimension_numbers<[1], [0], [0], [1], [0, 0, 1, 1], [], []>} : vector<64x64xf32>, vector<64x64xf32>, vector<64x64xf32> -> vector<64x64xf32>
    %78 = arith.addf %72, %77 : vector<64x64xf32>
    %c0_90 = arith.constant 0 : index
    %c2_91 = arith.constant 2 : index
    %c0_92 = arith.constant 0 : index
    %79 = vector.load %arg8[%c0_90, %c2_91, %c0_92] : memref<10x10x64xf32, #tpu.memory_space<vmem>>, vector<8x8x64xf32>
    %80 = vector.shape_cast %79 : vector<8x8x64xf32> to vector<64x64xf32>
    %c2_93 = arith.constant 2 : index
    %c0_94 = arith.constant 0 : index
    %c0_95 = arith.constant 0 : index
    %81 = vector.load %arg4[%c2_93, %c0_94, %c0_95] : memref<9x64x64xf32, #tpu.memory_space<vmem>>, vector<1x64x64xf32>
    %82 = vector.shape_cast %81 : vector<1x64x64xf32> to vector<64x64xf32>
    %cst_96 = arith.constant dense<0.000000e+00> : vector<64x64xf32>
    %83 = tpu.matmul %80, %82, %cst_96 {dimension_numbers = #tpu.dot_dimension_numbers<[1], [0], [0], [1], [0, 0, 1, 1], [], []>} : vector<64x64xf32>, vector<64x64xf32>, vector<64x64xf32> -> vector<64x64xf32>
    %84 = arith.addf %78, %83 : vector<64x64xf32>
    %c1_97 = arith.constant 1 : index
    %c0_98 = arith.constant 0 : index
    %c0_99 = arith.constant 0 : index
    %85 = vector.load %arg8[%c1_97, %c0_98, %c0_99] : memref<10x10x64xf32, #tpu.memory_space<vmem>>, vector<8x8x64xf32>
    %86 = vector.shape_cast %85 : vector<8x8x64xf32> to vector<64x64xf32>
    %c3_100 = arith.constant 3 : index
    %c0_101 = arith.constant 0 : index
    %c0_102 = arith.constant 0 : index
    %87 = vector.load %arg4[%c3_100, %c0_101, %c0_102] : memref<9x64x64xf32, #tpu.memory_space<vmem>>, vector<1x64x64xf32>
    %88 = vector.shape_cast %87 : vector<1x64x64xf32> to vector<64x64xf32>
    %cst_103 = arith.constant dense<0.000000e+00> : vector<64x64xf32>
    %89 = tpu.matmul %86, %88, %cst_103 {dimension_numbers = #tpu.dot_dimension_numbers<[1], [0], [0], [1], [0, 0, 1, 1], [], []>} : vector<64x64xf32>, vector<64x64xf32>, vector<64x64xf32> -> vector<64x64xf32>
    %90 = arith.addf %84, %89 : vector<64x64xf32>
    %c1_104 = arith.constant 1 : index
    %c1_105 = arith.constant 1 : index
    %c0_106 = arith.constant 0 : index
    %91 = vector.load %arg8[%c1_104, %c1_105, %c0_106] : memref<10x10x64xf32, #tpu.memory_space<vmem>>, vector<8x8x64xf32>
    %92 = vector.shape_cast %91 : vector<8x8x64xf32> to vector<64x64xf32>
    %c4_107 = arith.constant 4 : index
    %c0_108 = arith.constant 0 : index
    %c0_109 = arith.constant 0 : index
    %93 = vector.load %arg4[%c4_107, %c0_108, %c0_109] : memref<9x64x64xf32, #tpu.memory_space<vmem>>, vector<1x64x64xf32>
    %94 = vector.shape_cast %93 : vector<1x64x64xf32> to vector<64x64xf32>
    %cst_110 = arith.constant dense<0.000000e+00> : vector<64x64xf32>
    %95 = tpu.matmul %92, %94, %cst_110 {dimension_numbers = #tpu.dot_dimension_numbers<[1], [0], [0], [1], [0, 0, 1, 1], [], []>} : vector<64x64xf32>, vector<64x64xf32>, vector<64x64xf32> -> vector<64x64xf32>
    %96 = arith.addf %90, %95 : vector<64x64xf32>
    %c1_111 = arith.constant 1 : index
    %c2_112 = arith.constant 2 : index
    %c0_113 = arith.constant 0 : index
    %97 = vector.load %arg8[%c1_111, %c2_112, %c0_113] : memref<10x10x64xf32, #tpu.memory_space<vmem>>, vector<8x8x64xf32>
    %98 = vector.shape_cast %97 : vector<8x8x64xf32> to vector<64x64xf32>
    %c5_114 = arith.constant 5 : index
    %c0_115 = arith.constant 0 : index
    %c0_116 = arith.constant 0 : index
    %99 = vector.load %arg4[%c5_114, %c0_115, %c0_116] : memref<9x64x64xf32, #tpu.memory_space<vmem>>, vector<1x64x64xf32>
    %100 = vector.shape_cast %99 : vector<1x64x64xf32> to vector<64x64xf32>
    %cst_117 = arith.constant dense<0.000000e+00> : vector<64x64xf32>
    %101 = tpu.matmul %98, %100, %cst_117 {dimension_numbers = #tpu.dot_dimension_numbers<[1], [0], [0], [1], [0, 0, 1, 1], [], []>} : vector<64x64xf32>, vector<64x64xf32>, vector<64x64xf32> -> vector<64x64xf32>
    %102 = arith.addf %96, %101 : vector<64x64xf32>
    %c2_118 = arith.constant 2 : index
    %c0_119 = arith.constant 0 : index
    %c0_120 = arith.constant 0 : index
    %103 = vector.load %arg8[%c2_118, %c0_119, %c0_120] : memref<10x10x64xf32, #tpu.memory_space<vmem>>, vector<8x8x64xf32>
    %104 = vector.shape_cast %103 : vector<8x8x64xf32> to vector<64x64xf32>
    %c6_121 = arith.constant 6 : index
    %c0_122 = arith.constant 0 : index
    %c0_123 = arith.constant 0 : index
    %105 = vector.load %arg4[%c6_121, %c0_122, %c0_123] : memref<9x64x64xf32, #tpu.memory_space<vmem>>, vector<1x64x64xf32>
    %106 = vector.shape_cast %105 : vector<1x64x64xf32> to vector<64x64xf32>
    %cst_124 = arith.constant dense<0.000000e+00> : vector<64x64xf32>
    %107 = tpu.matmul %104, %106, %cst_124 {dimension_numbers = #tpu.dot_dimension_numbers<[1], [0], [0], [1], [0, 0, 1, 1], [], []>} : vector<64x64xf32>, vector<64x64xf32>, vector<64x64xf32> -> vector<64x64xf32>
    %108 = arith.addf %102, %107 : vector<64x64xf32>
    %c2_125 = arith.constant 2 : index
    %c1_126 = arith.constant 1 : index
    %c0_127 = arith.constant 0 : index
    %109 = vector.load %arg8[%c2_125, %c1_126, %c0_127] : memref<10x10x64xf32, #tpu.memory_space<vmem>>, vector<8x8x64xf32>
    %110 = vector.shape_cast %109 : vector<8x8x64xf32> to vector<64x64xf32>
    %c7_128 = arith.constant 7 : index
    %c0_129 = arith.constant 0 : index
    %c0_130 = arith.constant 0 : index
    %111 = vector.load %arg4[%c7_128, %c0_129, %c0_130] : memref<9x64x64xf32, #tpu.memory_space<vmem>>, vector<1x64x64xf32>
    %112 = vector.shape_cast %111 : vector<1x64x64xf32> to vector<64x64xf32>
    %cst_131 = arith.constant dense<0.000000e+00> : vector<64x64xf32>
    %113 = tpu.matmul %110, %112, %cst_131 {dimension_numbers = #tpu.dot_dimension_numbers<[1], [0], [0], [1], [0, 0, 1, 1], [], []>} : vector<64x64xf32>, vector<64x64xf32>, vector<64x64xf32> -> vector<64x64xf32>
    %114 = arith.addf %108, %113 : vector<64x64xf32>
    %c2_132 = arith.constant 2 : index
    %c2_133 = arith.constant 2 : index
    %c0_134 = arith.constant 0 : index
    %115 = vector.load %arg8[%c2_132, %c2_133, %c0_134] : memref<10x10x64xf32, #tpu.memory_space<vmem>>, vector<8x8x64xf32>
    %116 = vector.shape_cast %115 : vector<8x8x64xf32> to vector<64x64xf32>
    %c8_135 = arith.constant 8 : index
    %c0_136 = arith.constant 0 : index
    %c0_137 = arith.constant 0 : index
    %117 = vector.load %arg4[%c8_135, %c0_136, %c0_137] : memref<9x64x64xf32, #tpu.memory_space<vmem>>, vector<1x64x64xf32>
    %118 = vector.shape_cast %117 : vector<1x64x64xf32> to vector<64x64xf32>
    %cst_138 = arith.constant dense<0.000000e+00> : vector<64x64xf32>
    %119 = tpu.matmul %116, %118, %cst_138 {dimension_numbers = #tpu.dot_dimension_numbers<[1], [0], [0], [1], [0, 0, 1, 1], [], []>} : vector<64x64xf32>, vector<64x64xf32>, vector<64x64xf32> -> vector<64x64xf32>
    %120 = arith.addf %114, %119 : vector<64x64xf32>
    %121 = vector.broadcast %67 : vector<1x64xf32> to vector<64x64xf32>
    %122 = arith.addf %120, %121 : vector<64x64xf32>
    %cst_139 = arith.constant 0.000000e+00 : f32
    %123 = vector.broadcast %cst_139 : f32 to vector<64x64xf32>
    %124 = arith.maximumf %122, %123 : vector<64x64xf32>
    %c0_140 = arith.constant 0 : index
    %c0_141 = arith.constant 0 : index
    %c0_142 = arith.constant 0 : index
    %125 = vector.load %arg6[%c0_140, %c0_141, %c0_142] : memref<1x64x64xf32, #tpu.memory_space<vmem>>, vector<1x64x64xf32>
    %126 = vector.shape_cast %125 : vector<1x64x64xf32> to vector<64x64xf32>
    %127 = vector.shape_cast %124 : vector<64x64xf32> to vector<1x64x64xf32>
    tpu.vector_store %arg6[%c0_140, %c0_141, %c0_142], %127 {strides = array<i32>} : memref<1x64x64xf32, #tpu.memory_space<vmem>>, vector<1x64x64xf32>,
    return
  }
  func.func @transform_0(%arg0: i32) -> (i32, i32, i32, i32) {
    %c0_i32 = arith.constant 0 : i32
    %c0_i32_0 = arith.constant 0 : i32
    %c0_i32_1 = arith.constant 0 : i32
    %c0_i32_2 = arith.constant 0 : i32
    return %arg0, %c0_i32, %c0_i32_0, %c0_i32_1 : i32, i32, i32, i32
  }
  func.func @transform_1(%arg0: i32) -> (i32, i32, i32) {
    %c0_i32 = arith.constant 0 : i32
    %c0_i32_0 = arith.constant 0 : i32
    %c0_i32_1 = arith.constant 0 : i32
    %c0_i32_2 = arith.constant 0 : i32
    return %c0_i32, %c0_i32_0, %c0_i32_1 : i32, i32, i32
  }
  func.func @transform_2(%arg0: i32) -> (i32, i32) {
    %c0_i32 = arith.constant 0 : i32
    %c0_i32_0 = arith.constant 0 : i32
    %c0_i32_1 = arith.constant 0 : i32
    return %c0_i32, %c0_i32_0 : i32, i32
  }
  func.func @transform_3(%arg0: i32) -> (i32, i32, i32) {
    %c0_i32 = arith.constant 0 : i32
    %c0_i32_0 = arith.constant 0 : i32
    %c0_i32_1 = arith.constant 0 : i32
    %c0_i32_2 = arith.constant 0 : i32
    return %c0_i32, %c0_i32_0, %c0_i32_1 : i32, i32, i32
  }
  func.func @transform_4(%arg0: i32) -> (i32, i32) {
    %c0_i32 = arith.constant 0 : i32
    %c0_i32_0 = arith.constant 0 : i32
    %c0_i32_1 = arith.constant 0 : i32
    return %c0_i32, %c0_i32_0 : i32, i32
  }
  func.func @transform_5(%arg0: i32) -> (i32, i32, i32) {
    %c0_i32 = arith.constant 0 : i32
    %c0_i32_0 = arith.constant 0 : i32
    %c0_i32_1 = arith.constant 0 : i32
    return %arg0, %c0_i32, %c0_i32_0 : i32, i32, i32
  }
}

</mosaic_0001>

<llo_original>
// kernel: tile.13
$region0: #{tile.13}
  #allocation0 [shape = 's32[1]{0}', space=sflag, size = 0x4, scoped, tag = 'scoped memory for tile.13']
  %s0 = inlined_call_operand.vmem [shape: f32[8], index: 0, kind: input, shape index: {}]
  %s1 = inlined_call_operand.vmem [shape: f32[8,8], index: 1, kind: output, shape index: {}]
  // Predicated region
  $region2: #{tile.13} parent=0 // pred_check
    _
  $region3: #{tile.13} parent=0 // pred_check_branch
    %3 = sbr.rel (0) target = $region5
  $region4: #{tile.13} parent=0 // pred_region
    _
  $region5: #{tile.13} parent=0 // pred_fallthru
    _
  %v4 = vld [vmem:[%s0] ss:$0 sm:$0xff]
  %5 = vst [vmem:[%s1] sm:$0xff] %v4

// kernel: tile.14
$region0: #{tile.14}
  %s0 = inlined_call_operand.vmem [shape: f32[8,8], index: 0, kind: input, shape index: {}]
  %s1 = inlined_call_operand.vmem [shape: f32[1,64], index: 1, kind: output, shape index: {}]
  $region1: #{tile.14} parent=0
    #allocation0 [shape = 'u8[4096]{0}', space=vmem, size = 0x1000, scoped, tag = 'scoped mem for output reshape']
    %v2 = vld [vmem:[%s0] sm:$0x1]
    %vm3 = vcmask 64512
    %4 = vst.msk [vmem:[#allocation0] sm:$0x1] %vm3, %v2
    %s5 = scalar_lea.vmem %s0, 7
    %v6 = vld [vmem:[%s5] sm:$0x1]
    %7 = vrot.lane.b32.xlu0 %v6, 56
    %v8 = vpop.permute.xlu0 %7
    %vm9 = vcmask 523712
    %10 = vst.msk [vmem:[#allocation0] sm:$0x1] %vm9, %v8
    %s11 = scalar_lea.vmem %s0, 6
    %v12 = vld [vmem:[%s11] sm:$0x1]
    %13 = vrot.lane.b32.xlu0 %v12, 48
    %v14 = vpop.permute.xlu0 %13
    %vm15 = vcmask 458112
    %16 = vst.msk [vmem:[#allocation0] sm:$0x1] %vm15, %v14
    %s17 = scalar_lea.vmem %s0, 5
    %v18 = vld [vmem:[%s17] sm:$0x1]
    %19 = vrot.lane.b32.xlu0 %v18, 40
    %v20 = vpop.permute.xlu0 %19
    %vm21 = vcmask 392512
    %22 = vst.msk [vmem:[#allocation0] sm:$0x1] %vm21, %v20
    %s23 = scalar_lea.vmem %s0, 4
    %v24 = vld [vmem:[%s23] sm:$0x1]
    %25 = vrot.lane.b32.xlu0 %v24, 32
    %v26 = vpop.permute.xlu0 %25
    %vm27 = vcmask 326912
    %28 = vst.msk [vmem:[#allocation0] sm:$0x1] %vm27, %v26
    %s29 = scalar_lea.vmem %s0, 3
    %v30 = vld [vmem:[%s29] sm:$0x1]
    %31 = vrot.lane.b32.xlu0 %v30, 24
    %v32 = vpop.permute.xlu0 %31
    %vm33 = vcmask 261312
    %34 = vst.msk [vmem:[#allocation0] sm:$0x1] %vm33, %v32
    %s35 = scalar_lea.vmem %s0, 2
    %v36 = vld [vmem:[%s35] sm:$0x1]
    %37 = vrot.lane.b32.xlu0 %v36, 16
    %v38 = vpop.permute.xlu0 %37
    %vm39 = vcmask 195712
    %40 = vst.msk [vmem:[#allocation0] sm:$0x1] %vm39, %v38
    %s41 = scalar_lea.vmem %s0, 1
    %v42 = vld [vmem:[%s41] sm:$0x1]
    %43 = vrot.lane.b32.xlu0 %v42, 8
    %v44 = vpop.permute.xlu0 %43
    %vm45 = vcmask 130112
    %46 = vst.msk [vmem:[#allocation0] sm:$0x1] %vm45, %v44
    %s48 = sshllo.u32 0, 1
    %v50 = vld [vmem:[#allocation0] sm:%s48]
    %s51 = sshllo.u32 0, 1
    %52 = vst [vmem:[%s1] sm:%s51] %v50

// kernel: block3d_forward.1
$region0: #{block3d_forward.1}
  #allocation0 [shape = 'u32[]', space=smem, size = 0x4, offset = 0x4, fixed_abs, tag = 'smem constant byte address 0x4 - core index']
  #allocation1 [shape = 'u32[144,128]{1,0:T(1,128)}', space=vmem, size = 0x12000, scoped, tag = 'internal scratch']
  #allocation2 [shape = 'f32[10,10,32]{2,1,0:T(8,128)}', space=vmem, size = 0x14000, scoped, tag = 'scratch operand']
  #allocation3 [shape = 'f32[10,10,64]{2,1,0:T(8,128)}', space=vmem, size = 0x14000, scoped, tag = 'scratch operand']
  %s0 = inlined_call_operand.vmem [shape: f32[2,8,8,32], index: 0, kind: input, shape index: {}]
  %s1 = inlined_call_operand.vmem [shape: f32[9,32,64], index: 1, kind: input, shape index: {}]
  %s2 = inlined_call_operand.vmem [shape: f32[1,64], index: 2, kind: input, shape index: {}]
  %s3 = inlined_call_operand.vmem [shape: f32[9,64,64], index: 3, kind: input, shape index: {}]
  %s4 = inlined_call_operand.vmem [shape: f32[1,64], index: 4, kind: input, shape index: {}]
  %s5 = inlined_call_operand.vmem [shape: f32[2,64,64], index: 5, kind: output, shape index: {}]
  %s6 = sld [smem:[#allocation0]]
  $region53: #{block3d_forward.1} parent=0
    _
  %s8 = ssub.s32 1, %s6
  %s9 = scalar_select 0, %s8, %s6
  loop: start=0, step=1, limit=4
  $region2: #{block3d_forward.1} parent=0 // loop_pre_header
    _
  $region3: #{block3d_forward.1} parent=0 // loop_header
    %s11 = sphi 0, %s15
    %p12 = scmp.ge.s32.totalorder %s11, 4
    %s21 = sphi 0, %s23
    %s24 = sphi 0, %s21
    %s25 = sphi 0, %s24
    %s41 = sphi 0, %s25
    %s45 = sphi 0, %s45
    %s47 = sphi 0, %s45
    %s48 = sphi 0, %s47
    %s62 = sphi 0, %s48
    %s66 = sphi 0, %s66
    %s68 = sphi 0, %s66
    %s69 = sphi 0, %s68
    %s83 = sphi 0, %s69
    %s87 = sphi 0, %s87
    %s89 = sphi 0, %s87
    %s90 = sphi 0, %s89
    %s104 = sphi 0, %s90
    %s108 = sphi 0, %s108
    %s110 = sphi 0, %s108
    %s111 = sphi 0, %s110
    %s125 = sphi 0, %s111
    %s131 = sphi 0, %s133
    %s134 = sphi 0, %s131
    %s135 = sphi 0, %s134
    %s151 = sphi 0, %s135
  $region4: #{block3d_forward.1} parent=0 // loop_header_branch
    %14 = sbr.rel (%p12) target = $region8
  $region5: #{block3d_forward.1} parent=0 // loop_body
    %s16 = ssub.s32 %s11, 1
    %s17 = ssub.s32 %s11, 2
    %s18 = sadd.s32 %s11, 1
    %s19 = ssub.s32 %s11, %s18
    %p20 = scmp.eq.s32.totalorder %s19, 0
    %s22 = sadd.s32 %s21, 1
    %s23 = scalar_select %p20, %s21, %s22
    %p26 = pneg %p20
    %p27 = scmp.eq.s32.totalorder %s11, 1
    %p28 = por %p26, %p27
    %p29 = scmp.ne.s32.totalorder %s21, %s24
    %p30 = scmp.eq.s32.totalorder %s11, 0
    %p31 = por %p29, %p30
    %p32 = scmp.ne.s32.totalorder %s21, %s24
    %p33 = scmp.eq.s32.totalorder %s16, 1
    %p34 = por %p32, %p33
    %p35 = scmp.ne.s32.totalorder %s24, %s25
    %p36 = scmp.eq.s32.totalorder %s16, 0
    %p37 = por %p35, %p36
    %p38 = scmp.ne.s32.totalorder %s24, %s25
    %p39 = scmp.eq.s32.totalorder %s17, 1
    %p40 = por %p38, %p39
    %p42 = scmp.ne.s32.totalorder %s25, %s41
    %p43 = scmp.eq.s32.totalorder %s17, 0
    %p44 = por %p42, %p43
    %s46 = sadd.s32 %s45, 1
    %p49 = scmp.eq.s32.totalorder %s11, 1
    %p50 = scmp.ne.s32.totalorder %s45, %s47
    %p51 = scmp.eq.s32.totalorder %s11, 0
    %p52 = por %p50, %p51
    %p53 = scmp.ne.s32.totalorder %s45, %s47
    %p54 = scmp.eq.s32.totalorder %s16, 1
    %p55 = por %p53, %p54
    %p56 = scmp.ne.s32.totalorder %s47, %s48
    %p57 = scmp.eq.s32.totalorder %s16, 0
    %p58 = por %p56, %p57
    %p59 = scmp.ne.s32.totalorder %s47, %s48
    %p60 = scmp.eq.s32.totalorder %s17, 1
    %p61 = por %p59, %p60
    %p63 = scmp.ne.s32.totalorder %s48, %s62
    %p64 = scmp.eq.s32.totalorder %s17, 0
    %p65 = por %p63, %p64
    %s67 = sadd.s32 %s66, 1
    %p70 = scmp.eq.s32.totalorder %s11, 1
    %p71 = scmp.ne.s32.totalorder %s66, %s68
    %p72 = scmp.eq.s32.totalorder %s11, 0
    %p73 = por %p71, %p72
    %p74 = scmp.ne.s32.totalorder %s66, %s68
    %p75 = scmp.eq.s32.totalorder %s16, 1
    %p76 = por %p74, %p75
    %p77 = scmp.ne.s32.totalorder %s68, %s69
    %p78 = scmp.eq.s32.totalorder %s16, 0
    %p79 = por %p77, %p78
    %p80 = scmp.ne.s32.totalorder %s68, %s69
    %p81 = scmp.eq.s32.totalorder %s17, 1
    %p82 = por %p80, %p81
    %p84 = scmp.ne.s32.totalorder %s69, %s83
    %p85 = scmp.eq.s32.totalorder %s17, 0
    %p86 = por %p84, %p85
    %s88 = sadd.s32 %s87, 1
    %p91 = scmp.eq.s32.totalorder %s11, 1
    %p92 = scmp.ne.s32.totalorder %s87, %s89
    %p93 = scmp.eq.s32.totalorder %s11, 0
    %p94 = por %p92, %p93
    %p95 = scmp.ne.s32.totalorder %s87, %s89
    %p96 = scmp.eq.s32.totalorder %s16, 1
    %p97 = por %p95, %p96
    %p98 = scmp.ne.s32.totalorder %s89, %s90
    %p99 = scmp.eq.s32.totalorder %s16, 0
    %p100 = por %p98, %p99
    %p101 = scmp.ne.s32.totalorder %s89, %s90
    %p102 = scmp.eq.s32.totalorder %s17, 1
    %p103 = por %p101, %p102
    %p105 = scmp.ne.s32.totalorder %s90, %s104
    %p106 = scmp.eq.s32.totalorder %s17, 0
    %p107 = por %p105, %p106
    %s109 = sadd.s32 %s108, 1
    %p112 = scmp.eq.s32.totalorder %s11, 1
    %p113 = scmp.ne.s32.totalorder %s108, %s110
    %p114 = scmp.eq.s32.totalorder %s11, 0
    %p115 = por %p113, %p114
    %p116 = scmp.ne.s32.totalorder %s108, %s110
    %p117 = scmp.eq.s32.totalorder %s16, 1
    %p118 = por %p116, %p117
    %p119 = scmp.ne.s32.totalorder %s110, %s111
    %p120 = scmp.eq.s32.totalorder %s16, 0
    %p121 = por %p119, %p120
    %p122 = scmp.ne.s32.totalorder %s110, %s111
    %p123 = scmp.eq.s32.totalorder %s17, 1
    %p124 = por %p122, %p123
    %p126 = scmp.ne.s32.totalorder %s111, %s125
    %p127 = scmp.eq.s32.totalorder %s17, 0
    %p128 = por %p126, %p127
    %s129 = ssub.s32 %s11, %s18
    %p130 = scmp.eq.s32.totalorder %s129, 0
    %s132 = sadd.s32 %s131, 1
    %s133 = scalar_select %p130, %s131, %s132
    %p136 = pneg %p130
    %p137 = scmp.eq.s32.totalorder %s11, 1
    %p138 = por %p136, %p137
    %p139 = scmp.ne.s32.totalorder %s131, %s134
    %p140 = scmp.eq.s32.totalorder %s11, 0
    %p141 = por %p139, %p140
    %p142 = scmp.ne.s32.totalorder %s131, %s134
    %p143 = scmp.eq.s32.totalorder %s16, 1
    %p144 = por %p142, %p143
    %p145 = scmp.ne.s32.totalorder %s134, %s135
    %p146 = scmp.eq.s32.totalorder %s16, 0
    %p147 = por %p145, %p146
    %p148 = scmp.ne.s32.totalorder %s134, %s135
    %p149 = scmp.eq.s32.totalorder %s17, 1
    %p150 = por %p148, %p149
    %p152 = scmp.ne.s32.totalorder %s135, %s151
    %p153 = scmp.eq.s32.totalorder %s17, 0
    %p154 = por %p152, %p153
    %p155 = scmp.le.s32.totalorder 1, %s11
    %p156 = scmp.lt.s32.totalorder %s11, 3
    %p157 = pnand %p155, %p156
    %p158 = pneg %p157
    // Predicated region
    $region9: #{block3d_forward.1} parent=5 // pred_check
      _
    $region10: #{block3d_forward.1} parent=5 // pred_check_branch
      %160 = sbr.rel (%p157) target = $region12
    $region11: #{block3d_forward.1} parent=5 // pred_region
      %s161 = ssub.s32 %s11, 1
      // Predicated region
      $region13: #{block3d_forward.1} parent=11 // pred_check
        %p162 = pneg %p58
      $region14: #{block3d_forward.1} parent=11 // pred_check_branch
        %164 = sbr.rel (%p162) target = $region16
      $region15: #{block3d_forward.1} parent=11 // pred_region
        _
      $region16: #{block3d_forward.1} parent=11 // pred_fallthru
        _
      // Predicated region
      $region17: #{block3d_forward.1} parent=11 // pred_check
        %p165 = pneg %p79
      $region18: #{block3d_forward.1} parent=11 // pred_check_branch
        %167 = sbr.rel (%p165) target = $region20
      $region19: #{block3d_forward.1} parent=11 // pred_region
        _
      $region20: #{block3d_forward.1} parent=11 // pred_fallthru
        _
      // Predicated region
      $region21: #{block3d_forward.1} parent=11 // pred_check
        %p168 = pneg %p100
      $region22: #{block3d_forward.1} parent=11 // pred_check_branch
        %170 = sbr.rel (%p168) target = $region24
      $region23: #{block3d_forward.1} parent=11 // pred_region
        _
      $region24: #{block3d_forward.1} parent=11 // pred_fallthru
        _
      // Predicated region
      $region25: #{block3d_forward.1} parent=11 // pred_check
        %p171 = pneg %p121
      $region26: #{block3d_forward.1} parent=11 // pred_check_branch
        %173 = sbr.rel (%p171) target = $region28
      $region27: #{block3d_forward.1} parent=11 // pred_region
        _
      $region28: #{block3d_forward.1} parent=11 // pred_fallthru
        _
    $region12: #{block3d_forward.1} parent=5 // pred_fallthru
      _
    %p174 = scmp.lt.s32.totalorder %s11, 2
    // Predicated region
    $region29: #{block3d_forward.1} parent=5 // pred_check
      %p175 = pneg %p174
    $region30: #{block3d_forward.1} parent=5 // pred_check_branch
      %177 = sbr.rel (%p175) target = $region32
    $region31: #{block3d_forward.1} parent=5 // pred_region
      // Predicated region
      $region33: #{block3d_forward.1} parent=31 // pred_check
        %p178 = pneg %p31
      $region34: #{block3d_forward.1} parent=31 // pred_check_branch
        %180 = sbr.rel (%p178) target = $region36
      $region35: #{block3d_forward.1} parent=31 // pred_region
        %p181 = scmp.lt.s32.totalorder %s11, 1
        %s182 = scalar_select %p181, %s11, 1
        %s183 = smul.addr %s182, 8
        %s184 = smul.addr %s183, 8
        %s185 = scalar_lea.vmem %s0, %s184
      $region36: #{block3d_forward.1} parent=31 // pred_fallthru
        _
    $region32: #{block3d_forward.1} parent=5 // pred_fallthru
      _
    %p186 = scmp.le.s32.totalorder 1, %s11
    %p187 = scmp.lt.s32.totalorder %s11, 3
    %p188 = pnand %p186, %p187
    %p189 = pneg %p188
    // Predicated region
    $region37: #{block3d_forward.1} parent=5 // pred_check
      _
    $region38: #{block3d_forward.1} parent=5 // pred_check_branch
      %191 = sbr.rel (%p188) target = $region40
    $region39: #{block3d_forward.1} parent=5 // pred_region
      %s192 = ssub.s32 %s11, 1
      %p193 = scmp.lt.s32.totalorder %s16, 1
      %s194 = scalar_select %p193, %s16, 1
      %s195 = smul.addr %s194, 8
      %s196 = smul.addr %s195, 8
      %s197 = scalar_lea.vmem %s0, %s196
      %p198 = pneg %p37
      %p199 = pneg %p34
      %p200 = pneg %p58
      %p201 = pneg %p55
      %p202 = pneg %p79
      %p203 = pneg %p76
      %p204 = pneg %p100
      %p205 = pneg %p97
      %p206 = pneg %p121
      %p207 = pneg %p118
      %p208 = pneg %p147
      %p209 = pneg %p144
      %p210 = scmp.lt.s32.totalorder %s16, 1
      %s211 = scalar_select %p210, %s16, 1
      %s212 = smul.addr %s211, 8
      %s213 = smul.addr %s212, 8
      %s214 = scalar_lea.vmem %s5, %s213
      %p215 = scmp.lt.s32.totalorder %s16, 1
      %s216 = scalar_select %p215, %s16, 1
      %s217 = smul.addr %s216, 8
      %s218 = smul.addr %s217, 8
      %s219 = scalar_lea.vmem %s0, %s218
      %p220 = scmp.lt.s32.totalorder %s16, 1
      %s221 = scalar_select %p220, %s16, 1
      %s222 = smul.addr %s221, 8
      %s223 = smul.addr %s222, 8
      %s224 = scalar_lea.vmem %s5, %s223
      %vm225 = vcmask 261120
      %226 = vst.msk [vmem:[#allocation2] sm:$0xff] %vm225, 0.0
      %vm227 = vcmask 254976
      %228 = vst.msk [vmem:[#allocation2 + $0x8] sm:$0x3] %vm227, 0.0
      %229 = vst.msk [vmem:[#allocation2 + $0x10] sm:$0xff] %vm225, 0.0
      %230 = vst.msk [vmem:[#allocation2 + $0x18] sm:$0x3] %vm227, 0.0
      %231 = vst.msk [vmem:[#allocation2 + $0x20] sm:$0xff] %vm225, 0.0
      %232 = vst.msk [vmem:[#allocation2 + $0x28] sm:$0x3] %vm227, 0.0
      %233 = vst.msk [vmem:[#allocation2 + $0x30] sm:$0xff] %vm225, 0.0
      %234 = vst.msk [vmem:[#allocation2 + $0x38] sm:$0x3] %vm227, 0.0
      %235 = vst.msk [vmem:[#allocation2 + $0x40] sm:$0xff] %vm225, 0.0
      %236 = vst.msk [vmem:[#allocation2 + $0x48] sm:$0x3] %vm227, 0.0
      %237 = vst.msk [vmem:[#allocation2 + $0x50] sm:$0xff] %vm225, 0.0
      %238 = vst.msk [vmem:[#allocation2 + $0x58] sm:$0x3] %vm227, 0.0
      %239 = vst.msk [vmem:[#allocation2 + $0x60] sm:$0xff] %vm225, 0.0
      %240 = vst.msk [vmem:[#allocation2 + $0x68] sm:$0x3] %vm227, 0.0
      %241 = vst.msk [vmem:[#allocation2 + $0x70] sm:$0xff] %vm225, 0.0
      %242 = vst.msk [vmem:[#allocation2 + $0x78] sm:$0x3] %vm227, 0.0
      %243 = vst.msk [vmem:[#allocation2 + $0x80] sm:$0xff] %vm225, 0.0
      %244 = vst.msk [vmem:[#allocation2 + $0x88] sm:$0x3] %vm227, 0.0
      %245 = vst.msk [vmem:[#allocation2 + $0x90] sm:$0xff] %vm225, 0.0
      %246 = vst.msk [vmem:[#allocation2 + $0x98] sm:$0x3] %vm227, 0.0
      %v247 = vld [vmem:[%s219] sm:$0xff]
      %v248 = vld [vmem:[%s219 + $0x8] sm:$0xff]
      %v249 = vld [vmem:[%s219 + $0x10] sm:$0xff]
      %v250 = vld [vmem:[%s219 + $0x18] sm:$0xff]
      %v251 = vld [vmem:[%s219 + $0x20] sm:$0xff]
      %v252 = vld [vmem:[%s219 + $0x28] sm:$0xff]
      %v253 = vld [vmem:[%s219 + $0x30] sm:$0xff]
      %v254 = vld [vmem:[%s219 + $0x38] sm:$0xff]
      %s255 = scalar_lea.vmem [#allocation2], 16
      %256 = vst.msk [vmem:[%s255 + $0x1] sm:$0xff] %vm225, %v247
      %257 = vst.msk [vmem:[%s255 + $0x11] sm:$0xff] %vm225, %v248
      %258 = vst.msk [vmem:[%s255 + $0x21] sm:$0xff] %vm225, %v249
      %259 = vst.msk [vmem:[%s255 + $0x31] sm:$0xff] %vm225, %v250
      %260 = vst.msk [vmem:[%s255 + $0x41] sm:$0xff] %vm225, %v251
      %261 = vst.msk [vmem:[%s255 + $0x51] sm:$0xff] %vm225, %v252
      %262 = vst.msk [vmem:[%s255 + $0x61] sm:$0xff] %vm225, %v253
      %263 = vst.msk [vmem:[%s255 + $0x71] sm:$0xff] %vm225, %v254
      %v264 = vld [vmem:[%s2] sm:$0x1]
      %v265 = vld [vmem:[#allocation2] sm:$0xff]
      %v266 = vld [vmem:[#allocation2 + $0x10] sm:$0xff]
      %v267 = vld [vmem:[#allocation2 + $0x20] sm:$0xff]
      %v268 = vld [vmem:[#allocation2 + $0x30] sm:$0xff]
      %v269 = vld [vmem:[#allocation2 + $0x40] sm:$0xff]
      %v270 = vld [vmem:[#allocation2 + $0x50] sm:$0xff]
      %v271 = vld [vmem:[#allocation2 + $0x60] sm:$0xff]
      %v272 = vld [vmem:[#allocation2 + $0x70] sm:$0xff]
      %v273 = vld [vmem:[%s1] sm:$0xff]
      %v274 = vld [vmem:[%s1 + $0x8] sm:$0xff]
      %v275 = vld [vmem:[%s1 + $0x10] sm:$0xff]
      %v276 = vld [vmem:[%s1 + $0x18] sm:$0xff]
      %v277 = vld [vmem:[#allocation2 + $0x1] sm:$0xff]
      %v278 = vld [vmem:[#allocation2 + $0x11] sm:$0xff]
      %v279 = vld [vmem:[#allocation2 + $0x21] sm:$0xff]
      %v280 = vld [vmem:[#allocation2 + $0x31] sm:$0xff]
      %v281 = vld [vmem:[#allocation2 + $0x41] sm:$0xff]
      %v282 = vld [vmem:[#allocation2 + $0x51] sm:$0xff]
      %v283 = vld [vmem:[#allocation2 + $0x61] sm:$0xff]
      %v284 = vld [vmem:[#allocation2 + $0x71] sm:$0xff]
      %s285 = scalar_lea.vmem %s1, 32
      %v286 = vld [vmem:[%s285] sm:$0xff]
      %v287 = vld [vmem:[%s285 + $0x8] sm:$0xff]
      %v288 = vld [vmem:[%s285 + $0x10] sm:$0xff]
      %v289 = vld [vmem:[%s285 + $0x18] sm:$0xff]
      %v291 = vsel %vm225, %v277, 0
      %v294 = vsel %vm225, %v278, 0
      %v297 = vsel %vm225, %v279, 0
      %v300 = vsel %vm225, %v280, 0
      %v303 = vsel %vm225, %v281, 0
      %v306 = vsel %vm225, %v282, 0
      %v309 = vsel %vm225, %v283, 0
      %v312 = vsel %vm225, %v284, 0
      %314 = vmatprep.subr.mxu0 0.0
      %315 = vmatpush1.msra.mxu0 %v286
      %316 = vmatprep.subr.mxu0 0.0
      %317 = vmatpush1.msra.mxu0 %v287
      %318 = vmatprep.subr.mxu0 0.0
      %319 = vmatpush1.msra.mxu0 %v288
      %320 = vmatprep.subr.mxu0 0.0
      %321 = vmatpush1.msra.mxu0 %v289
      %322 = vmatprep.subr.mxu0 0.0
      %323 = vmatpush1.msra.mxu0 0.0
      %324 = vmatprep.subr.mxu0 0.0
      %325 = vmatpush1.msra.mxu0 0.0
      %326 = vmatprep.subr.mxu0 0.0
      %327 = vmatpush1.msra.mxu0 0.0
      %328 = vmatprep.subr.mxu0 0.0
      %329 = vmatpush1.msra.mxu0 0.0
      %330 = vmatprep.subr.mxu0 0.0
      %331 = vmatpush1.msra.mxu0 0.0
      %332 = vmatprep.subr.mxu0 0.0
      %333 = vmatpush1.msra.mxu0 0.0
      %334 = vmatprep.subr.mxu0 0.0
      %335 = vmatpush1.msra.mxu0 0.0
      %336 = vmatprep.subr.mxu0 0.0
      %337 = vmatpush1.msra.mxu0 0.0
      %338 = vmatprep.subr.mxu0 0.0
      %339 = vmatpush1.msra.mxu0 0.0
      %340 = vmatprep.subr.mxu0 0.0
      %341 = vmatpush1.msra.mxu0 0.0
      %342 = vmatprep.subr.mxu0 0.0
      %343 = vmatpush1.msra.mxu0 0.0
      %344 = vmatprep.subr.mxu0 0.0
      %345 = vmatpush1.msra.mxu0 0.0
      %346 = vmatprep.subr.mxu0 0.0
      %347 = vmatpush1.msra.mxu0 0.0
      %348 = vmatprep.subr.mxu0 0.0
      %349 = vmatpush1.msra.mxu0 0.0
      %350 = vmatprep.subr.mxu0 0.0
      %351 = vmatpush1.msra.mxu0 0.0
      %352 = vmatprep.subr.mxu0 0.0
      %353 = vmatpush1.msra.mxu0 0.0
      %354 = vmatprep.subr.mxu0 0.0
      %355 = vmatpush1.msra.mxu0 0.0
      %356 = vmatprep.subr.mxu0 0.0
      %357 = vmatpush1.msra.mxu0 0.0
      %358 = vmatprep.subr.mxu0 0.0
      %359 = vmatpush1.msra.mxu0 0.0
      %360 = vmatprep.subr.mxu0 0.0
      %361 = vmatpush1.msra.mxu0 0.0
      %362 = vmatprep.subr.mxu0 0.0
      %363 = vmatpush1.msra.mxu0 0.0
      %364 = vmatprep.subr.mxu0 0.0
      %365 = vmatpush1.msra.mxu0 0.0
      %366 = vmatprep.subr.mxu0 0.0
      %367 = vmatpush1.msra.mxu0 0.0
      %368 = vmatprep.subr.mxu0 0.0
      %369 = vmatpush1.msra.mxu0 0.0
      %370 = vmatprep.subr.mxu0 0.0
      %371 = vmatpush1.msra.mxu0 0.0
      %372 = vmatprep.subr.mxu0 0.0
      %373 = vmatpush1.msra.mxu0 0.0
      %374 = vmatprep.subr.mxu0 0.0
      %375 = vmatpush1.msra.mxu0 0.0
      %376 = vmatprep.subr.mxu0 0.0
      %377 = vmatpush1.msra.mxu0 0.0
      %378 = vmatprep.mubr.f32.mxu0 0.0
      %379 = vmatmul.mubr.f32.gmra.mrb[0].mxu0 %v291
      %v380 = vpop.f32.mrb[0].mxu0
      %v381 = vadd.f32 0.0, %v380
      %v382 = vpop.f32.mrb[0].mxu0
      %383 = vmatprep.mubr.f32.mxu0 0.0
      %384 = vmatmul.mubr.f32.gmra.mrb[0].mxu0 %v294
      %v385 = vpop.f32.mrb[0].mxu0
      %v386 = vadd.f32 0.0, %v385
      %v387 = vpop.f32.mrb[0].mxu0
      %388 = vmatprep.mubr.f32.mxu0 0.0
      %389 = vmatmul.mubr.f32.gmra.mrb[0].mxu0 %v297
      %v390 = vpop.f32.mrb[0].mxu0
      %v391 = vadd.f32 0.0, %v390
      %v392 = vpop.f32.mrb[0].mxu0
      %393 = vmatprep.mubr.f32.mxu0 0.0
      %394 = vmatmul.mubr.f32.gmra.mrb[0].mxu0 %v300
      %v395 = vpop.f32.mrb[0].mxu0
      %v396 = vadd.f32 0.0, %v395
      %v397 = vpop.f32.mrb[0].mxu0
      %398 = vmatprep.mubr.f32.mxu0 0.0
      %399 = vmatmul.mubr.f32.gmra.mrb[0].mxu0 %v303
      %v400 = vpop.f32.mrb[0].mxu0
      %v401 = vadd.f32 0.0, %v400
      %v402 = vpop.f32.mrb[0].mxu0
      %403 = vmatprep.mubr.f32.mxu0 0.0
      %404 = vmatmul.mubr.f32.gmra.mrb[0].mxu0 %v306
      %v405 = vpop.f32.mrb[0].mxu0
      %v406 = vadd.f32 0.0, %v405
      %v407 = vpop.f32.mrb[0].mxu0
      %408 = vmatprep.mubr.f32.mxu0 0.0
      %409 = vmatmul.mubr.f32.gmra.mrb[0].mxu0 %v309
      %v410 = vpop.f32.mrb[0].mxu0
      %v411 = vadd.f32 0.0, %v410
      %v412 = vpop.f32.mrb[0].mxu0
      %413 = vmatprep.mubr.f32.mxu0 0.0
      %414 = vmatmul.mubr.f32.gmra.mrb[0].mxu0 %v312
      %v415 = vpop.f32.mrb[0].mxu0
      %v416 = vadd.f32 0.0, %v415
      %v417 = vpop.f32.mrb[0].mxu0
      %418 = vdwg.mxu0
      %v420 = vsel %vm225, %v265, 0
      %v423 = vsel %vm225, %v266, 0
      %v426 = vsel %vm225, %v267, 0
      %v429 = vsel %vm225, %v268, 0
      %v432 = vsel %vm225, %v269, 0
      %v435 = vsel %vm225, %v270, 0
      %v438 = vsel %vm225, %v271, 0
      %v441 = vsel %vm225, %v272, 0
      %443 = vmatprep.subr.mxu0 0.0
      %444 = vmatpush1.msra.mxu0 %v273
      %445 = vmatprep.subr.mxu0 0.0
      %446 = vmatpush1.msra.mxu0 %v274
      %447 = vmatprep.subr.mxu0 0.0
      %448 = vmatpush1.msra.mxu0 %v275
      %449 = vmatprep.subr.mxu0 0.0
      %450 = vmatpush1.msra.mxu0 %v276
      %451 = vmatprep.subr.mxu0 0.0
      %452 = vmatpush1.msra.mxu0 0.0
      %453 = vmatprep.subr.mxu0 0.0
      %454 = vmatpush1.msra.mxu0 0.0
      %455 = vmatprep.subr.mxu0 0.0
      %456 = vmatpush1.msra.mxu0 0.0
      %457 = vmatprep.subr.mxu0 0.0
      %458 = vmatpush1.msra.mxu0 0.0
      %459 = vmatprep.subr.mxu0 0.0
      %460 = vmatpush1.msra.mxu0 0.0
      %461 = vmatprep.subr.mxu0 0.0
      %462 = vmatpush1.msra.mxu0 0.0
      %463 = vmatprep.subr.mxu0 0.0
      %464 = vmatpush1.msra.mxu0 0.0
      %465 = vmatprep.subr.mxu0 0.0
      %466 = vmatpush1.msra.mxu0 0.0
      %467 = vmatprep.subr.mxu0 0.0
      %468 = vmatpush1.msra.mxu0 0.0
      %469 = vmatprep.subr.mxu0 0.0
      %470 = vmatpush1.msra.mxu0 0.0
      %471 = vmatprep.subr.mxu0 0.0
      %472 = vmatpush1.msra.mxu0 0.0
      %473 = vmatprep.subr.mxu0 0.0
      %474 = vmatpush1.msra.mxu0 0.0
      %475 = vmatprep.subr.mxu0 0.0
      %476 = vmatpush1.msra.mxu0 0.0
      %477 = vmatprep.subr.mxu0 0.0
      %478 = vmatpush1.msra.mxu0 0.0
      %479 = vmatprep.subr.mxu0 0.0
      %480 = vmatpush1.msra.mxu0 0.0
      %481 = vmatprep.subr.mxu0 0.0
      %482 = vmatpush1.msra.mxu0 0.0
      %483 = vmatprep.subr.mxu0 0.0
      %484 = vmatpush1.msra.mxu0 0.0
      %485 = vmatprep.subr.mxu0 0.0
      %486 = vmatpush1.msra.mxu0 0.0
      %487 = vmatprep.subr.mxu0 0.0
      %488 = vmatpush1.msra.mxu0 0.0
      %489 = vmatprep.subr.mxu0 0.0
      %490 = vmatpush1.msra.mxu0 0.0
      %491 = vmatprep.subr.mxu0 0.0
      %492 = vmatpush1.msra.mxu0 0.0
      %493 = vmatprep.subr.mxu0 0.0
      %494 = vmatpush1.msra.mxu0 0.0
      %495 = vmatprep.subr.mxu0 0.0
      %496 = vmatpush1.msra.mxu0 0.0
      %497 = vmatprep.subr.mxu0 0.0
      %498 = vmatpush1.msra.mxu0 0.0
      %499 = vmatprep.subr.mxu0 0.0
      %500 = vmatpush1.msra.mxu0 0.0
      %501 = vmatprep.subr.mxu0 0.0
      %502 = vmatpush1.msra.mxu0 0.0
      %503 = vmatprep.subr.mxu0 0.0
      %504 = vmatpush1.msra.mxu0 0.0
      %505 = vmatprep.subr.mxu0 0.0
      %506 = vmatpush1.msra.mxu0 0.0
      %507 = vmatprep.mubr.f32.mxu0 0.0
      %508 = vmatmul.mubr.f32.gmra.mrb[0].mxu0 %v420
      %v509 = vpop.f32.mrb[0].mxu0
      %v510 = vadd.f32 %v381, %v509
      %v511 = vpop.f32.mrb[0].mxu0
      %512 = vmatprep.mubr.f32.mxu0 0.0
      %513 = vmatmul.mubr.f32.gmra.mrb[0].mxu0 %v423
      %v514 = vpop.f32.mrb[0].mxu0
      %v515 = vadd.f32 %v386, %v514
      %v516 = vpop.f32.mrb[0].mxu0
      %517 = vmatprep.mubr.f32.mxu0 0.0
      %518 = vmatmul.mubr.f32.gmra.mrb[0].mxu0 %v426
      %v519 = vpop.f32.mrb[0].mxu0
      %v520 = vadd.f32 %v391, %v519
      %v521 = vpop.f32.mrb[0].mxu0
      %522 = vmatprep.mubr.f32.mxu0 0.0
      %523 = vmatmul.mubr.f32.gmra.mrb[0].mxu0 %v429
      %v524 = vpop.f32.mrb[0].mxu0
      %v525 = vadd.f32 %v396, %v524
      %v526 = vpop.f32.mrb[0].mxu0
      %527 = vmatprep.mubr.f32.mxu0 0.0
      %528 = vmatmul.mubr.f32.gmra.mrb[0].mxu0 %v432
      %v529 = vpop.f32.mrb[0].mxu0
      %v530 = vadd.f32 %v401, %v529
      %v531 = vpop.f32.mrb[0].mxu0
      %532 = vmatprep.mubr.f32.mxu0 0.0
      %533 = vmatmul.mubr.f32.gmra.mrb[0].mxu0 %v435
      %v534 = vpop.f32.mrb[0].mxu0
      %v535 = vadd.f32 %v406, %v534
      %v536 = vpop.f32.mrb[0].mxu0
      %537 = vmatprep.mubr.f32.mxu0 0.0
      %538 = vmatmul.mubr.f32.gmra.mrb[0].mxu0 %v438
      %v539 = vpop.f32.mrb[0].mxu0
      %v540 = vadd.f32 %v411, %v539
      %v541 = vpop.f32.mrb[0].mxu0
      %542 = vmatprep.mubr.f32.mxu0 0.0
      %543 = vmatmul.mubr.f32.gmra.mrb[0].mxu0 %v441
      %v544 = vpop.f32.mrb[0].mxu0
      %v545 = vadd.f32 %v416, %v544
      %v546 = vpop.f32.mrb[0].mxu0
      %547 = vdwg.mxu0
      %v548 = vld [vmem:[#allocation2 + $0x2] sm:$0xff]
      %v549 = vld [vmem:[#allocation2 + $0x12] sm:$0xff]
      %v550 = vld [vmem:[#allocation2 + $0x22] sm:$0xff]
      %v551 = vld [vmem:[#allocation2 + $0x32] sm:$0xff]
      %v552 = vld [vmem:[#allocation2 + $0x42] sm:$0xff]
      %v553 = vld [vmem:[#allocation2 + $0x52] sm:$0xff]
      %v554 = vld [vmem:[#allocation2 + $0x62] sm:$0xff]
      %v555 = vld [vmem:[#allocation2 + $0x72] sm:$0xff]
      %s556 = scalar_lea.vmem %s1, 64
      %v557 = vld [vmem:[%s556] sm:$0xff]
      %v558 = vld [vmem:[%s556 + $0x8] sm:$0xff]
      %v559 = vld [vmem:[%s556 + $0x10] sm:$0xff]
      %v560 = vld [vmem:[%s556 + $0x18] sm:$0xff]
      %v562 = vsel %vm225, %v548, 0
      %v565 = vsel %vm225, %v549, 0
      %v568 = vsel %vm225, %v550, 0
      %v571 = vsel %vm225, %v551, 0
      %v574 = vsel %vm225, %v552, 0
      %v577 = vsel %vm225, %v553, 0
      %v580 = vsel %vm225, %v554, 0
      %v583 = vsel %vm225, %v555, 0
      %585 = vmatprep.subr.mxu0 0.0
      %586 = vmatpush1.msra.mxu0 %v557
      %587 = vmatprep.subr.mxu0 0.0
      %588 = vmatpush1.msra.mxu0 %v558
      %589 = vmatprep.subr.mxu0 0.0
      %590 = vmatpush1.msra.mxu0 %v559
      %591 = vmatprep.subr.mxu0 0.0
      %592 = vmatpush1.msra.mxu0 %v560
      %593 = vmatprep.subr.mxu0 0.0
      %594 = vmatpush1.msra.mxu0 0.0
      %595 = vmatprep.subr.mxu0 0.0
      %596 = vmatpush1.msra.mxu0 0.0
      %597 = vmatprep.subr.mxu0 0.0
      %598 = vmatpush1.msra.mxu0 0.0
      %599 = vmatprep.subr.mxu0 0.0
      %600 = vmatpush1.msra.mxu0 0.0
      %601 = vmatprep.subr.mxu0 0.0
      %602 = vmatpush1.msra.mxu0 0.0
      %603 = vmatprep.subr.mxu0 0.0
      %604 = vmatpush1.msra.mxu0 0.0
      %605 = vmatprep.subr.mxu0 0.0
      %606 = vmatpush1.msra.mxu0 0.0
      %607 = vmatprep.subr.mxu0 0.0
      %608 = vmatpush1.msra.mxu0 0.0
      %609 = vmatprep.subr.mxu0 0.0
      %610 = vmatpush1.msra.mxu0 0.0
      %611 = vmatprep.subr.mxu0 0.0
      %612 = vmatpush1.msra.mxu0 0.0
      %613 = vmatprep.subr.mxu0 0.0
      %614 = vmatpush1.msra.mxu0 0.0
      %615 = vmatprep.subr.mxu0 0.0
      %616 = vmatpush1.msra.mxu0 0.0
      %617 = vmatprep.subr.mxu0 0.0
      %618 = vmatpush1.msra.mxu0 0.0
      %619 = vmatprep.subr.mxu0 0.0
      %620 = vmatpush1.msra.mxu0 0.0
      %621 = vmatprep.subr.mxu0 0.0
      %622 = vmatpush1.msra.mxu0 0.0
      %623 = vmatprep.subr.mxu0 0.0
      %624 = vmatpush1.msra.mxu0 0.0
      %625 = vmatprep.subr.mxu0 0.0
      %626 = vmatpush1.msra.mxu0 0.0
      %627 = vmatprep.subr.mxu0 0.0
      %628 = vmatpush1.msra.mxu0 0.0
      %629 = vmatprep.subr.mxu0 0.0
      %630 = vmatpush1.msra.mxu0 0.0
      %631 = vmatprep.subr.mxu0 0.0
      %632 = vmatpush1.msra.mxu0 0.0
      %633 = vmatprep.subr.mxu0 0.0
      %634 = vmatpush1.msra.mxu0 0.0
      %635 = vmatprep.subr.mxu0 0.0
      %636 = vmatpush1.msra.mxu0 0.0
      %637 = vmatprep.subr.mxu0 0.0
      %638 = vmatpush1.msra.mxu0 0.0
      %639 = vmatprep.subr.mxu0 0.0
      %640 = vmatpush1.msra.mxu0 0.0
      %641 = vmatprep.subr.mxu0 0.0
      %642 = vmatpush1.msra.mxu0 0.0
      %643 = vmatprep.subr.mxu0 0.0
      %644 = vmatpush1.msra.mxu0 0.0
      %645 = vmatprep.subr.mxu0 0.0
      %646 = vmatpush1.msra.mxu0 0.0
      %647 = vmatprep.subr.mxu0 0.0
      %648 = vmatpush1.msra.mxu0 0.0
      %649 = vmatprep.mubr.f32.mxu0 0.0
      %650 = vmatmul.mubr.f32.gmra.mrb[0].mxu0 %v562
      %v651 = vpop.f32.mrb[0].mxu0
      %v652 = vadd.f32 0.0, %v651
      %v653 = vpop.f32.mrb[0].mxu0
      %654 = vmatprep.mubr.f32.mxu0 0.0
      %655 = vmatmul.mubr.f32.gmra.mrb[0].mxu0 %v565
      %v656 = vpop.f32.mrb[0].mxu0
      %v657 = vadd.f32 0.0, %v656
      %v658 = vpop.f32.mrb[0].mxu0
      %659 = vmatprep.mubr.f32.mxu0 0.0
      %660 = vmatmul.mubr.f32.gmra.mrb[0].mxu0 %v568
      %v661 = vpop.f32.mrb[0].mxu0
      %v662 = vadd.f32 0.0, %v661
      %v663 = vpop.f32.mrb[0].mxu0
      %664 = vmatprep.mubr.f32.mxu0 0.0
      %665 = vmatmul.mubr.f32.gmra.mrb[0].mxu0 %v571
      %v666 = vpop.f32.mrb[0].mxu0
      %v667 = vadd.f32 0.0, %v666
      %v668 = vpop.f32.mrb[0].mxu0
      %669 = vmatprep.mubr.f32.mxu0 0.0
      %670 = vmatmul.mubr.f32.gmra.mrb[0].mxu0 %v574
      %v671 = vpop.f32.mrb[0].mxu0
      %v672 = vadd.f32 0.0, %v671
      %v673 = vpop.f32.mrb[0].mxu0
      %674 = vmatprep.mubr.f32.mxu0 0.0
      %675 = vmatmul.mubr.f32.gmra.mrb[0].mxu0 %v577
      %v676 = vpop.f32.mrb[0].mxu0
      %v677 = vadd.f32 0.0, %v676
      %v678 = vpop.f32.mrb[0].mxu0
      %679 = vmatprep.mubr.f32.mxu0 0.0
      %680 = vmatmul.mubr.f32.gmra.mrb[0].mxu0 %v580
      %v681 = vpop.f32.mrb[0].mxu0
      %v682 = vadd.f32 0.0, %v681
      %v683 = vpop.f32.mrb[0].mxu0
      %684 = vmatprep.mubr.f32.mxu0 0.0
      %685 = vmatmul.mubr.f32.gmra.mrb[0].mxu0 %v583
      %v686 = vpop.f32.mrb[0].mxu0
      %v687 = vadd.f32 0.0, %v686
      %v688 = vpop.f32.mrb[0].mxu0
      %689 = vdwg.mxu0
      %v690 = vadd.f32 %v510, %v652
      %v691 = vadd.f32 %v515, %v657
      %v692 = vadd.f32 %v520, %v662
      %v693 = vadd.f32 %v525, %v667
      %v694 = vadd.f32 %v530, %v672
      %v695 = vadd.f32 %v535, %v677
      %v696 = vadd.f32 %v540, %v682
      %v697 = vadd.f32 %v545, %v687
      %v698 = vld [vmem:[%s255] sm:$0xff]
      %v699 = vld [vmem:[%s255 + $0x10] sm:$0xff]
      %v700 = vld [vmem:[%s255 + $0x20] sm:$0xff]
      %v701 = vld [vmem:[%s255 + $0x30] sm:$0xff]
      %v702 = vld [vmem:[%s255 + $0x40] sm:$0xff]
      %v703 = vld [vmem:[%s255 + $0x50] sm:$0xff]
      %v704 = vld [vmem:[%s255 + $0x60] sm:$0xff]
      %v705 = vld [vmem:[%s255 + $0x70] sm:$0xff]
      %s706 = scalar_lea.vmem %s1, 96
      %v707 = vld [vmem:[%s706] sm:$0xff]
      %v708 = vld [vmem:[%s706 + $0x8] sm:$0xff]
      %v709 = vld [vmem:[%s706 + $0x10] sm:$0xff]
      %v710 = vld [vmem:[%s706 + $0x18] sm:$0xff]
      %v712 = vsel %vm225, %v698, 0
      %v715 = vsel %vm225, %v699, 0
      %v718 = vsel %vm225, %v700, 0
      %v721 = vsel %vm225, %v701, 0
      %v724 = vsel %vm225, %v702, 0
      %v727 = vsel %vm225, %v703, 0
      %v730 = vsel %vm225, %v704, 0
      %v733 = vsel %vm225, %v705, 0
      %735 = vmatprep.subr.mxu0 0.0
      %736 = vmatpush1.msra.mxu0 %v707
      %737 = vmatprep.subr.mxu0 0.0
      %738 = vmatpush1.msra.mxu0 %v708
      %739 = vmatprep.subr.mxu0 0.0
      %740 = vmatpush1.msra.mxu0 %v709
      %741 = vmatprep.subr.mxu0 0.0
      %742 = vmatpush1.msra.mxu0 %v710
      %743 = vmatprep.subr.mxu0 0.0
      %744 = vmatpush1.msra.mxu0 0.0
      %745 = vmatprep.subr.mxu0 0.0
      %746 = vmatpush1.msra.mxu0 0.0
      %747 = vmatprep.subr.mxu0 0.0
      %748 = vmatpush1.msra.mxu0 0.0
      %749 = vmatprep.subr.mxu0 0.0
      %750 = vmatpush1.msra.mxu0 0.0
      %751 = vmatprep.subr.mxu0 0.0
      %752 = vmatpush1.msra.mxu0 0.0
      %753 = vmatprep.subr.mxu0 0.0
      %754 = vmatpush1.msra.mxu0 0.0
      %755 = vmatprep.subr.mxu0 0.0
      %756 = vmatpush1.msra.mxu0 0.0
      %757 = vmatprep.subr.mxu0 0.0
      %758 = vmatpush1.msra.mxu0 0.0
      %759 = vmatprep.subr.mxu0 0.0
      %760 = vmatpush1.msra.mxu0 0.0
      %761 = vmatprep.subr.mxu0 0.0
      %762 = vmatpush1.msra.mxu0 0.0
      %763 = vmatprep.subr.mxu0 0.0
      %764 = vmatpush1.msra.mxu0 0.0
      %765 = vmatprep.subr.mxu0 0.0
      %766 = vmatpush1.msra.mxu0 0.0
      %767 = vmatprep.subr.mxu0 0.0
      %768 = vmatpush1.msra.mxu0 0.0
      %769 = vmatprep.subr.mxu0 0.0
      %770 = vmatpush1.msra.mxu0 0.0
      %771 = vmatprep.subr.mxu0 0.0
      %772 = vmatpush1.msra.mxu0 0.0
      %773 = vmatprep.subr.mxu0 0.0
      %774 = vmatpush1.msra.mxu0 0.0
      %775 = vmatprep.subr.mxu0 0.0
      %776 = vmatpush1.msra.mxu0 0.0
      %777 = vmatprep.subr.mxu0 0.0
      %778 = vmatpush1.msra.mxu0 0.0
      %779 = vmatprep.subr.mxu0 0.0
      %780 = vmatpush1.msra.mxu0 0.0
      %781 = vmatprep.subr.mxu0 0.0
      %782 = vmatpush1.msra.mxu0 0.0
      %783 = vmatprep.subr.mxu0 0.0
      %784 = vmatpush1.msra.mxu0 0.0
      %785 = vmatprep.subr.mxu0 0.0
      %786 = vmatpush1.msra.mxu0 0.0
      %787 = vmatprep.subr.mxu0 0.0
      %788 = vmatpush1.msra.mxu0 0.0
      %789 = vmatprep.subr.mxu0 0.0
      %790 = vmatpush1.msra.mxu0 0.0
      %791 = vmatprep.subr.mxu0 0.0
      %792 = vmatpush1.msra.mxu0 0.0
      %793 = vmatprep.subr.mxu0 0.0
      %794 = vmatpush1.msra.mxu0 0.0
      %795 = vmatprep.subr.mxu0 0.0
      %796 = vmatpush1.msra.mxu0 0.0
      %797 = vmatprep.subr.mxu0 0.0
      %798 = vmatpush1.msra.mxu0 0.0
      %799 = vmatprep.mubr.f32.mxu0 0.0
      %800 = vmatmul.mubr.f32.gmra.mrb[0].mxu0 %v712
      %v801 = vpop.f32.mrb[0].mxu0
      %v802 = vadd.f32 0.0, %v801
      %v803 = vpop.f32.mrb[0].mxu0
      %804 = vmatprep.mubr.f32.mxu0 0.0
      %805 = vmatmul.mubr.f32.gmra.mrb[0].mxu0 %v715
      %v806 = vpop.f32.mrb[0].mxu0
      %v807 = vadd.f32 0.0, %v806
      %v808 = vpop.f32.mrb[0].mxu0
      %809 = vmatprep.mubr.f32.mxu0 0.0
      %810 = vmatmul.mubr.f32.gmra.mrb[0].mxu0 %v718
      %v811 = vpop.f32.mrb[0].mxu0
      %v812 = vadd.f32 0.0, %v811
      %v813 = vpop.f32.mrb[0].mxu0
      %814 = vmatprep.mubr.f32.mxu0 0.0
      %815 = vmatmul.mubr.f32.gmra.mrb[0].mxu0 %v721
      %v816 = vpop.f32.mrb[0].mxu0
      %v817 = vadd.f32 0.0, %v816
      %v818 = vpop.f32.mrb[0].mxu0
      %819 = vmatprep.mubr.f32.mxu0 0.0
      %820 = vmatmul.mubr.f32.gmra.mrb[0].mxu0 %v724
      %v821 = vpop.f32.mrb[0].mxu0
      %v822 = vadd.f32 0.0, %v821
      %v823 = vpop.f32.mrb[0].mxu0
      %824 = vmatprep.mubr.f32.mxu0 0.0
      %825 = vmatmul.mubr.f32.gmra.mrb[0].mxu0 %v727
      %v826 = vpop.f32.mrb[0].mxu0
      %v827 = vadd.f32 0.0, %v826
      %v828 = vpop.f32.mrb[0].mxu0
      %829 = vmatprep.mubr.f32.mxu0 0.0
      %830 = vmatmul.mubr.f32.gmra.mrb[0].mxu0 %v730
      %v831 = vpop.f32.mrb[0].mxu0
      %v832 = vadd.f32 0.0, %v831
      %v833 = vpop.f32.mrb[0].mxu0
      %834 = vmatprep.mubr.f32.mxu0 0.0
      %835 = vmatmul.mubr.f32.gmra.mrb[0].mxu0 %v733
      %v836 = vpop.f32.mrb[0].mxu0
      %v837 = vadd.f32 0.0, %v836
      %v838 = vpop.f32.mrb[0].mxu0
      %839 = vdwg.mxu0
      %v840 = vadd.f32 %v690, %v802
      %v841 = vadd.f32 %v691, %v807
      %v842 = vadd.f32 %v692, %v812
      %v843 = vadd.f32 %v693, %v817
      %v844 = vadd.f32 %v694, %v822
      %v845 = vadd.f32 %v695, %v827
      %v846 = vadd.f32 %v696, %v832
      %v847 = vadd.f32 %v697, %v837
      %v848 = vld [vmem:[%s255 + $0x1] sm:$0xff]
      %v849 = vld [vmem:[%s255 + $0x11] sm:$0xff]
      %v850 = vld [vmem:[%s255 + $0x21] sm:$0xff]
      %v851 = vld [vmem:[%s255 + $0x31] sm:$0xff]
      %v852 = vld [vmem:[%s255 + $0x41] sm:$0xff]
      %v853 = vld [vmem:[%s255 + $0x51] sm:$0xff]
      %v854 = vld [vmem:[%s255 + $0x61] sm:$0xff]
      %v855 = vld [vmem:[%s255 + $0x71] sm:$0xff]
      %s856 = scalar_lea.vmem %s1, 128
      %v857 = vld [vmem:[%s856] sm:$0xff]
      %v858 = vld [vmem:[%s856 + $0x8] sm:$0xff]
      %v859 = vld [vmem:[%s856 + $0x10] sm:$0xff]
      %v860 = vld [vmem:[%s856 + $0x18] sm:$0xff]
      %v862 = vsel %vm225, %v848, 0
      %v865 = vsel %vm225, %v849, 0
      %v868 = vsel %vm225, %v850, 0
      %v871 = vsel %vm225, %v851, 0
      %v874 = vsel %vm225, %v852, 0
      %v877 = vsel %vm225, %v853, 0
      %v880 = vsel %vm225, %v854, 0
      %v883 = vsel %vm225, %v855, 0
      %885 = vmatprep.subr.mxu0 0.0
      %886 = vmatpush1.msra.mxu0 %v857
      %887 = vmatprep.subr.mxu0 0.0
      %888 = vmatpush1.msra.mxu0 %v858
      %889 = vmatprep.subr.mxu0 0.0
      %890 = vmatpush1.msra.mxu0 %v859
      %891 = vmatprep.subr.mxu0 0.0
      %892 = vmatpush1.msra.mxu0 %v860
      %893 = vmatprep.subr.mxu0 0.0
      %894 = vmatpush1.msra.mxu0 0.0
      %895 = vmatprep.subr.mxu0 0.0
      %896 = vmatpush1.msra.mxu0 0.0
      %897 = vmatprep.subr.mxu0 0.0
      %898 = vmatpush1.msra.mxu0 0.0
      %899 = vmatprep.subr.mxu0 0.0
      %900 = vmatpush1.msra.mxu0 0.0
      %901 = vmatprep.subr.mxu0 0.0
      %902 = vmatpush1.msra.mxu0 0.0
      %903 = vmatprep.subr.mxu0 0.0
      %904 = vmatpush1.msra.mxu0 0.0
      %905 = vmatprep.subr.mxu0 0.0
      %906 = vmatpush1.msra.mxu0 0.0
      %907 = vmatprep.subr.mxu0 0.0
      %908 = vmatpush1.msra.mxu0 0.0
      %909 = vmatprep.subr.mxu0 0.0
      %910 = vmatpush1.msra.mxu0 0.0
      %911 = vmatprep.subr.mxu0 0.0
      %912 = vmatpush1.msra.mxu0 0.0
      %913 = vmatprep.subr.mxu0 0.0
      %914 = vmatpush1.msra.mxu0 0.0
      %915 = vmatprep.subr.mxu0 0.0
      %916 = vmatpush1.msra.mxu0 0.0
      %917 = vmatprep.subr.mxu0 0.0
      %918 = vmatpush1.msra.mxu0 0.0
      %919 = vmatprep.subr.mxu0 0.0
      %920 = vmatpush1.msra.mxu0 0.0
      %921 = vmatprep.subr.mxu0 0.0
      %922 = vmatpush1.msra.mxu0 0.0
      %923 = vmatprep.subr.mxu0 0.0
      %924 = vmatpush1.msra.mxu0 0.0
      %925 = vmatprep.subr.mxu0 0.0
      %926 = vmatpush1.msra.mxu0 0.0
      %927 = vmatprep.subr.mxu0 0.0
      %928 = vmatpush1.msra.mxu0 0.0
      %929 = vmatprep.subr.mxu0 0.0
      %930 = vmatpush1.msra.mxu0 0.0
      %931 = vmatprep.subr.mxu0 0.0
      %932 = vmatpush1.msra.mxu0 0.0
      %933 = vmatprep.subr.mxu0 0.0
      %934 = vmatpush1.msra.mxu0 0.0
      %935 = vmatprep.subr.mxu0 0.0
      %936 = vmatpush1.msra.mxu0 0.0
      %937 = vmatprep.subr.mxu0 0.0
      %938 = vmatpush1.msra.mxu0 0.0
      %939 = vmatprep.subr.mxu0 0.0
      %940 = vmatpush1.msra.mxu0 0.0
      %941 = vmatprep.subr.mxu0 0.0
      %942 = vmatpush1.msra.mxu0 0.0
      %943 = vmatprep.subr.mxu0 0.0
      %944 = vmatpush1.msra.mxu0 0.0
      %945 = vmatprep.subr.mxu0 0.0
      %946 = vmatpush1.msra.mxu0 0.0
      %947 = vmatprep.subr.mxu0 0.0
      %948 = vmatpush1.msra.mxu0 0.0
      %949 = vmatprep.mubr.f32.mxu0 0.0
      %950 = vmatmul.mubr.f32.gmra.mrb[0].mxu0 %v862
      %v951 = vpop.f32.mrb[0].mxu0
      %v952 = vadd.f32 0.0, %v951
      %v953 = vpop.f32.mrb[0].mxu0
      %954 = vmatprep.mubr.f32.mxu0 0.0
      %955 = vmatmul.mubr.f32.gmra.mrb[0].mxu0 %v865
      %v956 = vpop.f32.mrb[0].mxu0
      %v957 = vadd.f32 0.0, %v956
      %v958 = vpop.f32.mrb[0].mxu0
      %959 = vmatprep.mubr.f32.mxu0 0.0
      %960 = vmatmul.mubr.f32.gmra.mrb[0].mxu0 %v868
      %v961 = vpop.f32.mrb[0].mxu0
      %v962 = vadd.f32 0.0, %v961
      %v963 = vpop.f32.mrb[0].mxu0
      %964 = vmatprep.mubr.f32.mxu0 0.0
      %965 = vmatmul.mubr.f32.gmra.mrb[0].mxu0 %v871
      %v966 = vpop.f32.mrb[0].mxu0
      %v967 = vadd.f32 0.0, %v966
      %v968 = vpop.f32.mrb[0].mxu0
      %969 = vmatprep.mubr.f32.mxu0 0.0
      %970 = vmatmul.mubr.f32.gmra.mrb[0].mxu0 %v874
      %v971 = vpop.f32.mrb[0].mxu0
      %v972 = vadd.f32 0.0, %v971
      %v973 = vpop.f32.mrb[0].mxu0
      %974 = vmatprep.mubr.f32.mxu0 0.0
      %975 = vmatmul.mubr.f32.gmra.mrb[0].mxu0 %v877
      %v976 = vpop.f32.mrb[0].mxu0
      %v977 = vadd.f32 0.0, %v976
      %v978 = vpop.f32.mrb[0].mxu0
      %979 = vmatprep.mubr.f32.mxu0 0.0
      %980 = vmatmul.mubr.f32.gmra.mrb[0].mxu0 %v880
      %v981 = vpop.f32.mrb[0].mxu0
      %v982 = vadd.f32 0.0, %v981
      %v983 = vpop.f32.mrb[0].mxu0
      %984 = vmatprep.mubr.f32.mxu0 0.0
      %985 = vmatmul.mubr.f32.gmra.mrb[0].mxu0 %v883
      %v986 = vpop.f32.mrb[0].mxu0
      %v987 = vadd.f32 0.0, %v986
      %v988 = vpop.f32.mrb[0].mxu0
      %989 = vdwg.mxu0
      %v990 = vadd.f32 %v840, %v952
      %v991 = vadd.f32 %v841, %v957
      %v992 = vadd.f32 %v842, %v962
      %v993 = vadd.f32 %v843, %v967
      %v994 = vadd.f32 %v844, %v972
      %v995 = vadd.f32 %v845, %v977
      %v996 = vadd.f32 %v846, %v982
      %v997 = vadd.f32 %v847, %v987
      %v998 = vld [vmem:[%s255 + $0x2] sm:$0xff]
      %v999 = vld [vmem:[%s255 + $0x12] sm:$0xff]
      %v1000 = vld [vmem:[%s255 + $0x22] sm:$0xff]
      %v1001 = vld [vmem:[%s255 + $0x32] sm:$0xff]
      %v1002 = vld [vmem:[%s255 + $0x42] sm:$0xff]
      %v1003 = vld [vmem:[%s255 + $0x52] sm:$0xff]
      %v1004 = vld [vmem:[%s255 + $0x62] sm:$0xff]
      %v1005 = vld [vmem:[%s255 + $0x72] sm:$0xff]
      %s1006 = scalar_lea.vmem %s1, 160
      %v1007 = vld [vmem:[%s1006] sm:$0xff]
      %v1008 = vld [vmem:[%s1006 + $0x8] sm:$0xff]
      %v1009 = vld [vmem:[%s1006 + $0x10] sm:$0xff]
      %v1010 = vld [vmem:[%s1006 + $0x18] sm:$0xff]
      %v1012 = vsel %vm225, %v998, 0
      %v1015 = vsel %vm225, %v999, 0
      %v1018 = vsel %vm225, %v1000, 0
      %v1021 = vsel %vm225, %v1001, 0
      %v1024 = vsel %vm225, %v1002, 0
      %v1027 = vsel %vm225, %v1003, 0
      %v1030 = vsel %vm225, %v1004, 0
      %v1033 = vsel %vm225, %v1005, 0
      %1035 = vmatprep.subr.mxu0 0.0
      %1036 = vmatpush1.msra.mxu0 %v1007
      %1037 = vmatprep.subr.mxu0 0.0
      %1038 = vmatpush1.msra.mxu0 %v1008
      %1039 = vmatprep.subr.mxu0 0.0
      %1040 = vmatpush1.msra.mxu0 %v1009
      %1041 = vmatprep.subr.mxu0 0.0
      %1042 = vmatpush1.msra.mxu0 %v1010
      %1043 = vmatprep.subr.mxu0 0.0
      %1044 = vmatpush1.msra.mxu0 0.0
      %1045 = vmatprep.subr.mxu0 0.0
      %1046 = vmatpush1.msra.mxu0 0.0
      %1047 = vmatprep.subr.mxu0 0.0
      %1048 = vmatpush1.msra.mxu0 0.0
      %1049 = vmatprep.subr.mxu0 0.0
      %1050 = vmatpush1.msra.mxu0 0.0
      %1051 = vmatprep.subr.mxu0 0.0
      %1052 = vmatpush1.msra.mxu0 0.0
      %1053 = vmatprep.subr.mxu0 0.0
      %1054 = vmatpush1.msra.mxu0 0.0
      %1055 = vmatprep.subr.mxu0 0.0
      %1056 = vmatpush1.msra.mxu0 0.0
      %1057 = vmatprep.subr.mxu0 0.0
      %1058 = vmatpush1.msra.mxu0 0.0
      %1059 = vmatprep.subr.mxu0 0.0
      %1060 = vmatpush1.msra.mxu0 0.0
      %1061 = vmatprep.subr.mxu0 0.0
      %1062 = vmatpush1.msra.mxu0 0.0
      %1063 = vmatprep.subr.mxu0 0.0
      %1064 = vmatpush1.msra.mxu0 0.0
      %1065 = vmatprep.subr.mxu0 0.0
      %1066 = vmatpush1.msra.mxu0 0.0
      %1067 = vmatprep.subr.mxu0 0.0
      %1068 = vmatpush1.msra.mxu0 0.0
      %1069 = vmatprep.subr.mxu0 0.0
      %1070 = vmatpush1.msra.mxu0 0.0
      %1071 = vmatprep.subr.mxu0 0.0
      %1072 = vmatpush1.msra.mxu0 0.0
      %1073 = vmatprep.subr.mxu0 0.0
      %1074 = vmatpush1.msra.mxu0 0.0
      %1075 = vmatprep.subr.mxu0 0.0
      %1076 = vmatpush1.msra.mxu0 0.0
      %1077 = vmatprep.subr.mxu0 0.0
      %1078 = vmatpush1.msra.mxu0 0.0
      %1079 = vmatprep.subr.mxu0 0.0
      %1080 = vmatpush1.msra.mxu0 0.0
      %1081 = vmatprep.subr.mxu0 0.0
      %1082 = vmatpush1.msra.mxu0 0.0
      %1083 = vmatprep.subr.mxu0 0.0
      %1084 = vmatpush1.msra.mxu0 0.0
      %1085 = vmatprep.subr.mxu0 0.0
      %1086 = vmatpush1.msra.mxu0 0.0
      %1087 = vmatprep.subr.mxu0 0.0
      %1088 = vmatpush1.msra.mxu0 0.0
      %1089 = vmatprep.subr.mxu0 0.0
      %1090 = vmatpush1.msra.mxu0 0.0
      %1091 = vmatprep.subr.mxu0 0.0
      %1092 = vmatpush1.msra.mxu0 0.0
      %1093 = vmatprep.subr.mxu0 0.0
      %1094 = vmatpush1.msra.mxu0 0.0
      %1095 = vmatprep.subr.mxu0 0.0
      %1096 = vmatpush1.msra.mxu0 0.0
      %1097 = vmatprep.subr.mxu0 0.0
      %1098 = vmatpush1.msra.mxu0 0.0
      %1099 = vmatprep.mubr.f32.mxu0 0.0
      %1100 = vmatmul.mubr.f32.gmra.mrb[0].mxu0 %v1012
      %v1101 = vpop.f32.mrb[0].mxu0
      %v1102 = vadd.f32 0.0, %v1101
      %v1103 = vpop.f32.mrb[0].mxu0
      %1104 = vmatprep.mubr.f32.mxu0 0.0
      %1105 = vmatmul.mubr.f32.gmra.mrb[0].mxu0 %v1015
      %v1106 = vpop.f32.mrb[0].mxu0
      %v1107 = vadd.f32 0.0, %v1106
      %v1108 = vpop.f32.mrb[0].mxu0
      %1109 = vmatprep.mubr.f32.mxu0 0.0
      %1110 = vmatmul.mubr.f32.gmra.mrb[0].mxu0 %v1018
      %v1111 = vpop.f32.mrb[0].mxu0
      %v1112 = vadd.f32 0.0, %v1111
      %v1113 = vpop.f32.mrb[0].mxu0
      %1114 = vmatprep.mubr.f32.mxu0 0.0
      %1115 = vmatmul.mubr.f32.gmra.mrb[0].mxu0 %v1021
      %v1116 = vpop.f32.mrb[0].mxu0
      %v1117 = vadd.f32 0.0, %v1116
      %v1118 = vpop.f32.mrb[0].mxu0
      %1119 = vmatprep.mubr.f32.mxu0 0.0
      %1120 = vmatmul.mubr.f32.gmra.mrb[0].mxu0 %v1024
      %v1121 = vpop.f32.mrb[0].mxu0
      %v1122 = vadd.f32 0.0, %v1121
      %v1123 = vpop.f32.mrb[0].mxu0
      %1124 = vmatprep.mubr.f32.mxu0 0.0
      %1125 = vmatmul.mubr.f32.gmra.mrb[0].mxu0 %v1027
      %v1126 = vpop.f32.mrb[0].mxu0
      %v1127 = vadd.f32 0.0, %v1126
      %v1128 = vpop.f32.mrb[0].mxu0
      %1129 = vmatprep.mubr.f32.mxu0 0.0
      %1130 = vmatmul.mubr.f32.gmra.mrb[0].mxu0 %v1030
      %v1131 = vpop.f32.mrb[0].mxu0
      %v1132 = vadd.f32 0.0, %v1131
      %v1133 = vpop.f32.mrb[0].mxu0
      %1134 = vmatprep.mubr.f32.mxu0 0.0
      %1135 = vmatmul.mubr.f32.gmra.mrb[0].mxu0 %v1033
      %v1136 = vpop.f32.mrb[0].mxu0
      %v1137 = vadd.f32 0.0, %v1136
      %v1138 = vpop.f32.mrb[0].mxu0
      %1139 = vdwg.mxu0
      %v1140 = vadd.f32 %v990, %v1102
      %v1141 = vadd.f32 %v991, %v1107
      %v1142 = vadd.f32 %v992, %v1112
      %v1143 = vadd.f32 %v993, %v1117
      %v1144 = vadd.f32 %v994, %v1122
      %v1145 = vadd.f32 %v995, %v1127
      %v1146 = vadd.f32 %v996, %v1132
      %v1147 = vadd.f32 %v997, %v1137
      %s1148 = scalar_lea.vmem [#allocation2], 32
      %v1149 = vld [vmem:[%s1148] sm:$0xff]
      %v1150 = vld [vmem:[%s1148 + $0x10] sm:$0xff]
      %v1151 = vld [vmem:[%s1148 + $0x20] sm:$0xff]
      %v1152 = vld [vmem:[%s1148 + $0x30] sm:$0xff]
      %v1153 = vld [vmem:[%s1148 + $0x40] sm:$0xff]
      %v1154 = vld [vmem:[%s1148 + $0x50] sm:$0xff]
      %v1155 = vld [vmem:[%s1148 + $0x60] sm:$0xff]
      %v1156 = vld [vmem:[%s1148 + $0x70] sm:$0xff]
      %s1157 = scalar_lea.vmem %s1, 192
      %v1158 = vld [vmem:[%s1157] sm:$0xff]
      %v1159 = vld [vmem:[%s1157 + $0x8] sm:$0xff]
      %v1160 = vld [vmem:[%s1157 + $0x10] sm:$0xff]
      %v1161 = vld [vmem:[%s1157 + $0x18] sm:$0xff]
      %v1163 = vsel %vm225, %v1149, 0
      %v1166 = vsel %vm225, %v1150, 0
      %v1169 = vsel %vm225, %v1151, 0
      %v1172 = vsel %vm225, %v1152, 0
      %v1175 = vsel %vm225, %v1153, 0
      %v1178 = vsel %vm225, %v1154, 0
      %v1181 = vsel %vm225, %v1155, 0
      %v1184 = vsel %vm225, %v1156, 0
      %1186 = vmatprep.subr.mxu0 0.0
      %1187 = vmatpush1.msra.mxu0 %v1158
      %1188 = vmatprep.subr.mxu0 0.0
      %1189 = vmatpush1.msra.mxu0 %v1159
      %1190 = vmatprep.subr.mxu0 0.0
      %1191 = vmatpush1.msra.mxu0 %v1160
      %1192 = vmatprep.subr.mxu0 0.0
      %1193 = vmatpush1.msra.mxu0 %v1161
      %1194 = vmatprep.subr.mxu0 0.0
      %1195 = vmatpush1.msra.mxu0 0.0
      %1196 = vmatprep.subr.mxu0 0.0
      %1197 = vmatpush1.msra.mxu0 0.0
      %1198 = vmatprep.subr.mxu0 0.0
      %1199 = vmatpush1.msra.mxu0 0.0
      %1200 = vmatprep.subr.mxu0 0.0
      %1201 = vmatpush1.msra.mxu0 0.0
      %1202 = vmatprep.subr.mxu0 0.0
      %1203 = vmatpush1.msra.mxu0 0.0
      %1204 = vmatprep.subr.mxu0 0.0
      %1205 = vmatpush1.msra.mxu0 0.0
      %1206 = vmatprep.subr.mxu0 0.0
      %1207 = vmatpush1.msra.mxu0 0.0
      %1208 = vmatprep.subr.mxu0 0.0
      %1209 = vmatpush1.msra.mxu0 0.0
      %1210 = vmatprep.subr.mxu0 0.0
      %1211 = vmatpush1.msra.mxu0 0.0
      %1212 = vmatprep.subr.mxu0 0.0
      %1213 = vmatpush1.msra.mxu0 0.0
      %1214 = vmatprep.subr.mxu0 0.0
      %1215 = vmatpush1.msra.mxu0 0.0
      %1216 = vmatprep.subr.mxu0 0.0
      %1217 = vmatpush1.msra.mxu0 0.0
      %1218 = vmatprep.subr.mxu0 0.0
      %1219 = vmatpush1.msra.mxu0 0.0
      %1220 = vmatprep.subr.mxu0 0.0
      %1221 = vmatpush1.msra.mxu0 0.0
      %1222 = vmatprep.subr.mxu0 0.0
      %1223 = vmatpush1.msra.mxu0 0.0
      %1224 = vmatprep.subr.mxu0 0.0
      %1225 = vmatpush1.msra.mxu0 0.0
      %1226 = vmatprep.subr.mxu0 0.0
      %1227 = vmatpush1.msra.mxu0 0.0
      %1228 = vmatprep.subr.mxu0 0.0
      %1229 = vmatpush1.msra.mxu0 0.0
      %1230 = vmatprep.subr.mxu0 0.0
      %1231 = vmatpush1.msra.mxu0 0.0
      %1232 = vmatprep.subr.mxu0 0.0
      %1233 = vmatpush1.msra.mxu0 0.0
      %1234 = vmatprep.subr.mxu0 0.0
      %1235 = vmatpush1.msra.mxu0 0.0
      %1236 = vmatprep.subr.mxu0 0.0
      %1237 = vmatpush1.msra.mxu0 0.0
      %1238 = vmatprep.subr.mxu0 0.0
      %1239 = vmatpush1.msra.mxu0 0.0
      %1240 = vmatprep.subr.mxu0 0.0
      %1241 = vmatpush1.msra.mxu0 0.0
      %1242 = vmatprep.subr.mxu0 0.0
      %1243 = vmatpush1.msra.mxu0 0.0
      %1244 = vmatprep.subr.mxu0 0.0
      %1245 = vmatpush1.msra.mxu0 0.0
      %1246 = vmatprep.subr.mxu0 0.0
      %1247 = vmatpush1.msra.mxu0 0.0
      %1248 = vmatprep.subr.mxu0 0.0
      %1249 = vmatpush1.msra.mxu0 0.0
      %1250 = vmatprep.mubr.f32.mxu0 0.0
      %1251 = vmatmul.mubr.f32.gmra.mrb[0].mxu0 %v1163
      %v1252 = vpop.f32.mrb[0].mxu0
      %v1253 = vadd.f32 0.0, %v1252
      %v1254 = vpop.f32.mrb[0].mxu0
      %1255 = vmatprep.mubr.f32.mxu0 0.0
      %1256 = vmatmul.mubr.f32.gmra.mrb[0].mxu0 %v1166
      %v1257 = vpop.f32.mrb[0].mxu0
      %v1258 = vadd.f32 0.0, %v1257
      %v1259 = vpop.f32.mrb[0].mxu0
      %1260 = vmatprep.mubr.f32.mxu0 0.0
      %1261 = vmatmul.mubr.f32.gmra.mrb[0].mxu0 %v1169
      %v1262 = vpop.f32.mrb[0].mxu0
      %v1263 = vadd.f32 0.0, %v1262
      %v1264 = vpop.f32.mrb[0].mxu0
      %1265 = vmatprep.mubr.f32.mxu0 0.0
      %1266 = vmatmul.mubr.f32.gmra.mrb[0].mxu0 %v1172
      %v1267 = vpop.f32.mrb[0].mxu0
      %v1268 = vadd.f32 0.0, %v1267
      %v1269 = vpop.f32.mrb[0].mxu0
      %1270 = vmatprep.mubr.f32.mxu0 0.0
      %1271 = vmatmul.mubr.f32.gmra.mrb[0].mxu0 %v1175
      %v1272 = vpop.f32.mrb[0].mxu0
      %v1273 = vadd.f32 0.0, %v1272
      %v1274 = vpop.f32.mrb[0].mxu0
      %1275 = vmatprep.mubr.f32.mxu0 0.0
      %1276 = vmatmul.mubr.f32.gmra.mrb[0].mxu0 %v1178
      %v1277 = vpop.f32.mrb[0].mxu0
      %v1278 = vadd.f32 0.0, %v1277
      %v1279 = vpop.f32.mrb[0].mxu0
      %1280 = vmatprep.mubr.f32.mxu0 0.0
      %1281 = vmatmul.mubr.f32.gmra.mrb[0].mxu0 %v1181
      %v1282 = vpop.f32.mrb[0].mxu0
      %v1283 = vadd.f32 0.0, %v1282
      %v1284 = vpop.f32.mrb[0].mxu0
      %1285 = vmatprep.mubr.f32.mxu0 0.0
      %1286 = vmatmul.mubr.f32.gmra.mrb[0].mxu0 %v1184
      %v1287 = vpop.f32.mrb[0].mxu0
      %v1288 = vadd.f32 0.0, %v1287
      %v1289 = vpop.f32.mrb[0].mxu0
      %1290 = vdwg.mxu0
      %v1291 = vadd.f32 %v1140, %v1253
      %v1292 = vadd.f32 %v1141, %v1258
      %v1293 = vadd.f32 %v1142, %v1263
      %v1294 = vadd.f32 %v1143, %v1268
      %v1295 = vadd.f32 %v1144, %v1273
      %v1296 = vadd.f32 %v1145, %v1278
      %v1297 = vadd.f32 %v1146, %v1283
      %v1298 = vadd.f32 %v1147, %v1288
      %v1299 = vld [vmem:[%s1148 + $0x1] sm:$0xff]
      %v1300 = vld [vmem:[%s1148 + $0x11] sm:$0xff]
      %v1301 = vld [vmem:[%s1148 + $0x21] sm:$0xff]
      %v1302 = vld [vmem:[%s1148 + $0x31] sm:$0xff]
      %v1303 = vld [vmem:[%s1148 + $0x41] sm:$0xff]
      %v1304 = vld [vmem:[%s1148 + $0x51] sm:$0xff]
      %v1305 = vld [vmem:[%s1148 + $0x61] sm:$0xff]
      %v1306 = vld [vmem:[%s1148 + $0x71] sm:$0xff]
      %s1307 = scalar_lea.vmem %s1, 224
      %v1308 = vld [vmem:[%s1307] sm:$0xff]
      %v1309 = vld [vmem:[%s1307 + $0x8] sm:$0xff]
      %v1310 = vld [vmem:[%s1307 + $0x10] sm:$0xff]
      %v1311 = vld [vmem:[%s1307 + $0x18] sm:$0xff]
      %v1313 = vsel %vm225, %v1299, 0
      %v1316 = vsel %vm225, %v1300, 0
      %v1319 = vsel %vm225, %v1301, 0
      %v1322 = vsel %vm225, %v1302, 0
      %v1325 = vsel %vm225, %v1303, 0
      %v1328 = vsel %vm225, %v1304, 0
      %v1331 = vsel %vm225, %v1305, 0
      %v1334 = vsel %vm225, %v1306, 0
      %1336 = vmatprep.subr.mxu0 0.0
      %1337 = vmatpush1.msra.mxu0 %v1308
      %1338 = vmatprep.subr.mxu0 0.0
      %1339 = vmatpush1.msra.mxu0 %v1309
      %1340 = vmatprep.subr.mxu0 0.0
      %1341 = vmatpush1.msra.mxu0 %v1310
      %1342 = vmatprep.subr.mxu0 0.0
      %1343 = vmatpush1.msra.mxu0 %v1311
      %1344 = vmatprep.subr.mxu0 0.0
      %1345 = vmatpush1.msra.mxu0 0.0
      %1346 = vmatprep.subr.mxu0 0.0
      %1347 = vmatpush1.msra.mxu0 0.0
      %1348 = vmatprep.subr.mxu0 0.0
      %1349 = vmatpush1.msra.mxu0 0.0
      %1350 = vmatprep.subr.mxu0 0.0
      %1351 = vmatpush1.msra.mxu0 0.0
      %1352 = vmatprep.subr.mxu0 0.0
      %1353 = vmatpush1.msra.mxu0 0.0
      %1354 = vmatprep.subr.mxu0 0.0
      %1355 = vmatpush1.msra.mxu0 0.0
      %1356 = vmatprep.subr.mxu0 0.0
      %1357 = vmatpush1.msra.mxu0 0.0
      %1358 = vmatprep.subr.mxu0 0.0
      %1359 = vmatpush1.msra.mxu0 0.0
      %1360 = vmatprep.subr.mxu0 0.0
      %1361 = vmatpush1.msra.mxu0 0.0
      %1362 = vmatprep.subr.mxu0 0.0
      %1363 = vmatpush1.msra.mxu0 0.0
      %1364 = vmatprep.subr.mxu0 0.0
      %1365 = vmatpush1.msra.mxu0 0.0
      %1366 = vmatprep.subr.mxu0 0.0
      %1367 = vmatpush1.msra.mxu0 0.0
      %1368 = vmatprep.subr.mxu0 0.0
      %1369 = vmatpush1.msra.mxu0 0.0
      %1370 = vmatprep.subr.mxu0 0.0
      %1371 = vmatpush1.msra.mxu0 0.0
      %1372 = vmatprep.subr.mxu0 0.0
      %1373 = vmatpush1.msra.mxu0 0.0
      %1374 = vmatprep.subr.mxu0 0.0
      %1375 = vmatpush1.msra.mxu0 0.0
      %1376 = vmatprep.subr.mxu0 0.0
      %1377 = vmatpush1.msra.mxu0 0.0
      %1378 = vmatprep.subr.mxu0 0.0
      %1379 = vmatpush1.msra.mxu0 0.0
      %1380 = vmatprep.subr.mxu0 0.0
      %1381 = vmatpush1.msra.mxu0 0.0
      %1382 = vmatprep.subr.mxu0 0.0
      %1383 = vmatpush1.msra.mxu0 0.0
      %1384 = vmatprep.subr.mxu0 0.0
      %1385 = vmatpush1.msra.mxu0 0.0
      %1386 = vmatprep.subr.mxu0 0.0
      %1387 = vmatpush1.msra.mxu0 0.0
      %1388 = vmatprep.subr.mxu0 0.0
      %1389 = vmatpush1.msra.mxu0 0.0
      %1390 = vmatprep.subr.mxu0 0.0
      %1391 = vmatpush1.msra.mxu0 0.0
      %1392 = vmatprep.subr.mxu0 0.0
      %1393 = vmatpush1.msra.mxu0 0.0
      %1394 = vmatprep.subr.mxu0 0.0
      %1395 = vmatpush1.msra.mxu0 0.0
      %1396 = vmatprep.subr.mxu0 0.0
      %1397 = vmatpush1.msra.mxu0 0.0
      %1398 = vmatprep.subr.mxu0 0.0
      %1399 = vmatpush1.msra.mxu0 0.0
      %1400 = vmatprep.mubr.f32.mxu0 0.0
      %1401 = vmatmul.mubr.f32.gmra.mrb[0].mxu0 %v1313
      %v1402 = vpop.f32.mrb[0].mxu0
      %v1403 = vadd.f32 0.0, %v1402
      %v1404 = vpop.f32.mrb[0].mxu0
      %1405 = vmatprep.mubr.f32.mxu0 0.0
      %1406 = vmatmul.mubr.f32.gmra.mrb[0].mxu0 %v1316
      %v1407 = vpop.f32.mrb[0].mxu0
      %v1408 = vadd.f32 0.0, %v1407
      %v1409 = vpop.f32.mrb[0].mxu0
      %1410 = vmatprep.mubr.f32.mxu0 0.0
      %1411 = vmatmul.mubr.f32.gmra.mrb[0].mxu0 %v1319
      %v1412 = vpop.f32.mrb[0].mxu0
      %v1413 = vadd.f32 0.0, %v1412
      %v1414 = vpop.f32.mrb[0].mxu0
      %1415 = vmatprep.mubr.f32.mxu0 0.0
      %1416 = vmatmul.mubr.f32.gmra.mrb[0].mxu0 %v1322
      %v1417 = vpop.f32.mrb[0].mxu0
      %v1418 = vadd.f32 0.0, %v1417
      %v1419 = vpop.f32.mrb[0].mxu0
      %1420 = vmatprep.mubr.f32.mxu0 0.0
      %1421 = vmatmul.mubr.f32.gmra.mrb[0].mxu0 %v1325
      %v1422 = vpop.f32.mrb[0].mxu0
      %v1423 = vadd.f32 0.0, %v1422
      %v1424 = vpop.f32.mrb[0].mxu0
      %1425 = vmatprep.mubr.f32.mxu0 0.0
      %1426 = vmatmul.mubr.f32.gmra.mrb[0].mxu0 %v1328
      %v1427 = vpop.f32.mrb[0].mxu0
      %v1428 = vadd.f32 0.0, %v1427
      %v1429 = vpop.f32.mrb[0].mxu0
      %1430 = vmatprep.mubr.f32.mxu0 0.0
      %1431 = vmatmul.mubr.f32.gmra.mrb[0].mxu0 %v1331
      %v1432 = vpop.f32.mrb[0].mxu0
      %v1433 = vadd.f32 0.0, %v1432
      %v1434 = vpop.f32.mrb[0].mxu0
      %1435 = vmatprep.mubr.f32.mxu0 0.0
      %1436 = vmatmul.mubr.f32.gmra.mrb[0].mxu0 %v1334
      %v1437 = vpop.f32.mrb[0].mxu0
      %v1438 = vadd.f32 0.0, %v1437
      %v1439 = vpop.f32.mrb[0].mxu0
      %1440 = vdwg.mxu0
      %v1441 = vadd.f32 %v1291, %v1403
      %v1442 = vadd.f32 %v1292, %v1408
      %v1443 = vadd.f32 %v1293, %v1413
      %v1444 = vadd.f32 %v1294, %v1418
      %v1445 = vadd.f32 %v1295, %v1423
      %v1446 = vadd.f32 %v1296, %v1428
      %v1447 = vadd.f32 %v1297, %v1433
      %v1448 = vadd.f32 %v1298, %v1438
      %v1449 = vld [vmem:[%s1148 + $0x2] sm:$0xff]
      %v1450 = vld [vmem:[%s1148 + $0x12] sm:$0xff]
      %v1451 = vld [vmem:[%s1148 + $0x22] sm:$0xff]
      %v1452 = vld [vmem:[%s1148 + $0x32] sm:$0xff]
      %v1453 = vld [vmem:[%s1148 + $0x42] sm:$0xff]
      %v1454 = vld [vmem:[%s1148 + $0x52] sm:$0xff]
      %v1455 = vld [vmem:[%s1148 + $0x62] sm:$0xff]
      %v1456 = vld [vmem:[%s1148 + $0x72] sm:$0xff]
      %s1457 = scalar_lea.vmem %s1, 256
      %v1458 = vld [vmem:[%s1457] sm:$0xff]
      %v1459 = vld [vmem:[%s1457 + $0x8] sm:$0xff]
      %v1460 = vld [vmem:[%s1457 + $0x10] sm:$0xff]
      %v1461 = vld [vmem:[%s1457 + $0x18] sm:$0xff]
      %v1463 = vsel %vm225, %v1449, 0
      %v1466 = vsel %vm225, %v1450, 0
      %v1469 = vsel %vm225, %v1451, 0
      %v1472 = vsel %vm225, %v1452, 0
      %v1475 = vsel %vm225, %v1453, 0
      %v1478 = vsel %vm225, %v1454, 0
      %v1481 = vsel %vm225, %v1455, 0
      %v1484 = vsel %vm225, %v1456, 0
      %1486 = vmatprep.subr.mxu0 0.0
      %1487 = vmatpush1.msra.mxu0 %v1458
      %1488 = vmatprep.subr.mxu0 0.0
      %1489 = vmatpush1.msra.mxu0 %v1459
      %1490 = vmatprep.subr.mxu0 0.0
      %1491 = vmatpush1.msra.mxu0 %v1460
      %1492 = vmatprep.subr.mxu0 0.0
      %1493 = vmatpush1.msra.mxu0 %v1461
      %1494 = vmatprep.subr.mxu0 0.0
      %1495 = vmatpush1.msra.mxu0 0.0
      %1496 = vmatprep.subr.mxu0 0.0
      %1497 = vmatpush1.msra.mxu0 0.0
      %1498 = vmatprep.subr.mxu0 0.0
      %1499 = vmatpush1.msra.mxu0 0.0
      %1500 = vmatprep.subr.mxu0 0.0
      %1501 = vmatpush1.msra.mxu0 0.0
      %1502 = vmatprep.subr.mxu0 0.0
      %1503 = vmatpush1.msra.mxu0 0.0
      %1504 = vmatprep.subr.mxu0 0.0
      %1505 = vmatpush1.msra.mxu0 0.0
      %1506 = vmatprep.subr.mxu0 0.0
      %1507 = vmatpush1.msra.mxu0 0.0
      %1508 = vmatprep.subr.mxu0 0.0
      %1509 = vmatpush1.msra.mxu0 0.0
      %1510 = vmatprep.subr.mxu0 0.0
      %1511 = vmatpush1.msra.mxu0 0.0
      %1512 = vmatprep.subr.mxu0 0.0
      %1513 = vmatpush1.msra.mxu0 0.0
      %1514 = vmatprep.subr.mxu0 0.0
      %1515 = vmatpush1.msra.mxu0 0.0
      %1516 = vmatprep.subr.mxu0 0.0
      %1517 = vmatpush1.msra.mxu0 0.0
      %1518 = vmatprep.subr.mxu0 0.0
      %1519 = vmatpush1.msra.mxu0 0.0
      %1520 = vmatprep.subr.mxu0 0.0
      %1521 = vmatpush1.msra.mxu0 0.0
      %1522 = vmatprep.subr.mxu0 0.0
      %1523 = vmatpush1.msra.mxu0 0.0
      %1524 = vmatprep.subr.mxu0 0.0
      %1525 = vmatpush1.msra.mxu0 0.0
      %1526 = vmatprep.subr.mxu0 0.0
      %1527 = vmatpush1.msra.mxu0 0.0
      %1528 = vmatprep.subr.mxu0 0.0
      %1529 = vmatpush1.msra.mxu0 0.0
      %1530 = vmatprep.subr.mxu0 0.0
      %1531 = vmatpush1.msra.mxu0 0.0
      %1532 = vmatprep.subr.mxu0 0.0
      %1533 = vmatpush1.msra.mxu0 0.0
      %1534 = vmatprep.subr.mxu0 0.0
      %1535 = vmatpush1.msra.mxu0 0.0
      %1536 = vmatprep.subr.mxu0 0.0
      %1537 = vmatpush1.msra.mxu0 0.0
      %1538 = vmatprep.subr.mxu0 0.0
      %1539 = vmatpush1.msra.mxu0 0.0
      %1540 = vmatprep.subr.mxu0 0.0
      %1541 = vmatpush1.msra.mxu0 0.0
      %1542 = vmatprep.subr.mxu0 0.0
      %1543 = vmatpush1.msra.mxu0 0.0
      %1544 = vmatprep.subr.mxu0 0.0
      %1545 = vmatpush1.msra.mxu0 0.0
      %1546 = vmatprep.subr.mxu0 0.0
      %1547 = vmatpush1.msra.mxu0 0.0
      %1548 = vmatprep.subr.mxu0 0.0
      %1549 = vmatpush1.msra.mxu0 0.0
      %1550 = vmatprep.mubr.f32.mxu0 0.0
      %1551 = vmatmul.mubr.f32.gmra.mrb[0].mxu0 %v1463
      %v1552 = vpop.f32.mrb[0].mxu0
      %v1553 = vadd.f32 0.0, %v1552
      %v1554 = vpop.f32.mrb[0].mxu0
      %1555 = vmatprep.mubr.f32.mxu0 0.0
      %1556 = vmatmul.mubr.f32.gmra.mrb[0].mxu0 %v1466
      %v1557 = vpop.f32.mrb[0].mxu0
      %v1558 = vadd.f32 0.0, %v1557
      %v1559 = vpop.f32.mrb[0].mxu0
      %1560 = vmatprep.mubr.f32.mxu0 0.0
      %1561 = vmatmul.mubr.f32.gmra.mrb[0].mxu0 %v1469
      %v1562 = vpop.f32.mrb[0].mxu0
      %v1563 = vadd.f32 0.0, %v1562
      %v1564 = vpop.f32.mrb[0].mxu0
      %1565 = vmatprep.mubr.f32.mxu0 0.0
      %1566 = vmatmul.mubr.f32.gmra.mrb[0].mxu0 %v1472
      %v1567 = vpop.f32.mrb[0].mxu0
      %v1568 = vadd.f32 0.0, %v1567
      %v1569 = vpop.f32.mrb[0].mxu0
      %1570 = vmatprep.mubr.f32.mxu0 0.0
      %1571 = vmatmul.mubr.f32.gmra.mrb[0].mxu0 %v1475
      %v1572 = vpop.f32.mrb[0].mxu0
      %v1573 = vadd.f32 0.0, %v1572
      %v1574 = vpop.f32.mrb[0].mxu0
      %1575 = vmatprep.mubr.f32.mxu0 0.0
      %1576 = vmatmul.mubr.f32.gmra.mrb[0].mxu0 %v1478
      %v1577 = vpop.f32.mrb[0].mxu0
      %v1578 = vadd.f32 0.0, %v1577
      %v1579 = vpop.f32.mrb[0].mxu0
      %1580 = vmatprep.mubr.f32.mxu0 0.0
      %1581 = vmatmul.mubr.f32.gmra.mrb[0].mxu0 %v1481
      %v1582 = vpop.f32.mrb[0].mxu0
      %v1583 = vadd.f32 0.0, %v1582
      %v1584 = vpop.f32.mrb[0].mxu0
      %1585 = vmatprep.mubr.f32.mxu0 0.0
      %1586 = vmatmul.mubr.f32.gmra.mrb[0].mxu0 %v1484
      %v1587 = vpop.f32.mrb[0].mxu0
      %v1588 = vadd.f32 0.0, %v1587
      %v1589 = vpop.f32.mrb[0].mxu0
      %1590 = vdwg.mxu0
      %v1591 = vadd.f32 %v1441, %v1553
      %v1592 = vadd.f32 %v1442, %v1558
      %v1593 = vadd.f32 %v1443, %v1563
      %v1594 = vadd.f32 %v1444, %v1568
      %v1595 = vadd.f32 %v1445, %v1573
      %v1596 = vadd.f32 %v1446, %v1578
      %v1597 = vadd.f32 %v1447, %v1583
      %v1598 = vadd.f32 %v1448, %v1588
      %v1600 = vlaneseq
      %v1601 = vshrl.u32 %v1600, 7
      %v1602 = vsub.s32 0, %v1601
      %v1603 = vrot.slane %v264, %v1602
      %v1605 = vadd.f32 %v1591, %v1603
      %v1606 = vadd.f32 %v1592, %v1603
      %v1607 = vadd.f32 %v1593, %v1603
      %v1608 = vadd.f32 %v1594, %v1603
      %v1609 = vadd.f32 %v1595, %v1603
      %v1610 = vadd.f32 %v1596, %v1603
      %v1611 = vadd.f32 %v1597, %v1603
      %v1612 = vadd.f32 %v1598, %v1603
      %v1613 = vmax.f32 %v1605, 0.0
      %v1614 = vmax.f32 %v1606, 0.0
      %v1615 = vmax.f32 %v1607, 0.0
      %v1616 = vmax.f32 %v1608, 0.0
      %v1617 = vmax.f32 %v1609, 0.0
      %v1618 = vmax.f32 %v1610, 0.0
      %v1619 = vmax.f32 %v1611, 0.0
      %v1620 = vmax.f32 %v1612, 0.0
      %vm1621 = vcmask 523264
      %1622 = vst.msk [vmem:[#allocation3] sm:$0xff] %vm1621, 0.0
      %vm1623 = vcmask 517120
      %1624 = vst.msk [vmem:[#allocation3 + $0x8] sm:$0x3] %vm1623, 0.0
      %1625 = vst.msk [vmem:[#allocation3 + $0x10] sm:$0xff] %vm1621, 0.0
      %1626 = vst.msk [vmem:[#allocation3 + $0x18] sm:$0x3] %vm1623, 0.0
      %1627 = vst.msk [vmem:[#allocation3 + $0x20] sm:$0xff] %vm1621, 0.0
      %1628 = vst.msk [vmem:[#allocation3 + $0x28] sm:$0x3] %vm1623, 0.0
      %1629 = vst.msk [vmem:[#allocation3 + $0x30] sm:$0xff] %vm1621, 0.0
      %1630 = vst.msk [vmem:[#allocation3 + $0x38] sm:$0x3] %vm1623, 0.0
      %1631 = vst.msk [vmem:[#allocation3 + $0x40] sm:$0xff] %vm1621, 0.0
      %1632 = vst.msk [vmem:[#allocation3 + $0x48] sm:$0x3] %vm1623, 0.0
      %1633 = vst.msk [vmem:[#allocation3 + $0x50] sm:$0xff] %vm1621, 0.0
      %1634 = vst.msk [vmem:[#allocation3 + $0x58] sm:$0x3] %vm1623, 0.0
      %1635 = vst.msk [vmem:[#allocation3 + $0x60] sm:$0xff] %vm1621, 0.0
      %1636 = vst.msk [vmem:[#allocation3 + $0x68] sm:$0x3] %vm1623, 0.0
      %1637 = vst.msk [vmem:[#allocation3 + $0x70] sm:$0xff] %vm1621, 0.0
      %1638 = vst.msk [vmem:[#allocation3 + $0x78] sm:$0x3] %vm1623, 0.0
      %1639 = vst.msk [vmem:[#allocation3 + $0x80] sm:$0xff] %vm1621, 0.0
      %1640 = vst.msk [vmem:[#allocation3 + $0x88] sm:$0x3] %vm1623, 0.0
      %1641 = vst.msk [vmem:[#allocation3 + $0x90] sm:$0xff] %vm1621, 0.0
      %1642 = vst.msk [vmem:[#allocation3 + $0x98] sm:$0x3] %vm1623, 0.0
      %s1643 = scalar_lea.vmem [#allocation3], 16
      %1644 = vst.msk [vmem:[%s1643 + $0x1] sm:$0xff] %vm1621, %v1613
      %1645 = vst.msk [vmem:[%s1643 + $0x11] sm:$0xff] %vm1621, %v1614
      %1646 = vst.msk [vmem:[%s1643 + $0x21] sm:$0xff] %vm1621, %v1615
      %1647 = vst.msk [vmem:[%s1643 + $0x31] sm:$0xff] %vm1621, %v1616
      %1648 = vst.msk [vmem:[%s1643 + $0x41] sm:$0xff] %vm1621, %v1617
      %1649 = vst.msk [vmem:[%s1643 + $0x51] sm:$0xff] %vm1621, %v1618
      %1650 = vst.msk [vmem:[%s1643 + $0x61] sm:$0xff] %vm1621, %v1619
      %1651 = vst.msk [vmem:[%s1643 + $0x71] sm:$0xff] %vm1621, %v1620
      %v1652 = vld [vmem:[%s4] sm:$0x1]
      %v1653 = vld [vmem:[#allocation3] sm:$0xff]
      %v1654 = vld [vmem:[#allocation3 + $0x10] sm:$0xff]
      %v1655 = vld [vmem:[#allocation3 + $0x20] sm:$0xff]
      %v1656 = vld [vmem:[#allocation3 + $0x30] sm:$0xff]
      %v1657 = vld [vmem:[#allocation3 + $0x40] sm:$0xff]
      %v1658 = vld [vmem:[#allocation3 + $0x50] sm:$0xff]
      %v1659 = vld [vmem:[#allocation3 + $0x60] sm:$0xff]
      %v1660 = vld [vmem:[#allocation3 + $0x70] sm:$0xff]
      %v1661 = vld [vmem:[%s3] sm:$0xff]
      %v1662 = vld [vmem:[%s3 + $0x8] sm:$0xff]
      %v1663 = vld [vmem:[%s3 + $0x10] sm:$0xff]
      %v1664 = vld [vmem:[%s3 + $0x18] sm:$0xff]
      %v1665 = vld [vmem:[%s3 + $0x20] sm:$0xff]
      %v1666 = vld [vmem:[%s3 + $0x28] sm:$0xff]
      %v1667 = vld [vmem:[%s3 + $0x30] sm:$0xff]
      %v1668 = vld [vmem:[%s3 + $0x38] sm:$0xff]
      %v1669 = vld [vmem:[#allocation3 + $0x1] sm:$0xff]
      %v1670 = vld [vmem:[#allocation3 + $0x11] sm:$0xff]
      %v1671 = vld [vmem:[#allocation3 + $0x21] sm:$0xff]
      %v1672 = vld [vmem:[#allocation3 + $0x31] sm:$0xff]
      %v1673 = vld [vmem:[#allocation3 + $0x41] sm:$0xff]
      %v1674 = vld [vmem:[#allocation3 + $0x51] sm:$0xff]
      %v1675 = vld [vmem:[#allocation3 + $0x61] sm:$0xff]
      %v1676 = vld [vmem:[#allocation3 + $0x71] sm:$0xff]
      %s1677 = scalar_lea.vmem %s3, 64
      %v1678 = vld [vmem:[%s1677] sm:$0xff]
      %v1679 = vld [vmem:[%s1677 + $0x8] sm:$0xff]
      %v1680 = vld [vmem:[%s1677 + $0x10] sm:$0xff]
      %v1681 = vld [vmem:[%s1677 + $0x18] sm:$0xff]
      %v1682 = vld [vmem:[%s1677 + $0x20] sm:$0xff]
      %v1683 = vld [vmem:[%s1677 + $0x28] sm:$0xff]
      %v1684 = vld [vmem:[%s1677 + $0x30] sm:$0xff]
      %v1685 = vld [vmem:[%s1677 + $0x38] sm:$0xff]
      %v1687 = vsel %vm1621, %v1669, 0
      %v1690 = vsel %vm1621, %v1670, 0
      %v1693 = vsel %vm1621, %v1671, 0
      %v1696 = vsel %vm1621, %v1672, 0
      %v1699 = vsel %vm1621, %v1673, 0
      %v1702 = vsel %vm1621, %v1674, 0
      %v1705 = vsel %vm1621, %v1675, 0
      %v1708 = vsel %vm1621, %v1676, 0
      %1710 = vmatprep.subr.mxu0 0.0
      %1711 = vmatpush1.msra.mxu0 %v1678
      %1712 = vmatprep.subr.mxu0 0.0
      %1713 = vmatpush1.msra.mxu0 %v1679
      %1714 = vmatprep.subr.mxu0 0.0
      %1715 = vmatpush1.msra.mxu0 %v1680
      %1716 = vmatprep.subr.mxu0 0.0
      %1717 = vmatpush1.msra.mxu0 %v1681
      %1718 = vmatprep.subr.mxu0 0.0
      %1719 = vmatpush1.msra.mxu0 %v1682
      %1720 = vmatprep.subr.mxu0 0.0
      %1721 = vmatpush1.msra.mxu0 %v1683
      %1722 = vmatprep.subr.mxu0 0.0
      %1723 = vmatpush1.msra.mxu0 %v1684
      %1724 = vmatprep.subr.mxu0 0.0
      %1725 = vmatpush1.msra.mxu0 %v1685
      %1726 = vmatprep.subr.mxu0 0.0
      %1727 = vmatpush1.msra.mxu0 0.0
      %1728 = vmatprep.subr.mxu0 0.0
      %1729 = vmatpush1.msra.mxu0 0.0
      %1730 = vmatprep.subr.mxu0 0.0
      %1731 = vmatpush1.msra.mxu0 0.0
      %1732 = vmatprep.subr.mxu0 0.0
      %1733 = vmatpush1.msra.mxu0 0.0
      %1734 = vmatprep.subr.mxu0 0.0
      %1735 = vmatpush1.msra.mxu0 0.0
      %1736 = vmatprep.subr.mxu0 0.0
      %1737 = vmatpush1.msra.mxu0 0.0
      %1738 = vmatprep.subr.mxu0 0.0
      %1739 = vmatpush1.msra.mxu0 0.0
      %1740 = vmatprep.subr.mxu0 0.0
      %1741 = vmatpush1.msra.mxu0 0.0
      %1742 = vmatprep.subr.mxu0 0.0
      %1743 = vmatpush1.msra.mxu0 0.0
      %1744 = vmatprep.subr.mxu0 0.0
      %1745 = vmatpush1.msra.mxu0 0.0
      %1746 = vmatprep.subr.mxu0 0.0
      %1747 = vmatpush1.msra.mxu0 0.0
      %1748 = vmatprep.subr.mxu0 0.0
      %1749 = vmatpush1.msra.mxu0 0.0
      %1750 = vmatprep.subr.mxu0 0.0
      %1751 = vmatpush1.msra.mxu0 0.0
      %1752 = vmatprep.subr.mxu0 0.0
      %1753 = vmatpush1.msra.mxu0 0.0
      %1754 = vmatprep.subr.mxu0 0.0
      %1755 = vmatpush1.msra.mxu0 0.0
      %1756 = vmatprep.subr.mxu0 0.0
      %1757 = vmatpush1.msra.mxu0 0.0
      %1758 = vmatprep.subr.mxu0 0.0
      %1759 = vmatpush1.msra.mxu0 0.0
      %1760 = vmatprep.subr.mxu0 0.0
      %1761 = vmatpush1.msra.mxu0 0.0
      %1762 = vmatprep.subr.mxu0 0.0
      %1763 = vmatpush1.msra.mxu0 0.0
      %1764 = vmatprep.subr.mxu0 0.0
      %1765 = vmatpush1.msra.mxu0 0.0
      %1766 = vmatprep.subr.mxu0 0.0
      %1767 = vmatpush1.msra.mxu0 0.0
      %1768 = vmatprep.subr.mxu0 0.0
      %1769 = vmatpush1.msra.mxu0 0.0
      %1770 = vmatprep.subr.mxu0 0.0
      %1771 = vmatpush1.msra.mxu0 0.0
      %1772 = vmatprep.subr.mxu0 0.0
      %1773 = vmatpush1.msra.mxu0 0.0
      %1774 = vmatprep.mubr.f32.mxu0 0.0
      %1775 = vmatmul.mubr.f32.gmra.mrb[0].mxu0 %v1687
      %v1776 = vpop.f32.mrb[0].mxu0
      %v1777 = vadd.f32 0.0, %v1776
      %v1778 = vpop.f32.mrb[0].mxu0
      %1779 = vmatprep.mubr.f32.mxu0 0.0
      %1780 = vmatmul.mubr.f32.gmra.mrb[0].mxu0 %v1690
      %v1781 = vpop.f32.mrb[0].mxu0
      %v1782 = vadd.f32 0.0, %v1781
      %v1783 = vpop.f32.mrb[0].mxu0
      %1784 = vmatprep.mubr.f32.mxu0 0.0
      %1785 = vmatmul.mubr.f32.gmra.mrb[0].mxu0 %v1693
      %v1786 = vpop.f32.mrb[0].mxu0
      %v1787 = vadd.f32 0.0, %v1786
      %v1788 = vpop.f32.mrb[0].mxu0
      %1789 = vmatprep.mubr.f32.mxu0 0.0
      %1790 = vmatmul.mubr.f32.gmra.mrb[0].mxu0 %v1696
      %v1791 = vpop.f32.mrb[0].mxu0
      %v1792 = vadd.f32 0.0, %v1791
      %v1793 = vpop.f32.mrb[0].mxu0
      %1794 = vmatprep.mubr.f32.mxu0 0.0
      %1795 = vmatmul.mubr.f32.gmra.mrb[0].mxu0 %v1699
      %v1796 = vpop.f32.mrb[0].mxu0
      %v1797 = vadd.f32 0.0, %v1796
      %v1798 = vpop.f32.mrb[0].mxu0
      %1799 = vmatprep.mubr.f32.mxu0 0.0
      %1800 = vmatmul.mubr.f32.gmra.mrb[0].mxu0 %v1702
      %v1801 = vpop.f32.mrb[0].mxu0
      %v1802 = vadd.f32 0.0, %v1801
      %v1803 = vpop.f32.mrb[0].mxu0
      %1804 = vmatprep.mubr.f32.mxu0 0.0
      %1805 = vmatmul.mubr.f32.gmra.mrb[0].mxu0 %v1705
      %v1806 = vpop.f32.mrb[0].mxu0
      %v1807 = vadd.f32 0.0, %v1806
      %v1808 = vpop.f32.mrb[0].mxu0
      %1809 = vmatprep.mubr.f32.mxu0 0.0
      %1810 = vmatmul.mubr.f32.gmra.mrb[0].mxu0 %v1708
      %v1811 = vpop.f32.mrb[0].mxu0
      %v1812 = vadd.f32 0.0, %v1811
      %v1813 = vpop.f32.mrb[0].mxu0
      %1814 = vdwg.mxu0
      %v1816 = vsel %vm1621, %v1653, 0
      %v1819 = vsel %vm1621, %v1654, 0
      %v1822 = vsel %vm1621, %v1655, 0
      %v1825 = vsel %vm1621, %v1656, 0
      %v1828 = vsel %vm1621, %v1657, 0
      %v1831 = vsel %vm1621, %v1658, 0
      %v1834 = vsel %vm1621, %v1659, 0
      %v1837 = vsel %vm1621, %v1660, 0
      %1839 = vmatprep.subr.mxu0 0.0
      %1840 = vmatpush1.msra.mxu0 %v1661
      %1841 = vmatprep.subr.mxu0 0.0
      %1842 = vmatpush1.msra.mxu0 %v1662
      %1843 = vmatprep.subr.mxu0 0.0
      %1844 = vmatpush1.msra.mxu0 %v1663
      %1845 = vmatprep.subr.mxu0 0.0
      %1846 = vmatpush1.msra.mxu0 %v1664
      %1847 = vmatprep.subr.mxu0 0.0
      %1848 = vmatpush1.msra.mxu0 %v1665
      %1849 = vmatprep.subr.mxu0 0.0
      %1850 = vmatpush1.msra.mxu0 %v1666
      %1851 = vmatprep.subr.mxu0 0.0
      %1852 = vmatpush1.msra.mxu0 %v1667
      %1853 = vmatprep.subr.mxu0 0.0
      %1854 = vmatpush1.msra.mxu0 %v1668
      %1855 = vmatprep.subr.mxu0 0.0
      %1856 = vmatpush1.msra.mxu0 0.0
      %1857 = vmatprep.subr.mxu0 0.0
      %1858 = vmatpush1.msra.mxu0 0.0
      %1859 = vmatprep.subr.mxu0 0.0
      %1860 = vmatpush1.msra.mxu0 0.0
      %1861 = vmatprep.subr.mxu0 0.0
      %1862 = vmatpush1.msra.mxu0 0.0
      %1863 = vmatprep.subr.mxu0 0.0
      %1864 = vmatpush1.msra.mxu0 0.0
      %1865 = vmatprep.subr.mxu0 0.0
      %1866 = vmatpush1.msra.mxu0 0.0
      %1867 = vmatprep.subr.mxu0 0.0
      %1868 = vmatpush1.msra.mxu0 0.0
      %1869 = vmatprep.subr.mxu0 0.0
      %1870 = vmatpush1.msra.mxu0 0.0
      %1871 = vmatprep.subr.mxu0 0.0
      %1872 = vmatpush1.msra.mxu0 0.0
      %1873 = vmatprep.subr.mxu0 0.0
      %1874 = vmatpush1.msra.mxu0 0.0
      %1875 = vmatprep.subr.mxu0 0.0
      %1876 = vmatpush1.msra.mxu0 0.0
      %1877 = vmatprep.subr.mxu0 0.0
      %1878 = vmatpush1.msra.mxu0 0.0
      %1879 = vmatprep.subr.mxu0 0.0
      %1880 = vmatpush1.msra.mxu0 0.0
      %1881 = vmatprep.subr.mxu0 0.0
      %1882 = vmatpush1.msra.mxu0 0.0
      %1883 = vmatprep.subr.mxu0 0.0
      %1884 = vmatpush1.msra.mxu0 0.0
      %1885 = vmatprep.subr.mxu0 0.0
      %1886 = vmatpush1.msra.mxu0 0.0
      %1887 = vmatprep.subr.mxu0 0.0
      %1888 = vmatpush1.msra.mxu0 0.0
      %1889 = vmatprep.subr.mxu0 0.0
      %1890 = vmatpush1.msra.mxu0 0.0
      %1891 = vmatprep.subr.mxu0 0.0
      %1892 = vmatpush1.msra.mxu0 0.0
      %1893 = vmatprep.subr.mxu0 0.0
      %1894 = vmatpush1.msra.mxu0 0.0
      %1895 = vmatprep.subr.mxu0 0.0
      %1896 = vmatpush1.msra.mxu0 0.0
      %1897 = vmatprep.subr.mxu0 0.0
      %1898 = vmatpush1.msra.mxu0 0.0
      %1899 = vmatprep.subr.mxu0 0.0
      %1900 = vmatpush1.msra.mxu0 0.0
      %1901 = vmatprep.subr.mxu0 0.0
      %1902 = vmatpush1.msra.mxu0 0.0
      %1903 = vmatprep.mubr.f32.mxu0 0.0
      %1904 = vmatmul.mubr.f32.gmra.mrb[0].mxu0 %v1816
      %v1905 = vpop.f32.mrb[0].mxu0
      %v1906 = vadd.f32 %v1777, %v1905
      %v1907 = vpop.f32.mrb[0].mxu0
      %1908 = vmatprep.mubr.f32.mxu0 0.0
      %1909 = vmatmul.mubr.f32.gmra.mrb[0].mxu0 %v1819
      %v1910 = vpop.f32.mrb[0].mxu0
      %v1911 = vadd.f32 %v1782, %v1910
      %v1912 = vpop.f32.mrb[0].mxu0
      %1913 = vmatprep.mubr.f32.mxu0 0.0
      %1914 = vmatmul.mubr.f32.gmra.mrb[0].mxu0 %v1822
      %v1915 = vpop.f32.mrb[0].mxu0
      %v1916 = vadd.f32 %v1787, %v1915
      %v1917 = vpop.f32.mrb[0].mxu0
      %1918 = vmatprep.mubr.f32.mxu0 0.0
      %1919 = vmatmul.mubr.f32.gmra.mrb[0].mxu0 %v1825
      %v1920 = vpop.f32.mrb[0].mxu0
      %v1921 = vadd.f32 %v1792, %v1920
      %v1922 = vpop.f32.mrb[0].mxu0
      %1923 = vmatprep.mubr.f32.mxu0 0.0
      %1924 = vmatmul.mubr.f32.gmra.mrb[0].mxu0 %v1828
      %v1925 = vpop.f32.mrb[0].mxu0
      %v1926 = vadd.f32 %v1797, %v1925
      %v1927 = vpop.f32.mrb[0].mxu0
      %1928 = vmatprep.mubr.f32.mxu0 0.0
      %1929 = vmatmul.mubr.f32.gmra.mrb[0].mxu0 %v1831
      %v1930 = vpop.f32.mrb[0].mxu0
      %v1931 = vadd.f32 %v1802, %v1930
      %v1932 = vpop.f32.mrb[0].mxu0
      %1933 = vmatprep.mubr.f32.mxu0 0.0
      %1934 = vmatmul.mubr.f32.gmra.mrb[0].mxu0 %v1834
      %v1935 = vpop.f32.mrb[0].mxu0
      %v1936 = vadd.f32 %v1807, %v1935
      %v1937 = vpop.f32.mrb[0].mxu0
      %1938 = vmatprep.mubr.f32.mxu0 0.0
      %1939 = vmatmul.mubr.f32.gmra.mrb[0].mxu0 %v1837
      %v1940 = vpop.f32.mrb[0].mxu0
      %v1941 = vadd.f32 %v1812, %v1940
      %v1942 = vpop.f32.mrb[0].mxu0
      %1943 = vdwg.mxu0
      %v1944 = vld [vmem:[#allocation3 + $0x2] sm:$0xff]
      %v1945 = vld [vmem:[#allocation3 + $0x12] sm:$0xff]
      %v1946 = vld [vmem:[#allocation3 + $0x22] sm:$0xff]
      %v1947 = vld [vmem:[#allocation3 + $0x32] sm:$0xff]
      %v1948 = vld [vmem:[#allocation3 + $0x42] sm:$0xff]
      %v1949 = vld [vmem:[#allocation3 + $0x52] sm:$0xff]
      %v1950 = vld [vmem:[#allocation3 + $0x62] sm:$0xff]
      %v1951 = vld [vmem:[#allocation3 + $0x72] sm:$0xff]
      %s1952 = scalar_lea.vmem %s3, 128
      %v1953 = vld [vmem:[%s1952] sm:$0xff]
      %v1954 = vld [vmem:[%s1952 + $0x8] sm:$0xff]
      %v1955 = vld [vmem:[%s1952 + $0x10] sm:$0xff]
      %v1956 = vld [vmem:[%s1952 + $0x18] sm:$0xff]
      %v1957 = vld [vmem:[%s1952 + $0x20] sm:$0xff]
      %v1958 = vld [vmem:[%s1952 + $0x28] sm:$0xff]
      %v1959 = vld [vmem:[%s1952 + $0x30] sm:$0xff]
      %v1960 = vld [vmem:[%s1952 + $0x38] sm:$0xff]
      %v1962 = vsel %vm1621, %v1944, 0
      %v1965 = vsel %vm1621, %v1945, 0
      %v1968 = vsel %vm1621, %v1946, 0
      %v1971 = vsel %vm1621, %v1947, 0
      %v1974 = vsel %vm1621, %v1948, 0
      %v1977 = vsel %vm1621, %v1949, 0
      %v1980 = vsel %vm1621, %v1950, 0
      %v1983 = vsel %vm1621, %v1951, 0
      %1985 = vmatprep.subr.mxu0 0.0
      %1986 = vmatpush1.msra.mxu0 %v1953
      %1987 = vmatprep.subr.mxu0 0.0
      %1988 = vmatpush1.msra.mxu0 %v1954
      %1989 = vmatprep.subr.mxu0 0.0
      %1990 = vmatpush1.msra.mxu0 %v1955
      %1991 = vmatprep.subr.mxu0 0.0
      %1992 = vmatpush1.msra.mxu0 %v1956
      %1993 = vmatprep.subr.mxu0 0.0
      %1994 = vmatpush1.msra.mxu0 %v1957
      %1995 = vmatprep.subr.mxu0 0.0
      %1996 = vmatpush1.msra.mxu0 %v1958
      %1997 = vmatprep.subr.mxu0 0.0
      %1998 = vmatpush1.msra.mxu0 %v1959
      %1999 = vmatprep.subr.mxu0 0.0
      %2000 = vmatpush1.msra.mxu0 %v1960
      %2001 = vmatprep.subr.mxu0 0.0
      %2002 = vmatpush1.msra.mxu0 0.0
      %2003 = vmatprep.subr.mxu0 0.0
      %2004 = vmatpush1.msra.mxu0 0.0
      %2005 = vmatprep.subr.mxu0 0.0
      %2006 = vmatpush1.msra.mxu0 0.0
      %2007 = vmatprep.subr.mxu0 0.0
      %2008 = vmatpush1.msra.mxu0 0.0
      %2009 = vmatprep.subr.mxu0 0.0
      %2010 = vmatpush1.msra.mxu0 0.0
      %2011 = vmatprep.subr.mxu0 0.0
      %2012 = vmatpush1.msra.mxu0 0.0
      %2013 = vmatprep.subr.mxu0 0.0
      %2014 = vmatpush1.msra.mxu0 0.0
      %2015 = vmatprep.subr.mxu0 0.0
      %2016 = vmatpush1.msra.mxu0 0.0
      %2017 = vmatprep.subr.mxu0 0.0
      %2018 = vmatpush1.msra.mxu0 0.0
      %2019 = vmatprep.subr.mxu0 0.0
      %2020 = vmatpush1.msra.mxu0 0.0
      %2021 = vmatprep.subr.mxu0 0.0
      %2022 = vmatpush1.msra.mxu0 0.0
      %2023 = vmatprep.subr.mxu0 0.0
      %2024 = vmatpush1.msra.mxu0 0.0
      %2025 = vmatprep.subr.mxu0 0.0
      %2026 = vmatpush1.msra.mxu0 0.0
      %2027 = vmatprep.subr.mxu0 0.0
      %2028 = vmatpush1.msra.mxu0 0.0
      %2029 = vmatprep.subr.mxu0 0.0
      %2030 = vmatpush1.msra.mxu0 0.0
      %2031 = vmatprep.subr.mxu0 0.0
      %2032 = vmatpush1.msra.mxu0 0.0
      %2033 = vmatprep.subr.mxu0 0.0
      %2034 = vmatpush1.msra.mxu0 0.0
      %2035 = vmatprep.subr.mxu0 0.0
      %2036 = vmatpush1.msra.mxu0 0.0
      %2037 = vmatprep.subr.mxu0 0.0
      %2038 = vmatpush1.msra.mxu0 0.0
      %2039 = vmatprep.subr.mxu0 0.0
      %2040 = vmatpush1.msra.mxu0 0.0
      %2041 = vmatprep.subr.mxu0 0.0
      %2042 = vmatpush1.msra.mxu0 0.0
      %2043 = vmatprep.subr.mxu0 0.0
      %2044 = vmatpush1.msra.mxu0 0.0
      %2045 = vmatprep.subr.mxu0 0.0
      %2046 = vmatpush1.msra.mxu0 0.0
      %2047 = vmatprep.subr.mxu0 0.0
      %2048 = vmatpush1.msra.mxu0 0.0
      %2049 = vmatprep.mubr.f32.mxu0 0.0
      %2050 = vmatmul.mubr.f32.gmra.mrb[0].mxu0 %v1962
      %v2051 = vpop.f32.mrb[0].mxu0
      %v2052 = vadd.f32 0.0, %v2051
      %v2053 = vpop.f32.mrb[0].mxu0
      %2054 = vmatprep.mubr.f32.mxu0 0.0
      %2055 = vmatmul.mubr.f32.gmra.mrb[0].mxu0 %v1965
      %v2056 = vpop.f32.mrb[0].mxu0
      %v2057 = vadd.f32 0.0, %v2056
      %v2058 = vpop.f32.mrb[0].mxu0
      %2059 = vmatprep.mubr.f32.mxu0 0.0
      %2060 = vmatmul.mubr.f32.gmra.mrb[0].mxu0 %v1968
      %v2061 = vpop.f32.mrb[0].mxu0
      %v2062 = vadd.f32 0.0, %v2061
      %v2063 = vpop.f32.mrb[0].mxu0
      %2064 = vmatprep.mubr.f32.mxu0 0.0
      %2065 = vmatmul.mubr.f32.gmra.mrb[0].mxu0 %v1971
      %v2066 = vpop.f32.mrb[0].mxu0
      %v2067 = vadd.f32 0.0, %v2066
      %v2068 = vpop.f32.mrb[0].mxu0
      %2069 = vmatprep.mubr.f32.mxu0 0.0
      %2070 = vmatmul.mubr.f32.gmra.mrb[0].mxu0 %v1974
      %v2071 = vpop.f32.mrb[0].mxu0
      %v2072 = vadd.f32 0.0, %v2071
      %v2073 = vpop.f32.mrb[0].mxu0
      %2074 = vmatprep.mubr.f32.mxu0 0.0
      %2075 = vmatmul.mubr.f32.gmra.mrb[0].mxu0 %v1977
      %v2076 = vpop.f32.mrb[0].mxu0
      %v2077 = vadd.f32 0.0, %v2076
      %v2078 = vpop.f32.mrb[0].mxu0
      %2079 = vmatprep.mubr.f32.mxu0 0.0
      %2080 = vmatmul.mubr.f32.gmra.mrb[0].mxu0 %v1980
      %v2081 = vpop.f32.mrb[0].mxu0
      %v2082 = vadd.f32 0.0, %v2081
      %v2083 = vpop.f32.mrb[0].mxu0
      %2084 = vmatprep.mubr.f32.mxu0 0.0
      %2085 = vmatmul.mubr.f32.gmra.mrb[0].mxu0 %v1983
      %v2086 = vpop.f32.mrb[0].mxu0
      %v2087 = vadd.f32 0.0, %v2086
      %v2088 = vpop.f32.mrb[0].mxu0
      %2089 = vdwg.mxu0
      %v2090 = vadd.f32 %v1906, %v2052
      %v2091 = vadd.f32 %v1911, %v2057
      %v2092 = vadd.f32 %v1916, %v2062
      %v2093 = vadd.f32 %v1921, %v2067
      %v2094 = vadd.f32 %v1926, %v2072
      %v2095 = vadd.f32 %v1931, %v2077
      %v2096 = vadd.f32 %v1936, %v2082
      %v2097 = vadd.f32 %v1941, %v2087
      %v2098 = vld [vmem:[%s1643] sm:$0xff]
      %v2099 = vld [vmem:[%s1643 + $0x10] sm:$0xff]
      %v2100 = vld [vmem:[%s1643 + $0x20] sm:$0xff]
      %v2101 = vld [vmem:[%s1643 + $0x30] sm:$0xff]
      %v2102 = vld [vmem:[%s1643 + $0x40] sm:$0xff]
      %v2103 = vld [vmem:[%s1643 + $0x50] sm:$0xff]
      %v2104 = vld [vmem:[%s1643 + $0x60] sm:$0xff]
      %v2105 = vld [vmem:[%s1643 + $0x70] sm:$0xff]
      %s2106 = scalar_lea.vmem %s3, 192
      %v2107 = vld [vmem:[%s2106] sm:$0xff]
      %v2108 = vld [vmem:[%s2106 + $0x8] sm:$0xff]
      %v2109 = vld [vmem:[%s2106 + $0x10] sm:$0xff]
      %v2110 = vld [vmem:[%s2106 + $0x18] sm:$0xff]
      %v2111 = vld [vmem:[%s2106 + $0x20] sm:$0xff]
      %v2112 = vld [vmem:[%s2106 + $0x28] sm:$0xff]
      %v2113 = vld [vmem:[%s2106 + $0x30] sm:$0xff]
      %v2114 = vld [vmem:[%s2106 + $0x38] sm:$0xff]
      %v2116 = vsel %vm1621, %v2098, 0
      %v2119 = vsel %vm1621, %v2099, 0
      %v2122 = vsel %vm1621, %v2100, 0
      %v2125 = vsel %vm1621, %v2101, 0
      %v2128 = vsel %vm1621, %v2102, 0
      %v2131 = vsel %vm1621, %v2103, 0
      %v2134 = vsel %vm1621, %v2104, 0
      %v2137 = vsel %vm1621, %v2105, 0
      %2139 = vmatprep.subr.mxu0 0.0
      %2140 = vmatpush1.msra.mxu0 %v2107
      %2141 = vmatprep.subr.mxu0 0.0
      %2142 = vmatpush1.msra.mxu0 %v2108
      %2143 = vmatprep.subr.mxu0 0.0
      %2144 = vmatpush1.msra.mxu0 %v2109
      %2145 = vmatprep.subr.mxu0 0.0
      %2146 = vmatpush1.msra.mxu0 %v2110
      %2147 = vmatprep.subr.mxu0 0.0
      %2148 = vmatpush1.msra.mxu0 %v2111
      %2149 = vmatprep.subr.mxu0 0.0
      %2150 = vmatpush1.msra.mxu0 %v2112
      %2151 = vmatprep.subr.mxu0 0.0
      %2152 = vmatpush1.msra.mxu0 %v2113
      %2153 = vmatprep.subr.mxu0 0.0
      %2154 = vmatpush1.msra.mxu0 %v2114
      %2155 = vmatprep.subr.mxu0 0.0
      %2156 = vmatpush1.msra.mxu0 0.0
      %2157 = vmatprep.subr.mxu0 0.0
      %2158 = vmatpush1.msra.mxu0 0.0
      %2159 = vmatprep.subr.mxu0 0.0
      %2160 = vmatpush1.msra.mxu0 0.0
      %2161 = vmatprep.subr.mxu0 0.0
      %2162 = vmatpush1.msra.mxu0 0.0
      %2163 = vmatprep.subr.mxu0 0.0
      %2164 = vmatpush1.msra.mxu0 0.0
      %2165 = vmatprep.subr.mxu0 0.0
      %2166 = vmatpush1.msra.mxu0 0.0
      %2167 = vmatprep.subr.mxu0 0.0
      %2168 = vmatpush1.msra.mxu0 0.0
      %2169 = vmatprep.subr.mxu0 0.0
      %2170 = vmatpush1.msra.mxu0 0.0
      %2171 = vmatprep.subr.mxu0 0.0
      %2172 = vmatpush1.msra.mxu0 0.0
      %2173 = vmatprep.subr.mxu0 0.0
      %2174 = vmatpush1.msra.mxu0 0.0
      %2175 = vmatprep.subr.mxu0 0.0
      %2176 = vmatpush1.msra.mxu0 0.0
      %2177 = vmatprep.subr.mxu0 0.0
      %2178 = vmatpush1.msra.mxu0 0.0
      %2179 = vmatprep.subr.mxu0 0.0
      %2180 = vmatpush1.msra.mxu0 0.0
      %2181 = vmatprep.subr.mxu0 0.0
      %2182 = vmatpush1.msra.mxu0 0.0
      %2183 = vmatprep.subr.mxu0 0.0
      %2184 = vmatpush1.msra.mxu0 0.0
      %2185 = vmatprep.subr.mxu0 0.0
      %2186 = vmatpush1.msra.mxu0 0.0
      %2187 = vmatprep.subr.mxu0 0.0
      %2188 = vmatpush1.msra.mxu0 0.0
      %2189 = vmatprep.subr.mxu0 0.0
      %2190 = vmatpush1.msra.mxu0 0.0
      %2191 = vmatprep.subr.mxu0 0.0
      %2192 = vmatpush1.msra.mxu0 0.0
      %2193 = vmatprep.subr.mxu0 0.0
      %2194 = vmatpush1.msra.mxu0 0.0
      %2195 = vmatprep.subr.mxu0 0.0
      %2196 = vmatpush1.msra.mxu0 0.0
      %2197 = vmatprep.subr.mxu0 0.0
      %2198 = vmatpush1.msra.mxu0 0.0
      %2199 = vmatprep.subr.mxu0 0.0
      %2200 = vmatpush1.msra.mxu0 0.0
      %2201 = vmatprep.subr.mxu0 0.0
      %2202 = vmatpush1.msra.mxu0 0.0
      %2203 = vmatprep.mubr.f32.mxu0 0.0
      %2204 = vmatmul.mubr.f32.gmra.mrb[0].mxu0 %v2116
      %v2205 = vpop.f32.mrb[0].mxu0
      %v2206 = vadd.f32 0.0, %v2205
      %v2207 = vpop.f32.mrb[0].mxu0
      %2208 = vmatprep.mubr.f32.mxu0 0.0
      %2209 = vmatmul.mubr.f32.gmra.mrb[0].mxu0 %v2119
      %v2210 = vpop.f32.mrb[0].mxu0
      %v2211 = vadd.f32 0.0, %v2210
      %v2212 = vpop.f32.mrb[0].mxu0
      %2213 = vmatprep.mubr.f32.mxu0 0.0
      %2214 = vmatmul.mubr.f32.gmra.mrb[0].mxu0 %v2122
      %v2215 = vpop.f32.mrb[0].mxu0
      %v2216 = vadd.f32 0.0, %v2215
      %v2217 = vpop.f32.mrb[0].mxu0
      %2218 = vmatprep.mubr.f32.mxu0 0.0
      %2219 = vmatmul.mubr.f32.gmra.mrb[0].mxu0 %v2125
      %v2220 = vpop.f32.mrb[0].mxu0
      %v2221 = vadd.f32 0.0, %v2220
      %v2222 = vpop.f32.mrb[0].mxu0
      %2223 = vmatprep.mubr.f32.mxu0 0.0
      %2224 = vmatmul.mubr.f32.gmra.mrb[0].mxu0 %v2128
      %v2225 = vpop.f32.mrb[0].mxu0
      %v2226 = vadd.f32 0.0, %v2225
      %v2227 = vpop.f32.mrb[0].mxu0
      %2228 = vmatprep.mubr.f32.mxu0 0.0
      %2229 = vmatmul.mubr.f32.gmra.mrb[0].mxu0 %v2131
      %v2230 = vpop.f32.mrb[0].mxu0
      %v2231 = vadd.f32 0.0, %v2230
      %v2232 = vpop.f32.mrb[0].mxu0
      %2233 = vmatprep.mubr.f32.mxu0 0.0
      %2234 = vmatmul.mubr.f32.gmra.mrb[0].mxu0 %v2134
      %v2235 = vpop.f32.mrb[0].mxu0
      %v2236 = vadd.f32 0.0, %v2235
      %v2237 = vpop.f32.mrb[0].mxu0
      %2238 = vmatprep.mubr.f32.mxu0 0.0
      %2239 = vmatmul.mubr.f32.gmra.mrb[0].mxu0 %v2137
      %v2240 = vpop.f32.mrb[0].mxu0
      %v2241 = vadd.f32 0.0, %v2240
      %v2242 = vpop.f32.mrb[0].mxu0
      %2243 = vdwg.mxu0
      %v2244 = vadd.f32 %v2090, %v2206
      %v2245 = vadd.f32 %v2091, %v2211
      %v2246 = vadd.f32 %v2092, %v2216
      %v2247 = vadd.f32 %v2093, %v2221
      %v2248 = vadd.f32 %v2094, %v2226
      %v2249 = vadd.f32 %v2095, %v2231
      %v2250 = vadd.f32 %v2096, %v2236
      %v2251 = vadd.f32 %v2097, %v2241
      %v2252 = vld [vmem:[%s1643 + $0x1] sm:$0xff]
      %v2253 = vld [vmem:[%s1643 + $0x11] sm:$0xff]
      %v2254 = vld [vmem:[%s1643 + $0x21] sm:$0xff]
      %v2255 = vld [vmem:[%s1643 + $0x31] sm:$0xff]
      %v2256 = vld [vmem:[%s1643 + $0x41] sm:$0xff]
      %v2257 = vld [vmem:[%s1643 + $0x51] sm:$0xff]
      %v2258 = vld [vmem:[%s1643 + $0x61] sm:$0xff]
      %v2259 = vld [vmem:[%s1643 + $0x71] sm:$0xff]
      %s2260 = scalar_lea.vmem %s3, 256
      %v2261 = vld [vmem:[%s2260] sm:$0xff]
      %v2262 = vld [vmem:[%s2260 + $0x8] sm:$0xff]
      %v2263 = vld [vmem:[%s2260 + $0x10] sm:$0xff]
      %v2264 = vld [vmem:[%s2260 + $0x18] sm:$0xff]
      %v2265 = vld [vmem:[%s2260 + $0x20] sm:$0xff]
      %v2266 = vld [vmem:[%s2260 + $0x28] sm:$0xff]
      %v2267 = vld [vmem:[%s2260 + $0x30] sm:$0xff]
      %v2268 = vld [vmem:[%s2260 + $0x38] sm:$0xff]
      %v2270 = vsel %vm1621, %v2252, 0
      %v2273 = vsel %vm1621, %v2253, 0
      %v2276 = vsel %vm1621, %v2254, 0
      %v2279 = vsel %vm1621, %v2255, 0
      %v2282 = vsel %vm1621, %v2256, 0
      %v2285 = vsel %vm1621, %v2257, 0
      %v2288 = vsel %vm1621, %v2258, 0
      %v2291 = vsel %vm1621, %v2259, 0
      %2293 = vmatprep.subr.mxu0 0.0
      %2294 = vmatpush1.msra.mxu0 %v2261
      %2295 = vmatprep.subr.mxu0 0.0
      %2296 = vmatpush1.msra.mxu0 %v2262
      %2297 = vmatprep.subr.mxu0 0.0
      %2298 = vmatpush1.msra.mxu0 %v2263
      %2299 = vmatprep.subr.mxu0 0.0
      %2300 = vmatpush1.msra.mxu0 %v2264
      %2301 = vmatprep.subr.mxu0 0.0
      %2302 = vmatpush1.msra.mxu0 %v2265
      %2303 = vmatprep.subr.mxu0 0.0
      %2304 = vmatpush1.msra.mxu0 %v2266
      %2305 = vmatprep.subr.mxu0 0.0
      %2306 = vmatpush1.msra.mxu0 %v2267
      %2307 = vmatprep.subr.mxu0 0.0
      %2308 = vmatpush1.msra.mxu0 %v2268
      %2309 = vmatprep.subr.mxu0 0.0
      %2310 = vmatpush1.msra.mxu0 0.0
      %2311 = vmatprep.subr.mxu0 0.0
      %2312 = vmatpush1.msra.mxu0 0.0
      %2313 = vmatprep.subr.mxu0 0.0
      %2314 = vmatpush1.msra.mxu0 0.0
      %2315 = vmatprep.subr.mxu0 0.0
      %2316 = vmatpush1.msra.mxu0 0.0
      %2317 = vmatprep.subr.mxu0 0.0
      %2318 = vmatpush1.msra.mxu0 0.0
      %2319 = vmatprep.subr.mxu0 0.0
      %2320 = vmatpush1.msra.mxu0 0.0
      %2321 = vmatprep.subr.mxu0 0.0
      %2322 = vmatpush1.msra.mxu0 0.0
      %2323 = vmatprep.subr.mxu0 0.0
      %2324 = vmatpush1.msra.mxu0 0.0
      %2325 = vmatprep.subr.mxu0 0.0
      %2326 = vmatpush1.msra.mxu0 0.0
      %2327 = vmatprep.subr.mxu0 0.0
      %2328 = vmatpush1.msra.mxu0 0.0
      %2329 = vmatprep.subr.mxu0 0.0
      %2330 = vmatpush1.msra.mxu0 0.0
      %2331 = vmatprep.subr.mxu0 0.0
      %2332 = vmatpush1.msra.mxu0 0.0
      %2333 = vmatprep.subr.mxu0 0.0
      %2334 = vmatpush1.msra.mxu0 0.0
      %2335 = vmatprep.subr.mxu0 0.0
      %2336 = vmatpush1.msra.mxu0 0.0
      %2337 = vmatprep.subr.mxu0 0.0
      %2338 = vmatpush1.msra.mxu0 0.0
      %2339 = vmatprep.subr.mxu0 0.0
      %2340 = vmatpush1.msra.mxu0 0.0
      %2341 = vmatprep.subr.mxu0 0.0
      %2342 = vmatpush1.msra.mxu0 0.0
      %2343 = vmatprep.subr.mxu0 0.0
      %2344 = vmatpush1.msra.mxu0 0.0
      %2345 = vmatprep.subr.mxu0 0.0
      %2346 = vmatpush1.msra.mxu0 0.0
      %2347 = vmatprep.subr.mxu0 0.0
      %2348 = vmatpush1.msra.mxu0 0.0
      %2349 = vmatprep.subr.mxu0 0.0
      %2350 = vmatpush1.msra.mxu0 0.0
      %2351 = vmatprep.subr.mxu0 0.0
      %2352 = vmatpush1.msra.mxu0 0.0
      %2353 = vmatprep.subr.mxu0 0.0
      %2354 = vmatpush1.msra.mxu0 0.0
      %2355 = vmatprep.subr.mxu0 0.0
      %2356 = vmatpush1.msra.mxu0 0.0
      %2357 = vmatprep.mubr.f32.mxu0 0.0
      %2358 = vmatmul.mubr.f32.gmra.mrb[0].mxu0 %v2270
      %v2359 = vpop.f32.mrb[0].mxu0
      %v2360 = vadd.f32 0.0, %v2359
      %v2361 = vpop.f32.mrb[0].mxu0
      %2362 = vmatprep.mubr.f32.mxu0 0.0
      %2363 = vmatmul.mubr.f32.gmra.mrb[0].mxu0 %v2273
      %v2364 = vpop.f32.mrb[0].mxu0
      %v2365 = vadd.f32 0.0, %v2364
      %v2366 = vpop.f32.mrb[0].mxu0
      %2367 = vmatprep.mubr.f32.mxu0 0.0
      %2368 = vmatmul.mubr.f32.gmra.mrb[0].mxu0 %v2276
      %v2369 = vpop.f32.mrb[0].mxu0
      %v2370 = vadd.f32 0.0, %v2369
      %v2371 = vpop.f32.mrb[0].mxu0
      %2372 = vmatprep.mubr.f32.mxu0 0.0
      %2373 = vmatmul.mubr.f32.gmra.mrb[0].mxu0 %v2279
      %v2374 = vpop.f32.mrb[0].mxu0
      %v2375 = vadd.f32 0.0, %v2374
      %v2376 = vpop.f32.mrb[0].mxu0
      %2377 = vmatprep.mubr.f32.mxu0 0.0
      %2378 = vmatmul.mubr.f32.gmra.mrb[0].mxu0 %v2282
      %v2379 = vpop.f32.mrb[0].mxu0
      %v2380 = vadd.f32 0.0, %v2379
      %v2381 = vpop.f32.mrb[0].mxu0
      %2382 = vmatprep.mubr.f32.mxu0 0.0
      %2383 = vmatmul.mubr.f32.gmra.mrb[0].mxu0 %v2285
      %v2384 = vpop.f32.mrb[0].mxu0
      %v2385 = vadd.f32 0.0, %v2384
      %v2386 = vpop.f32.mrb[0].mxu0
      %2387 = vmatprep.mubr.f32.mxu0 0.0
      %2388 = vmatmul.mubr.f32.gmra.mrb[0].mxu0 %v2288
      %v2389 = vpop.f32.mrb[0].mxu0
      %v2390 = vadd.f32 0.0, %v2389
      %v2391 = vpop.f32.mrb[0].mxu0
      %2392 = vmatprep.mubr.f32.mxu0 0.0
      %2393 = vmatmul.mubr.f32.gmra.mrb[0].mxu0 %v2291
      %v2394 = vpop.f32.mrb[0].mxu0
      %v2395 = vadd.f32 0.0, %v2394
      %v2396 = vpop.f32.mrb[0].mxu0
      %2397 = vdwg.mxu0
      %v2398 = vadd.f32 %v2244, %v2360
      %v2399 = vadd.f32 %v2245, %v2365
      %v2400 = vadd.f32 %v2246, %v2370
      %v2401 = vadd.f32 %v2247, %v2375
      %v2402 = vadd.f32 %v2248, %v2380
      %v2403 = vadd.f32 %v2249, %v2385
      %v2404 = vadd.f32 %v2250, %v2390
      %v2405 = vadd.f32 %v2251, %v2395
      %v2406 = vld [vmem:[%s1643 + $0x2] sm:$0xff]
      %v2407 = vld [vmem:[%s1643 + $0x12] sm:$0xff]
      %v2408 = vld [vmem:[%s1643 + $0x22] sm:$0xff]
      %v2409 = vld [vmem:[%s1643 + $0x32] sm:$0xff]
      %v2410 = vld [vmem:[%s1643 + $0x42] sm:$0xff]
      %v2411 = vld [vmem:[%s1643 + $0x52] sm:$0xff]
      %v2412 = vld [vmem:[%s1643 + $0x62] sm:$0xff]
      %v2413 = vld [vmem:[%s1643 + $0x72] sm:$0xff]
      %s2414 = scalar_lea.vmem %s3, 320
      %v2415 = vld [vmem:[%s2414] sm:$0xff]
      %v2416 = vld [vmem:[%s2414 + $0x8] sm:$0xff]
      %v2417 = vld [vmem:[%s2414 + $0x10] sm:$0xff]
      %v2418 = vld [vmem:[%s2414 + $0x18] sm:$0xff]
      %v2419 = vld [vmem:[%s2414 + $0x20] sm:$0xff]
      %v2420 = vld [vmem:[%s2414 + $0x28] sm:$0xff]
      %v2421 = vld [vmem:[%s2414 + $0x30] sm:$0xff]
      %v2422 = vld [vmem:[%s2414 + $0x38] sm:$0xff]
      %v2424 = vsel %vm1621, %v2406, 0
      %v2427 = vsel %vm1621, %v2407, 0
      %v2430 = vsel %vm1621, %v2408, 0
      %v2433 = vsel %vm1621, %v2409, 0
      %v2436 = vsel %vm1621, %v2410, 0
      %v2439 = vsel %vm1621, %v2411, 0
      %v2442 = vsel %vm1621, %v2412, 0
      %v2445 = vsel %vm1621, %v2413, 0
      %2447 = vmatprep.subr.mxu0 0.0
      %2448 = vmatpush1.msra.mxu0 %v2415
      %2449 = vmatprep.subr.mxu0 0.0
      %2450 = vmatpush1.msra.mxu0 %v2416
      %2451 = vmatprep.subr.mxu0 0.0
      %2452 = vmatpush1.msra.mxu0 %v2417
      %2453 = vmatprep.subr.mxu0 0.0
      %2454 = vmatpush1.msra.mxu0 %v2418
      %2455 = vmatprep.subr.mxu0 0.0
      %2456 = vmatpush1.msra.mxu0 %v2419
      %2457 = vmatprep.subr.mxu0 0.0
      %2458 = vmatpush1.msra.mxu0 %v2420
      %2459 = vmatprep.subr.mxu0 0.0
      %2460 = vmatpush1.msra.mxu0 %v2421
      %2461 = vmatprep.subr.mxu0 0.0
      %2462 = vmatpush1.msra.mxu0 %v2422
      %2463 = vmatprep.subr.mxu0 0.0
      %2464 = vmatpush1.msra.mxu0 0.0
      %2465 = vmatprep.subr.mxu0 0.0
      %2466 = vmatpush1.msra.mxu0 0.0
      %2467 = vmatprep.subr.mxu0 0.0
      %2468 = vmatpush1.msra.mxu0 0.0
      %2469 = vmatprep.subr.mxu0 0.0
      %2470 = vmatpush1.msra.mxu0 0.0
      %2471 = vmatprep.subr.mxu0 0.0
      %2472 = vmatpush1.msra.mxu0 0.0
      %2473 = vmatprep.subr.mxu0 0.0
      %2474 = vmatpush1.msra.mxu0 0.0
      %2475 = vmatprep.subr.mxu0 0.0
      %2476 = vmatpush1.msra.mxu0 0.0
      %2477 = vmatprep.subr.mxu0 0.0
      %2478 = vmatpush1.msra.mxu0 0.0
      %2479 = vmatprep.subr.mxu0 0.0
      %2480 = vmatpush1.msra.mxu0 0.0
      %2481 = vmatprep.subr.mxu0 0.0
      %2482 = vmatpush1.msra.mxu0 0.0
      %2483 = vmatprep.subr.mxu0 0.0
      %2484 = vmatpush1.msra.mxu0 0.0
      %2485 = vmatprep.subr.mxu0 0.0
      %2486 = vmatpush1.msra.mxu0 0.0
      %2487 = vmatprep.subr.mxu0 0.0
      %2488 = vmatpush1.msra.mxu0 0.0
      %2489 = vmatprep.subr.mxu0 0.0
      %2490 = vmatpush1.msra.mxu0 0.0
      %2491 = vmatprep.subr.mxu0 0.0
      %2492 = vmatpush1.msra.mxu0 0.0
      %2493 = vmatprep.subr.mxu0 0.0
      %2494 = vmatpush1.msra.mxu0 0.0
      %2495 = vmatprep.subr.mxu0 0.0
      %2496 = vmatpush1.msra.mxu0 0.0
      %2497 = vmatprep.subr.mxu0 0.0
      %2498 = vmatpush1.msra.mxu0 0.0
      %2499 = vmatprep.subr.mxu0 0.0
      %2500 = vmatpush1.msra.mxu0 0.0
      %2501 = vmatprep.subr.mxu0 0.0
      %2502 = vmatpush1.msra.mxu0 0.0
      %2503 = vmatprep.subr.mxu0 0.0
      %2504 = vmatpush1.msra.mxu0 0.0
      %2505 = vmatprep.subr.mxu0 0.0
      %2506 = vmatpush1.msra.mxu0 0.0
      %2507 = vmatprep.subr.mxu0 0.0
      %2508 = vmatpush1.msra.mxu0 0.0
      %2509 = vmatprep.subr.mxu0 0.0
      %2510 = vmatpush1.msra.mxu0 0.0
      %2511 = vmatprep.mubr.f32.mxu0 0.0
      %2512 = vmatmul.mubr.f32.gmra.mrb[0].mxu0 %v2424
      %v2513 = vpop.f32.mrb[0].mxu0
      %v2514 = vadd.f32 0.0, %v2513
      %v2515 = vpop.f32.mrb[0].mxu0
      %2516 = vmatprep.mubr.f32.mxu0 0.0
      %2517 = vmatmul.mubr.f32.gmra.mrb[0].mxu0 %v2427
      %v2518 = vpop.f32.mrb[0].mxu0
      %v2519 = vadd.f32 0.0, %v2518
      %v2520 = vpop.f32.mrb[0].mxu0
      %2521 = vmatprep.mubr.f32.mxu0 0.0
      %2522 = vmatmul.mubr.f32.gmra.mrb[0].mxu0 %v2430
      %v2523 = vpop.f32.mrb[0].mxu0
      %v2524 = vadd.f32 0.0, %v2523
      %v2525 = vpop.f32.mrb[0].mxu0
      %2526 = vmatprep.mubr.f32.mxu0 0.0
      %2527 = vmatmul.mubr.f32.gmra.mrb[0].mxu0 %v2433
      %v2528 = vpop.f32.mrb[0].mxu0
      %v2529 = vadd.f32 0.0, %v2528
      %v2530 = vpop.f32.mrb[0].mxu0
      %2531 = vmatprep.mubr.f32.mxu0 0.0
      %2532 = vmatmul.mubr.f32.gmra.mrb[0].mxu0 %v2436
      %v2533 = vpop.f32.mrb[0].mxu0
      %v2534 = vadd.f32 0.0, %v2533
      %v2535 = vpop.f32.mrb[0].mxu0
      %2536 = vmatprep.mubr.f32.mxu0 0.0
      %2537 = vmatmul.mubr.f32.gmra.mrb[0].mxu0 %v2439
      %v2538 = vpop.f32.mrb[0].mxu0
      %v2539 = vadd.f32 0.0, %v2538
      %v2540 = vpop.f32.mrb[0].mxu0
      %2541 = vmatprep.mubr.f32.mxu0 0.0
      %2542 = vmatmul.mubr.f32.gmra.mrb[0].mxu0 %v2442
      %v2543 = vpop.f32.mrb[0].mxu0
      %v2544 = vadd.f32 0.0, %v2543
      %v2545 = vpop.f32.mrb[0].mxu0
      %2546 = vmatprep.mubr.f32.mxu0 0.0
      %2547 = vmatmul.mubr.f32.gmra.mrb[0].mxu0 %v2445
      %v2548 = vpop.f32.mrb[0].mxu0
      %v2549 = vadd.f32 0.0, %v2548
      %v2550 = vpop.f32.mrb[0].mxu0
      %2551 = vdwg.mxu0
      %v2552 = vadd.f32 %v2398, %v2514
      %v2553 = vadd.f32 %v2399, %v2519
      %v2554 = vadd.f32 %v2400, %v2524
      %v2555 = vadd.f32 %v2401, %v2529
      %v2556 = vadd.f32 %v2402, %v2534
      %v2557 = vadd.f32 %v2403, %v2539
      %v2558 = vadd.f32 %v2404, %v2544
      %v2559 = vadd.f32 %v2405, %v2549
      %s2560 = scalar_lea.vmem [#allocation3], 32
      %v2561 = vld [vmem:[%s2560] sm:$0xff]
      %v2562 = vld [vmem:[%s2560 + $0x10] sm:$0xff]
      %v2563 = vld [vmem:[%s2560 + $0x20] sm:$0xff]
      %v2564 = vld [vmem:[%s2560 + $0x30] sm:$0xff]
      %v2565 = vld [vmem:[%s2560 + $0x40] sm:$0xff]
      %v2566 = vld [vmem:[%s2560 + $0x50] sm:$0xff]
      %v2567 = vld [vmem:[%s2560 + $0x60] sm:$0xff]
      %v2568 = vld [vmem:[%s2560 + $0x70] sm:$0xff]
      %s2569 = scalar_lea.vmem %s3, 384
      %v2570 = vld [vmem:[%s2569] sm:$0xff]
      %v2571 = vld [vmem:[%s2569 + $0x8] sm:$0xff]
      %v2572 = vld [vmem:[%s2569 + $0x10] sm:$0xff]
      %v2573 = vld [vmem:[%s2569 + $0x18] sm:$0xff]
      %v2574 = vld [vmem:[%s2569 + $0x20] sm:$0xff]
      %v2575 = vld [vmem:[%s2569 + $0x28] sm:$0xff]
      %v2576 = vld [vmem:[%s2569 + $0x30] sm:$0xff]
      %v2577 = vld [vmem:[%s2569 + $0x38] sm:$0xff]
      %v2579 = vsel %vm1621, %v2561, 0
      %v2582 = vsel %vm1621, %v2562, 0
      %v2585 = vsel %vm1621, %v2563, 0
      %v2588 = vsel %vm1621, %v2564, 0
      %v2591 = vsel %vm1621, %v2565, 0
      %v2594 = vsel %vm1621, %v2566, 0
      %v2597 = vsel %vm1621, %v2567, 0
      %v2600 = vsel %vm1621, %v2568, 0
      %2602 = vmatprep.subr.mxu0 0.0
      %2603 = vmatpush1.msra.mxu0 %v2570
      %2604 = vmatprep.subr.mxu0 0.0
      %2605 = vmatpush1.msra.mxu0 %v2571
      %2606 = vmatprep.subr.mxu0 0.0
      %2607 = vmatpush1.msra.mxu0 %v2572
      %2608 = vmatprep.subr.mxu0 0.0
      %2609 = vmatpush1.msra.mxu0 %v2573
      %2610 = vmatprep.subr.mxu0 0.0
      %2611 = vmatpush1.msra.mxu0 %v2574
      %2612 = vmatprep.subr.mxu0 0.0
      %2613 = vmatpush1.msra.mxu0 %v2575
      %2614 = vmatprep.subr.mxu0 0.0
      %2615 = vmatpush1.msra.mxu0 %v2576
      %2616 = vmatprep.subr.mxu0 0.0
      %2617 = vmatpush1.msra.mxu0 %v2577
      %2618 = vmatprep.subr.mxu0 0.0
      %2619 = vmatpush1.msra.mxu0 0.0
      %2620 = vmatprep.subr.mxu0 0.0
      %2621 = vmatpush1.msra.mxu0 0.0
      %2622 = vmatprep.subr.mxu0 0.0
      %2623 = vmatpush1.msra.mxu0 0.0
      %2624 = vmatprep.subr.mxu0 0.0
      %2625 = vmatpush1.msra.mxu0 0.0
      %2626 = vmatprep.subr.mxu0 0.0
      %2627 = vmatpush1.msra.mxu0 0.0
      %2628 = vmatprep.subr.mxu0 0.0
      %2629 = vmatpush1.msra.mxu0 0.0
      %2630 = vmatprep.subr.mxu0 0.0
      %2631 = vmatpush1.msra.mxu0 0.0
      %2632 = vmatprep.subr.mxu0 0.0
      %2633 = vmatpush1.msra.mxu0 0.0
      %2634 = vmatprep.subr.mxu0 0.0
      %2635 = vmatpush1.msra.mxu0 0.0
      %2636 = vmatprep.subr.mxu0 0.0
      %2637 = vmatpush1.msra.mxu0 0.0
      %2638 = vmatprep.subr.mxu0 0.0
      %2639 = vmatpush1.msra.mxu0 0.0
      %2640 = vmatprep.subr.mxu0 0.0
      %2641 = vmatpush1.msra.mxu0 0.0
      %2642 = vmatprep.subr.mxu0 0.0
      %2643 = vmatpush1.msra.mxu0 0.0
      %2644 = vmatprep.subr.mxu0 0.0
      %2645 = vmatpush1.msra.mxu0 0.0
      %2646 = vmatprep.subr.mxu0 0.0
      %2647 = vmatpush1.msra.mxu0 0.0
      %2648 = vmatprep.subr.mxu0 0.0
      %2649 = vmatpush1.msra.mxu0 0.0
      %2650 = vmatprep.subr.mxu0 0.0
      %2651 = vmatpush1.msra.mxu0 0.0
      %2652 = vmatprep.subr.mxu0 0.0
      %2653 = vmatpush1.msra.mxu0 0.0
      %2654 = vmatprep.subr.mxu0 0.0
      %2655 = vmatpush1.msra.mxu0 0.0
      %2656 = vmatprep.subr.mxu0 0.0
      %2657 = vmatpush1.msra.mxu0 0.0
      %2658 = vmatprep.subr.mxu0 0.0
      %2659 = vmatpush1.msra.mxu0 0.0
      %2660 = vmatprep.subr.mxu0 0.0
      %2661 = vmatpush1.msra.mxu0 0.0
      %2662 = vmatprep.subr.mxu0 0.0
      %2663 = vmatpush1.msra.mxu0 0.0
      %2664 = vmatprep.subr.mxu0 0.0
      %2665 = vmatpush1.msra.mxu0 0.0
      %2666 = vmatprep.mubr.f32.mxu0 0.0
      %2667 = vmatmul.mubr.f32.gmra.mrb[0].mxu0 %v2579
      %v2668 = vpop.f32.mrb[0].mxu0
      %v2669 = vadd.f32 0.0, %v2668
      %v2670 = vpop.f32.mrb[0].mxu0
      %2671 = vmatprep.mubr.f32.mxu0 0.0
      %2672 = vmatmul.mubr.f32.gmra.mrb[0].mxu0 %v2582
      %v2673 = vpop.f32.mrb[0].mxu0
      %v2674 = vadd.f32 0.0, %v2673
      %v2675 = vpop.f32.mrb[0].mxu0
      %2676 = vmatprep.mubr.f32.mxu0 0.0
      %2677 = vmatmul.mubr.f32.gmra.mrb[0].mxu0 %v2585
      %v2678 = vpop.f32.mrb[0].mxu0
      %v2679 = vadd.f32 0.0, %v2678
      %v2680 = vpop.f32.mrb[0].mxu0
      %2681 = vmatprep.mubr.f32.mxu0 0.0
      %2682 = vmatmul.mubr.f32.gmra.mrb[0].mxu0 %v2588
      %v2683 = vpop.f32.mrb[0].mxu0
      %v2684 = vadd.f32 0.0, %v2683
      %v2685 = vpop.f32.mrb[0].mxu0
      %2686 = vmatprep.mubr.f32.mxu0 0.0
      %2687 = vmatmul.mubr.f32.gmra.mrb[0].mxu0 %v2591
      %v2688 = vpop.f32.mrb[0].mxu0
      %v2689 = vadd.f32 0.0, %v2688
      %v2690 = vpop.f32.mrb[0].mxu0
      %2691 = vmatprep.mubr.f32.mxu0 0.0
      %2692 = vmatmul.mubr.f32.gmra.mrb[0].mxu0 %v2594
      %v2693 = vpop.f32.mrb[0].mxu0
      %v2694 = vadd.f32 0.0, %v2693
      %v2695 = vpop.f32.mrb[0].mxu0
      %2696 = vmatprep.mubr.f32.mxu0 0.0
      %2697 = vmatmul.mubr.f32.gmra.mrb[0].mxu0 %v2597
      %v2698 = vpop.f32.mrb[0].mxu0
      %v2699 = vadd.f32 0.0, %v2698
      %v2700 = vpop.f32.mrb[0].mxu0
      %2701 = vmatprep.mubr.f32.mxu0 0.0
      %2702 = vmatmul.mubr.f32.gmra.mrb[0].mxu0 %v2600
      %v2703 = vpop.f32.mrb[0].mxu0
      %v2704 = vadd.f32 0.0, %v2703
      %v2705 = vpop.f32.mrb[0].mxu0
      %2706 = vdwg.mxu0
      %v2707 = vadd.f32 %v2552, %v2669
      %v2708 = vadd.f32 %v2553, %v2674
      %v2709 = vadd.f32 %v2554, %v2679
      %v2710 = vadd.f32 %v2555, %v2684
      %v2711 = vadd.f32 %v2556, %v2689
      %v2712 = vadd.f32 %v2557, %v2694
      %v2713 = vadd.f32 %v2558, %v2699
      %v2714 = vadd.f32 %v2559, %v2704
      %v2715 = vld [vmem:[%s2560 + $0x1] sm:$0xff]
      %v2716 = vld [vmem:[%s2560 + $0x11] sm:$0xff]
      %v2717 = vld [vmem:[%s2560 + $0x21] sm:$0xff]
      %v2718 = vld [vmem:[%s2560 + $0x31] sm:$0xff]
      %v2719 = vld [vmem:[%s2560 + $0x41] sm:$0xff]
      %v2720 = vld [vmem:[%s2560 + $0x51] sm:$0xff]
      %v2721 = vld [vmem:[%s2560 + $0x61] sm:$0xff]
      %v2722 = vld [vmem:[%s2560 + $0x71] sm:$0xff]
      %s2723 = scalar_lea.vmem %s3, 448
      %v2724 = vld [vmem:[%s2723] sm:$0xff]
      %v2725 = vld [vmem:[%s2723 + $0x8] sm:$0xff]
      %v2726 = vld [vmem:[%s2723 + $0x10] sm:$0xff]
      %v2727 = vld [vmem:[%s2723 + $0x18] sm:$0xff]
      %v2728 = vld [vmem:[%s2723 + $0x20] sm:$0xff]
      %v2729 = vld [vmem:[%s2723 + $0x28] sm:$0xff]
      %v2730 = vld [vmem:[%s2723 + $0x30] sm:$0xff]
      %v2731 = vld [vmem:[%s2723 + $0x38] sm:$0xff]
      %v2733 = vsel %vm1621, %v2715, 0
      %v2736 = vsel %vm1621, %v2716, 0
      %v2739 = vsel %vm1621, %v2717, 0
      %v2742 = vsel %vm1621, %v2718, 0
      %v2745 = vsel %vm1621, %v2719, 0
      %v2748 = vsel %vm1621, %v2720, 0
      %v2751 = vsel %vm1621, %v2721, 0
      %v2754 = vsel %vm1621, %v2722, 0
      %2756 = vmatprep.subr.mxu0 0.0
      %2757 = vmatpush1.msra.mxu0 %v2724
      %2758 = vmatprep.subr.mxu0 0.0
      %2759 = vmatpush1.msra.mxu0 %v2725
      %2760 = vmatprep.subr.mxu0 0.0
      %2761 = vmatpush1.msra.mxu0 %v2726
      %2762 = vmatprep.subr.mxu0 0.0
      %2763 = vmatpush1.msra.mxu0 %v2727
      %2764 = vmatprep.subr.mxu0 0.0
      %2765 = vmatpush1.msra.mxu0 %v2728
      %2766 = vmatprep.subr.mxu0 0.0
      %2767 = vmatpush1.msra.mxu0 %v2729
      %2768 = vmatprep.subr.mxu0 0.0
      %2769 = vmatpush1.msra.mxu0 %v2730
      %2770 = vmatprep.subr.mxu0 0.0
      %2771 = vmatpush1.msra.mxu0 %v2731
      %2772 = vmatprep.subr.mxu0 0.0
      %2773 = vmatpush1.msra.mxu0 0.0
      %2774 = vmatprep.subr.mxu0 0.0
      %2775 = vmatpush1.msra.mxu0 0.0
      %2776 = vmatprep.subr.mxu0 0.0
      %2777 = vmatpush1.msra.mxu0 0.0
      %2778 = vmatprep.subr.mxu0 0.0
      %2779 = vmatpush1.msra.mxu0 0.0
      %2780 = vmatprep.subr.mxu0 0.0
      %2781 = vmatpush1.msra.mxu0 0.0
      %2782 = vmatprep.subr.mxu0 0.0
      %2783 = vmatpush1.msra.mxu0 0.0
      %2784 = vmatprep.subr.mxu0 0.0
      %2785 = vmatpush1.msra.mxu0 0.0
      %2786 = vmatprep.subr.mxu0 0.0
      %2787 = vmatpush1.msra.mxu0 0.0
      %2788 = vmatprep.subr.mxu0 0.0
      %2789 = vmatpush1.msra.mxu0 0.0
      %2790 = vmatprep.subr.mxu0 0.0
      %2791 = vmatpush1.msra.mxu0 0.0
      %2792 = vmatprep.subr.mxu0 0.0
      %2793 = vmatpush1.msra.mxu0 0.0
      %2794 = vmatprep.subr.mxu0 0.0
      %2795 = vmatpush1.msra.mxu0 0.0
      %2796 = vmatprep.subr.mxu0 0.0
      %2797 = vmatpush1.msra.mxu0 0.0
      %2798 = vmatprep.subr.mxu0 0.0
      %2799 = vmatpush1.msra.mxu0 0.0
      %2800 = vmatprep.subr.mxu0 0.0
      %2801 = vmatpush1.msra.mxu0 0.0
      %2802 = vmatprep.subr.mxu0 0.0
      %2803 = vmatpush1.msra.mxu0 0.0
      %2804 = vmatprep.subr.mxu0 0.0
      %2805 = vmatpush1.msra.mxu0 0.0
      %2806 = vmatprep.subr.mxu0 0.0
      %2807 = vmatpush1.msra.mxu0 0.0
      %2808 = vmatprep.subr.mxu0 0.0
      %2809 = vmatpush1.msra.mxu0 0.0
      %2810 = vmatprep.subr.mxu0 0.0
      %2811 = vmatpush1.msra.mxu0 0.0
      %2812 = vmatprep.subr.mxu0 0.0
      %2813 = vmatpush1.msra.mxu0 0.0
      %2814 = vmatprep.subr.mxu0 0.0
      %2815 = vmatpush1.msra.mxu0 0.0
      %2816 = vmatprep.subr.mxu0 0.0
      %2817 = vmatpush1.msra.mxu0 0.0
      %2818 = vmatprep.subr.mxu0 0.0
      %2819 = vmatpush1.msra.mxu0 0.0
      %2820 = vmatprep.mubr.f32.mxu0 0.0
      %2821 = vmatmul.mubr.f32.gmra.mrb[0].mxu0 %v2733
      %v2822 = vpop.f32.mrb[0].mxu0
      %v2823 = vadd.f32 0.0, %v2822
      %v2824 = vpop.f32.mrb[0].mxu0
      %2825 = vmatprep.mubr.f32.mxu0 0.0
      %2826 = vmatmul.mubr.f32.gmra.mrb[0].mxu0 %v2736
      %v2827 = vpop.f32.mrb[0].mxu0
      %v2828 = vadd.f32 0.0, %v2827
      %v2829 = vpop.f32.mrb[0].mxu0
      %2830 = vmatprep.mubr.f32.mxu0 0.0
      %2831 = vmatmul.mubr.f32.gmra.mrb[0].mxu0 %v2739
      %v2832 = vpop.f32.mrb[0].mxu0
      %v2833 = vadd.f32 0.0, %v2832
      %v2834 = vpop.f32.mrb[0].mxu0
      %2835 = vmatprep.mubr.f32.mxu0 0.0
      %2836 = vmatmul.mubr.f32.gmra.mrb[0].mxu0 %v2742
      %v2837 = vpop.f32.mrb[0].mxu0
      %v2838 = vadd.f32 0.0, %v2837
      %v2839 = vpop.f32.mrb[0].mxu0
      %2840 = vmatprep.mubr.f32.mxu0 0.0
      %2841 = vmatmul.mubr.f32.gmra.mrb[0].mxu0 %v2745
      %v2842 = vpop.f32.mrb[0].mxu0
      %v2843 = vadd.f32 0.0, %v2842
      %v2844 = vpop.f32.mrb[0].mxu0
      %2845 = vmatprep.mubr.f32.mxu0 0.0
      %2846 = vmatmul.mubr.f32.gmra.mrb[0].mxu0 %v2748
      %v2847 = vpop.f32.mrb[0].mxu0
      %v2848 = vadd.f32 0.0, %v2847
      %v2849 = vpop.f32.mrb[0].mxu0
      %2850 = vmatprep.mubr.f32.mxu0 0.0
      %2851 = vmatmul.mubr.f32.gmra.mrb[0].mxu0 %v2751
      %v2852 = vpop.f32.mrb[0].mxu0
      %v2853 = vadd.f32 0.0, %v2852
      %v2854 = vpop.f32.mrb[0].mxu0
      %2855 = vmatprep.mubr.f32.mxu0 0.0
      %2856 = vmatmul.mubr.f32.gmra.mrb[0].mxu0 %v2754
      %v2857 = vpop.f32.mrb[0].mxu0
      %v2858 = vadd.f32 0.0, %v2857
      %v2859 = vpop.f32.mrb[0].mxu0
      %2860 = vdwg.mxu0
      %v2861 = vadd.f32 %v2707, %v2823
      %v2862 = vadd.f32 %v2708, %v2828
      %v2863 = vadd.f32 %v2709, %v2833
      %v2864 = vadd.f32 %v2710, %v2838
      %v2865 = vadd.f32 %v2711, %v2843
      %v2866 = vadd.f32 %v2712, %v2848
      %v2867 = vadd.f32 %v2713, %v2853
      %v2868 = vadd.f32 %v2714, %v2858
      %v2869 = vld [vmem:[%s2560 + $0x2] sm:$0xff]
      %v2870 = vld [vmem:[%s2560 + $0x12] sm:$0xff]
      %v2871 = vld [vmem:[%s2560 + $0x22] sm:$0xff]
      %v2872 = vld [vmem:[%s2560 + $0x32] sm:$0xff]
      %v2873 = vld [vmem:[%s2560 + $0x42] sm:$0xff]
      %v2874 = vld [vmem:[%s2560 + $0x52] sm:$0xff]
      %v2875 = vld [vmem:[%s2560 + $0x62] sm:$0xff]
      %v2876 = vld [vmem:[%s2560 + $0x72] sm:$0xff]
      %s2877 = scalar_lea.vmem %s3, 512
      %v2878 = vld [vmem:[%s2877] sm:$0xff]
      %v2879 = vld [vmem:[%s2877 + $0x8] sm:$0xff]
      %v2880 = vld [vmem:[%s2877 + $0x10] sm:$0xff]
      %v2881 = vld [vmem:[%s2877 + $0x18] sm:$0xff]
      %v2882 = vld [vmem:[%s2877 + $0x20] sm:$0xff]
      %v2883 = vld [vmem:[%s2877 + $0x28] sm:$0xff]
      %v2884 = vld [vmem:[%s2877 + $0x30] sm:$0xff]
      %v2885 = vld [vmem:[%s2877 + $0x38] sm:$0xff]
      %v2887 = vsel %vm1621, %v2869, 0
      %v2890 = vsel %vm1621, %v2870, 0
      %v2893 = vsel %vm1621, %v2871, 0
      %v2896 = vsel %vm1621, %v2872, 0
      %v2899 = vsel %vm1621, %v2873, 0
      %v2902 = vsel %vm1621, %v2874, 0
      %v2905 = vsel %vm1621, %v2875, 0
      %v2908 = vsel %vm1621, %v2876, 0
      %2910 = vmatprep.subr.mxu0 0.0
      %2911 = vmatpush1.msra.mxu0 %v2878
      %2912 = vmatprep.subr.mxu0 0.0
      %2913 = vmatpush1.msra.mxu0 %v2879
      %2914 = vmatprep.subr.mxu0 0.0
      %2915 = vmatpush1.msra.mxu0 %v2880
      %2916 = vmatprep.subr.mxu0 0.0
      %2917 = vmatpush1.msra.mxu0 %v2881
      %2918 = vmatprep.subr.mxu0 0.0
      %2919 = vmatpush1.msra.mxu0 %v2882
      %2920 = vmatprep.subr.mxu0 0.0
      %2921 = vmatpush1.msra.mxu0 %v2883
      %2922 = vmatprep.subr.mxu0 0.0
      %2923 = vmatpush1.msra.mxu0 %v2884
      %2924 = vmatprep.subr.mxu0 0.0
      %2925 = vmatpush1.msra.mxu0 %v2885
      %2926 = vmatprep.subr.mxu0 0.0
      %2927 = vmatpush1.msra.mxu0 0.0
      %2928 = vmatprep.subr.mxu0 0.0
      %2929 = vmatpush1.msra.mxu0 0.0
      %2930 = vmatprep.subr.mxu0 0.0
      %2931 = vmatpush1.msra.mxu0 0.0
      %2932 = vmatprep.subr.mxu0 0.0
      %2933 = vmatpush1.msra.mxu0 0.0
      %2934 = vmatprep.subr.mxu0 0.0
      %2935 = vmatpush1.msra.mxu0 0.0
      %2936 = vmatprep.subr.mxu0 0.0
      %2937 = vmatpush1.msra.mxu0 0.0
      %2938 = vmatprep.subr.mxu0 0.0
      %2939 = vmatpush1.msra.mxu0 0.0
      %2940 = vmatprep.subr.mxu0 0.0
      %2941 = vmatpush1.msra.mxu0 0.0
      %2942 = vmatprep.subr.mxu0 0.0
      %2943 = vmatpush1.msra.mxu0 0.0
      %2944 = vmatprep.subr.mxu0 0.0
      %2945 = vmatpush1.msra.mxu0 0.0
      %2946 = vmatprep.subr.mxu0 0.0
      %2947 = vmatpush1.msra.mxu0 0.0
      %2948 = vmatprep.subr.mxu0 0.0
      %2949 = vmatpush1.msra.mxu0 0.0
      %2950 = vmatprep.subr.mxu0 0.0
      %2951 = vmatpush1.msra.mxu0 0.0
      %2952 = vmatprep.subr.mxu0 0.0
      %2953 = vmatpush1.msra.mxu0 0.0
      %2954 = vmatprep.subr.mxu0 0.0
      %2955 = vmatpush1.msra.mxu0 0.0
      %2956 = vmatprep.subr.mxu0 0.0
      %2957 = vmatpush1.msra.mxu0 0.0
      %2958 = vmatprep.subr.mxu0 0.0
      %2959 = vmatpush1.msra.mxu0 0.0
      %2960 = vmatprep.subr.mxu0 0.0
      %2961 = vmatpush1.msra.mxu0 0.0
      %2962 = vmatprep.subr.mxu0 0.0
      %2963 = vmatpush1.msra.mxu0 0.0
      %2964 = vmatprep.subr.mxu0 0.0
      %2965 = vmatpush1.msra.mxu0 0.0
      %2966 = vmatprep.subr.mxu0 0.0
      %2967 = vmatpush1.msra.mxu0 0.0
      %2968 = vmatprep.subr.mxu0 0.0
      %2969 = vmatpush1.msra.mxu0 0.0
      %2970 = vmatprep.subr.mxu0 0.0
      %2971 = vmatpush1.msra.mxu0 0.0
      %2972 = vmatprep.subr.mxu0 0.0
      %2973 = vmatpush1.msra.mxu0 0.0
      %2974 = vmatprep.mubr.f32.mxu0 0.0
      %2975 = vmatmul.mubr.f32.gmra.mrb[0].mxu0 %v2887
      %v2976 = vpop.f32.mrb[0].mxu0
      %v2977 = vadd.f32 0.0, %v2976
      %v2978 = vpop.f32.mrb[0].mxu0
      %2979 = vmatprep.mubr.f32.mxu0 0.0
      %2980 = vmatmul.mubr.f32.gmra.mrb[0].mxu0 %v2890
      %v2981 = vpop.f32.mrb[0].mxu0
      %v2982 = vadd.f32 0.0, %v2981
      %v2983 = vpop.f32.mrb[0].mxu0
      %2984 = vmatprep.mubr.f32.mxu0 0.0
      %2985 = vmatmul.mubr.f32.gmra.mrb[0].mxu0 %v2893
      %v2986 = vpop.f32.mrb[0].mxu0
      %v2987 = vadd.f32 0.0, %v2986
      %v2988 = vpop.f32.mrb[0].mxu0
      %2989 = vmatprep.mubr.f32.mxu0 0.0
      %2990 = vmatmul.mubr.f32.gmra.mrb[0].mxu0 %v2896
      %v2991 = vpop.f32.mrb[0].mxu0
      %v2992 = vadd.f32 0.0, %v2991
      %v2993 = vpop.f32.mrb[0].mxu0
      %2994 = vmatprep.mubr.f32.mxu0 0.0
      %2995 = vmatmul.mubr.f32.gmra.mrb[0].mxu0 %v2899
      %v2996 = vpop.f32.mrb[0].mxu0
      %v2997 = vadd.f32 0.0, %v2996
      %v2998 = vpop.f32.mrb[0].mxu0
      %2999 = vmatprep.mubr.f32.mxu0 0.0
      %3000 = vmatmul.mubr.f32.gmra.mrb[0].mxu0 %v2902
      %v3001 = vpop.f32.mrb[0].mxu0
      %v3002 = vadd.f32 0.0, %v3001
      %v3003 = vpop.f32.mrb[0].mxu0
      %3004 = vmatprep.mubr.f32.mxu0 0.0
      %3005 = vmatmul.mubr.f32.gmra.mrb[0].mxu0 %v2905
      %v3006 = vpop.f32.mrb[0].mxu0
      %v3007 = vadd.f32 0.0, %v3006
      %v3008 = vpop.f32.mrb[0].mxu0
      %3009 = vmatprep.mubr.f32.mxu0 0.0
      %3010 = vmatmul.mubr.f32.gmra.mrb[0].mxu0 %v2908
      %v3011 = vpop.f32.mrb[0].mxu0
      %v3012 = vadd.f32 0.0, %v3011
      %v3013 = vpop.f32.mrb[0].mxu0
      %3014 = vdwg.mxu0
      %v3015 = vadd.f32 %v2861, %v2977
      %v3016 = vadd.f32 %v2862, %v2982
      %v3017 = vadd.f32 %v2863, %v2987
      %v3018 = vadd.f32 %v2864, %v2992
      %v3019 = vadd.f32 %v2865, %v2997
      %v3020 = vadd.f32 %v2866, %v3002
      %v3021 = vadd.f32 %v2867, %v3007
      %v3022 = vadd.f32 %v2868, %v3012
      %v3024 = vlaneseq
      %v3025 = vshrl.u32 %v3024, 7
      %v3026 = vsub.s32 0, %v3025
      %v3027 = vrot.slane %v1652, %v3026
      %v3029 = vadd.f32 %v3015, %v3027
      %v3030 = vadd.f32 %v3016, %v3027
      %v3031 = vadd.f32 %v3017, %v3027
      %v3032 = vadd.f32 %v3018, %v3027
      %v3033 = vadd.f32 %v3019, %v3027
      %v3034 = vadd.f32 %v3020, %v3027
      %v3035 = vadd.f32 %v3021, %v3027
      %v3036 = vadd.f32 %v3022, %v3027
      %v3037 = vmax.f32 %v3029, 0.0
      %v3038 = vmax.f32 %v3030, 0.0
      %v3039 = vmax.f32 %v3031, 0.0
      %v3040 = vmax.f32 %v3032, 0.0
      %v3041 = vmax.f32 %v3033, 0.0
      %v3042 = vmax.f32 %v3034, 0.0
      %v3043 = vmax.f32 %v3035, 0.0
      %v3044 = vmax.f32 %v3036, 0.0
      %3045 = vst.msk [vmem:[%s224] sm:$0xff] %vm1621, %v3037
      %3046 = vst.msk [vmem:[%s224 + $0x8] sm:$0xff] %vm1621, %v3038
      %3047 = vst.msk [vmem:[%s224 + $0x10] sm:$0xff] %vm1621, %v3039
      %3048 = vst.msk [vmem:[%s224 + $0x18] sm:$0xff] %vm1621, %v3040
      %3049 = vst.msk [vmem:[%s224 + $0x20] sm:$0xff] %vm1621, %v3041
      %3050 = vst.msk [vmem:[%s224 + $0x28] sm:$0xff] %vm1621, %v3042
      %3051 = vst.msk [vmem:[%s224 + $0x30] sm:$0xff] %vm1621, %v3043
      %3052 = vst.msk [vmem:[%s224 + $0x38] sm:$0xff] %vm1621, %v3044
      %p3053 = scmp.lt.s32.totalorder %s16, 1
      %s3054 = scalar_select %p3053, %s16, 1
      %s3055 = smul.addr %s3054, 8
      %s3056 = smul.addr %s3055, 8
      %s3057 = scalar_lea.vmem %s5, %s3056
      // Predicated region
      $region41: #{block3d_forward.1} parent=39 // pred_check
        %p3058 = pneg %p144
      $region42: #{block3d_forward.1} parent=39 // pred_check_branch
        %3060 = sbr.rel (%p3058) target = $region44
      $region43: #{block3d_forward.1} parent=39 // pred_region
        _
      $region44: #{block3d_forward.1} parent=39 // pred_fallthru
        _
    $region40: #{block3d_forward.1} parent=5 // pred_fallthru
      _
    %p3061 = scmp.le.s32.totalorder 2, %s11
    // Predicated region
    $region45: #{block3d_forward.1} parent=5 // pred_check
      %p3062 = pneg %p3061
    $region46: #{block3d_forward.1} parent=5 // pred_check_branch
      %3064 = sbr.rel (%p3062) target = $region48
    $region47: #{block3d_forward.1} parent=5 // pred_region
      %s3065 = ssub.s32 %s11, 2
      // Predicated region
      $region49: #{block3d_forward.1} parent=47 // pred_check
        %p3066 = pneg %p150
      $region50: #{block3d_forward.1} parent=47 // pred_check_branch
        %3068 = sbr.rel (%p3066) target = $region52
      $region51: #{block3d_forward.1} parent=47 // pred_region
        %p3069 = scmp.lt.s32.totalorder %s17, 1
        %s3070 = scalar_select %p3069, %s17, 1
        %s3071 = smul.addr %s3070, 8
        %s3072 = smul.addr %s3071, 8
        %s3073 = scalar_lea.vmem %s5, %s3072
      $region52: #{block3d_forward.1} parent=47 // pred_fallthru
        _
    $region48: #{block3d_forward.1} parent=5 // pred_fallthru
      _
  $region6: #{block3d_forward.1} parent=0 // loop_footer
    %s15 = sadd.s32 1, %s11
  $region7: #{block3d_forward.1} parent=0 // loop_footer_branch
    %10 = sbr.rel target = $region3
  $region8: #{block3d_forward.1} parent=0 // loop_exit
    _

</llo_original>
